<compile_context>
chip_gen: v6e
topology: v6e:2x2x1
jax: 0.10.0
libtpu: 0.0.40
codegen_flags: <defaults>
</compile_context>

<pallas_src>
from functools import partial

import numpy as np
import jax
import jax.numpy as jnp
from jax import lax
from jax.experimental import pallas as pl
from jax.experimental.pallas import tpu as pltpu

# Small, module-consistent sizes
B = 2        # batch
S = 8        # max source length
E = 16       # embed_size
HE = 32      # enc_hidden_size
D = 16       # dec_hidden_size (LSTM)
A = 32       # attention_size
VOCAB = 32   # vocab_size
T = 5        # decode length (== target length in train mode)
VP = 128     # lane-padded extended-vocab width (>= VOCAB + max_n_oov)
PAD_ID, UNK_ID, SOS_ID, EOS_ID = 0, 1, 2, 3
NEG = -1e9   # finite large-negative sentinel (masked softmax lanes)


def _fast_recip(x):
    """EUP approximate reciprocal + one Newton step.  Safe here because both
    softmax denominators are >= 1 after max-subtraction."""
    y = pl.reciprocal(x, approx=True)
    return y * (2.0 - x * y)


def _pg_decoder_kernel(
    # inputs (whole-array VMEM blocks)
    pre_ref,        # (T, B, 4D+1) [emb @ (W_ih@W_in_e).T | emb @ (wp_x@W_in_e).T]
    enc_ref,        # (B, S, HE)
    encfeat_ref,    # (B, S, A)    W_enc applied to enc (precomputed once)
    src_ref,        # (B, S) int32 source ids (PAD mask built in-kernel)
    srcext_ref,     # (B, S) int32 extended source ids (one-hot built in-kernel)
    s0_ref,         # (B, 2D)      initial LSTM state [h | c]
    w_ctxprev_ref,  # (HE, 4D+1)   ctx_prev -> [lstm gates | p_gen x-term]
    w_hh_ref,       # (D, 4D)      h_prev   -> lstm gates
    w_hnew_ref,     # (D, A+1+D)   h_new    -> [attn feat | p_gen | readout]
    w_cnew_ref,     # (D, A+1)     c_new    -> [attn feat | p_gen]
    w_ctxnew_ref,   # (HE, 1+D)    ctx_new  -> [p_gen | readout]
    w_r2_ref,       # (D, VP)      readout  -> padded-vocab energy
    bias_ref,       # (8, 128)     packed bias / vector slab
    # outputs
    logp_ref,       # (B, T, VP)
    covloss_ref,    # (B, VP)      first T lanes valid
    # scratch (per-step stash for the hoisted epilogue)
    attn_buf,       # (B, T, S)
    ctx_buf,        # (B, T, HE)
    pgp_buf,        # (B, T, 1)    p_gen logit, everything except the ctx term
    rp_buf,         # (B, T, D)    readout pre-activation, h part only
):
    f32 = jnp.float32
    dot = lambda a, b: jnp.dot(a, b, preferred_element_type=f32)
    D4 = 4 * D

    # ---- step-invariant loads / broadcasts ----
    enc = enc_ref[...]
    enc_feat = encfeat_ref[...]
    pad_bool = src_ref[...] == PAD_ID
    w_ctxprev = w_ctxprev_ref[...]
    w_hh = w_hh_ref[...]
    w_hnew = w_hnew_ref[...]
    w_cnew = w_cnew_ref[...]
    bias = bias_ref[...]

    b_gates = bias[0:1, :D4]             # (1, 4D)
    b_attn = bias[1:2, :A][:, None, :]   # (1, 1, A)
    v_attn = bias[2:3, :A][:, None, :]   # (1, 1, A)
    w_cov = bias[3:4, :A][:, None, :]    # (1, 1, A)
    b_r1 = bias[4:5, :D]                 # (1, D)
    b_r2 = bias[5:6, :]                  # (1, VP)  (NEG on padded vocab lanes)
    b_pgen = bias[6:7, 0:1]              # (1, 1)

    covloss_ref[...] = jnp.zeros((B, VP), f32)

    h = s0_ref[:, :D]
    c = s0_ref[:, D:]
    cov = jnp.zeros((B, S), f32)
    ctx = jnp.zeros((B, HE), f32)

    # ---- serial recurrence: only h, c, cov, ctx feed the next step ----
    for t in range(T):
        pre = pre_ref[t]                                        # (B, 4D+1)
        ctx_proj = dot(ctx, w_ctxprev)                          # (B, 4D+1)

        # LSTMCell with input_linear folded in (PyTorch gate order i, f, g, o)
        gates = pre[:, :D4] + ctx_proj[:, :D4] + dot(h, w_hh) + b_gates
        sig = jax.nn.sigmoid(gates)                             # 1 full-width EUP push
        tg = jnp.tanh(gates)                                    # 1 full-width EUP push
        i_g = sig[:, 0 * D:1 * D]
        f_g = sig[:, 1 * D:2 * D]
        g_g = tg[:, 2 * D:3 * D]
        o_g = sig[:, 3 * D:4 * D]
        c = f_g * c + i_g * g_g
        h = o_g * jnp.tanh(c)

        # fused projections of the new state (attn feat | p_gen | readout parts)
        hproj = dot(h, w_hnew)                                  # (B, A+1+D)
        cproj = dot(c, w_cnew)                                  # (B, A+1)

        # Bahdanau attention with coverage; decoder feature from s_cat = [h, c]
        dec_feat = hproj[:, :A] + cproj[:, :A]                  # (B, A)
        e_act = jnp.tanh(enc_feat + dec_feat[:, None, :]
                         + cov[:, :, None] * w_cov + b_attn)    # (B, S, A)
        scores = jnp.sum(e_act * v_attn, axis=-1)               # (B, S)
        scores = jnp.where(pad_bool, NEG, scores)
        m = jnp.max(scores, axis=-1, keepdims=True)
        ex = jnp.exp(scores - m)
        attn = ex * _fast_recip(jnp.sum(ex, axis=-1, keepdims=True))

        # context = bmm(attn, enc_outputs); stays on VPU (serial chain)
        ctx = jnp.sum(attn[:, :, None] * enc, axis=1)           # (B, HE)

        # coverage loss uses coverage BEFORE the update
        step_cl = jnp.sum(jnp.minimum(attn, cov), axis=-1, keepdims=True)  # (B, 1)
        cov = cov + attn

        # stash epilogue inputs (tiny VMEM stores; t is a Python int)
        attn_buf[:, t:t + 1, :] = attn[:, None, :]
        ctx_buf[:, t:t + 1, :] = ctx[:, None, :]
        pgp_buf[:, t:t + 1, :] = (hproj[:, A:A + 1] + cproj[:, A:A + 1]
                                  + pre[:, D4:] + ctx_proj[:, D4:])[:, None, :]
        rp_buf[:, t:t + 1, :] = hproj[:, A + 1:][:, None, :]
        covloss_ref[:, t:t + 1] = step_cl

    # ---- epilogue: batched over all T*B rows, off the serial chain ----
    ATTN = attn_buf[...]                                        # (B, T, S)
    CTX = ctx_buf[...]                                          # (B, T, HE)
    PGP = pgp_buf[...]                                          # (B, T, 1)
    RP = rp_buf[...]                                            # (B, T, D)

    w_ctxnew_b = jnp.broadcast_to(w_ctxnew_ref[...], (B, HE, 1 + D))
    w_r2_b = jnp.broadcast_to(w_r2_ref[...], (B, D, VP))

    # ctx_new -> [p_gen | readout] for all steps at once (MXU)
    ctxproj = jnp.einsum('bth,bhn->btn', CTX, w_ctxnew_b,
                         preferred_element_type=f32)            # (B, T, 1+D)

    # pointer switch: p_gen = sigmoid(w . [ctx_new, h, c, dec_input] + b)
    p_gen = jax.nn.sigmoid(ctxproj[:, :, 0:1] + PGP + b_pgen)   # (B, T, 1)

    # PGReadout: Linear([ctx_new, h_new]) -> Linear(-> padded vocab).
    # Columns >= VOCAB carry bias NEG so softmax over VP equals
    # cat([softmax(energy_vocab), zeros(extension)]).
    r = ctxproj[:, :, 1:] + RP + b_r1                           # (B, T, D)
    energy = jnp.einsum('btd,bdv->btv', r, w_r2_b,
                        preferred_element_type=f32) + b_r2      # (B, T, VP)
    mv = jnp.max(energy, axis=-1, keepdims=True)
    pe = jnp.exp(energy - mv)
    p_vocab = pe * _fast_recip(jnp.sum(pe, axis=-1, keepdims=True))

    # pointer-generator mixture; scatter_add realised as MXU one-hot contraction.
    # One-hot built in-kernel from int32 ids -> nothing large resident in VMEM.
    lane = lax.broadcasted_iota(jnp.int32, (B, S, VP), 2)
    onehot = (srcext_ref[...][:, :, None] == lane).astype(f32)  # (B, S, VP)
    copy_w = (1.0 - p_gen) * ATTN                               # (B, T, S)
    p_copy = jnp.einsum('bts,bsv->btv', copy_w, onehot,
                        preferred_element_type=f32)             # (B, T, VP)

    p_out = p_vocab * p_gen + p_copy + 1e-12
    logp_ref[...] = jnp.log(p_out)                              # one dense store


def make_params(key):
    def nrm(k, shape):
        return 0.1 * jax.random.normal(k, shape, dtype=jnp.float32)
    ks = jax.random.split(key, 18)
    return dict(
        word_embed=nrm(ks[0], (VOCAB, E)),
        W_in=nrm(ks[1], (E, E + HE)), b_in=nrm(ks[2], (E,)),
        W_ih=nrm(ks[3], (4 * D, E)), W_hh=nrm(ks[4], (4 * D, D)),
        b_ih=nrm(ks[5], (4 * D,)), b_hh=nrm(ks[6], (4 * D,)),
        W_enc=nrm(ks[7], (A, HE)), W_dec=nrm(ks[8], (A, 2 * D)),
        w_cov=nrm(ks[9], (A,)), b_attn=nrm(ks[10], (A,)), v_attn=nrm(ks[11], (A,)),
        w_ptr=nrm(ks[12], (1, HE + 2 * D + E)), b_ptr=nrm(ks[13], (1,)),
        W_r1=nrm(ks[14], (D, HE + D)), b_r1=nrm(ks[15], (D,)),
        W_r2=nrm(ks[16], (VOCAB, D)), b_r2=nrm(ks[17], (VOCAB,)),
    )


@partial(jax.jit, static_argnums=(6,))
def pg_decoder_train(params, enc_outputs, s0, src, src_ext, tgt, V):
    """Train-mode forward; returns (log_p [B,T,V], coverage_loss [B,T])."""
    assert V <= VP, "extended vocab must fit the 128-lane padding"
    s0h, s0c = s0

    # ---- embeddings of teacher-forced previous words ----
    prev = jnp.concatenate(
        [jnp.full((B, 1), SOS_ID, jnp.int32), tgt[:, :T - 1]], axis=1)
    prev = jnp.where(prev >= VOCAB, UNK_ID, prev)
    emb_seq = jnp.transpose(params['word_embed'][prev], (1, 0, 2))        # (T, B, E)

    # ---- fold input_linear (W_in, b_in) into its consumers (W_ih, wp_x) ----
    win_e = params['W_in'][:, :E]                 # (E, E)
    win_c = params['W_in'][:, E:]                 # (E, HE)
    b_in = params['b_in']                         # (E,)
    W_ih = params['W_ih']                         # (4D, E)
    wp = params['w_ptr']
    wp_ctx = wp[:, :HE]
    wp_h = wp[:, HE:HE + D]
    wp_c = wp[:, HE + D:HE + 2 * D]
    wp_x = wp[:, HE + 2 * D:]                     # (1, E)

    # embedding-dependent part, hoisted out of the recurrence (one batched matmul)
    W_pre = jnp.concatenate([W_ih @ win_e, wp_x @ win_e], axis=0)         # (4D+1, E)
    pre = jnp.einsum('tbe,ne->tbn', emb_seq, W_pre)                       # (T, B, 4D+1)

    # ---- fused / pre-transposed weight slabs ----
    w_ctxprev = jnp.concatenate([W_ih @ win_c, wp_x @ win_c], axis=0).T   # (HE, 4D+1)
    w_hh = params['W_hh'].T                                               # (D, 4D)
    wdec_h, wdec_c = params['W_dec'][:, :D], params['W_dec'][:, D:]
    wr1_ctx, wr1_h = params['W_r1'][:, :HE], params['W_r1'][:, HE:]
    w_hnew = jnp.concatenate([wdec_h, wp_h, wr1_h], axis=0).T             # (D, A+1+D)
    w_cnew = jnp.concatenate([wdec_c, wp_c], axis=0).T                    # (D, A+1)
    w_ctxnew = jnp.concatenate([wp_ctx, wr1_ctx], axis=0).T               # (HE, 1+D)
    w_r2 = jnp.zeros((VP, D), jnp.float32).at[:VOCAB].set(params['W_r2']).T  # (D, VP)

    # ---- biases packed into one lane-dense (8, 128) slab ----
    b_gates = params['b_ih'] + params['b_hh'] + W_ih @ b_in               # (4D,)
    b_pgen = params['b_ptr'] + wp_x @ b_in                                # (1,)
    b_r2 = jnp.full((VP,), NEG, jnp.float32).at[:VOCAB].set(params['b_r2'])
    bias = jnp.zeros((8, 128), jnp.float32)
    bias = bias.at[0, :4 * D].set(b_gates)
    bias = bias.at[1, :A].set(params['b_attn'])
    bias = bias.at[2, :A].set(params['v_attn'])
    bias = bias.at[3, :A].set(params['w_cov'])
    bias = bias.at[4, :D].set(params['b_r1'])
    bias = bias.at[5, :].set(b_r2)
    bias = bias.at[6, 0].set(b_pgen[0])

    # ---- step-invariant attention precompute ----
    enc_feat = jnp.einsum('bsh,ah->bsa', enc_outputs, params['W_enc'])    # (B, S, A)
    s0cat = jnp.concatenate([s0h, s0c], axis=1)                           # (B, 2D)

    # Advisory cost estimate so XLA overlaps the small precomputes around us.
    flops = int(2 * T * B * (HE * (4 * D + 1) + D * 4 * D + D * (A + 1 + D)
                             + D * (A + 1) + S * A + S * HE)
                + 2 * B * T * (HE * (1 + D) + D * VP + S * VP))
    transc = int(T * B * (9 * D + S * A + S + 1) + B * T * (2 * VP + 1))
    bytes_acc = int(4 * (T * B * (4 * D + 1) + 2 * B * S * HE + B * S * A
                         + 2 * B * S + 2 * B * D + HE * (4 * D + 1) + 4 * D * D
                         + D * (A + 1 + D) + D * (A + 1) + HE * (1 + D)
                         + D * VP + 8 * 128 + B * T * VP + B * VP))

    # Single gridless pallas_call: operands whole-array resident in VMEM,
    # log_p flushed once as a lane-dense (B, T, 128) slab.
    logp_btv, covloss = pl.pallas_call(
        _pg_decoder_kernel,
        out_shape=(jax.ShapeDtypeStruct((B, T, VP), jnp.float32),
                   jax.ShapeDtypeStruct((B, VP), jnp.float32)),
        scratch_shapes=[
            pltpu.VMEM((B, T, S), jnp.float32),    # attn
            pltpu.VMEM((B, T, HE), jnp.float32),   # ctx_new
            pltpu.VMEM((B, T, 1), jnp.float32),    # p_gen partial logit
            pltpu.VMEM((B, T, D), jnp.float32),    # readout partial
        ],
        cost_estimate=pl.CostEstimate(flops=flops, transcendentals=transc,
                                      bytes_accessed=bytes_acc),
    )(pre, enc_outputs, enc_feat, src, src_ext, s0cat,
      w_ctxprev, w_hh, w_hnew, w_cnew, w_ctxnew, w_r2, bias)

    log_p = logp_btv[:, :, :V]                              # (B, T, V)
    coverage_loss = covloss[:, :T]                          # (B, T)
    return log_p, coverage_loss


def pg_decoder_train_ref(params, enc_outputs, s0, src, src_ext, tgt, V):
    """Pure-JAX reference mirroring the PyTorch forward (train path)."""
    h, c = s0
    padmask = (src == PAD_ID)
    onehot = (src_ext[:, :, None] == jnp.arange(V)[None, None, :]).astype(jnp.float32)
    enc_feat = jnp.einsum('bsh,ah->bsa', enc_outputs, params['W_enc'])
    coverage = jnp.zeros((B, S), jnp.float32)
    context = jnp.zeros((B, HE), jnp.float32)
    dec_word = jnp.full((B,), SOS_ID, jnp.int32)
    logps, covlosses = [], []
    for i in range(T):
        emb = params['word_embed'][dec_word]
        dec_input = jnp.concatenate([emb, context], 1) @ params['W_in'].T + params['b_in']
        gates = (dec_input @ params['W_ih'].T + params['b_ih']
                 + h @ params['W_hh'].T + params['b_hh'])
        i_g = jax.nn.sigmoid(gates[:, :D])
        f_g = jax.nn.sigmoid(gates[:, D:2 * D])
        g_g = jnp.tanh(gates[:, 2 * D:3 * D])
        o_g = jax.nn.sigmoid(gates[:, 3 * D:])
        c = f_g * c + i_g * g_g
        h = o_g * jnp.tanh(c)
        s_cat = jnp.concatenate([h, c], 1)
        e_act = jnp.tanh(enc_feat + (s_cat @ params['W_dec'].T)[:, None, :]
                         + coverage[:, :, None] * params['w_cov'][None, None, :]
                         + params['b_attn'][None, None, :])
        scores = jnp.sum(e_act * params['v_attn'][None, None, :], axis=-1)
        scores = jnp.where(padmask, -1e30, scores)
        attn = jax.nn.softmax(scores, axis=-1)
        context = jnp.einsum('bs,bsh->bh', attn, enc_outputs)
        covlosses.append(jnp.sum(jnp.minimum(attn, coverage), axis=1))
        coverage = coverage + attn
        p_gen = jax.nn.sigmoid(
            jnp.concatenate([context, s_cat, dec_input], 1) @ params['w_ptr'].T
            + params['b_ptr'])
        r = jnp.concatenate([context, h], 1) @ params['W_r1'].T + params['b_r1']
        energy = r @ params['W_r2'].T + params['b_r2']
        p_vocab = jax.nn.softmax(energy, axis=-1)
        p_out = jnp.concatenate(
            [p_vocab, jnp.zeros((B, V - VOCAB), jnp.float32)], axis=1) * p_gen
        p_out = p_out + jnp.einsum('bs,bsv->bv', (1.0 - p_gen) * attn, onehot)
        p_out = p_out + 1e-12
        logps.append(jnp.log(p_out))
        nxt = tgt[:, i]
        dec_word = jnp.where(nxt >= VOCAB, UNK_ID, nxt)
    return jnp.stack(logps, axis=1), jnp.stack(covlosses, axis=1)


if __name__ == "__main__":
    key = jax.random.PRNGKey(0)
    kp, k1, k2, k3, k4, k5 = jax.random.split(key, 6)
    params = make_params(kp)

    enc_outputs = jax.random.normal(k1, (B, S, HE), jnp.float32)
    s0h = 0.1 * jax.random.normal(k2, (B, D), jnp.float32)
    s0c = 0.1 * jax.random.normal(k3, (B, D), jnp.float32)

    src = jax.random.randint(k4, (B, S), 4, VOCAB, dtype=jnp.int32)
    src = src.at[0, S - 2:].set(PAD_ID)                  # some padding
    src_ext = src
    src_ext = src_ext.at[0, 1].set(VOCAB + 1)            # source OOVs (extended ids)
    src_ext = src_ext.at[1, 3].set(VOCAB + 3)
    max_n_oov = max(int(src_ext.max()) - VOCAB + 1, 1)
    V = VOCAB + max_n_oov
    tgt = jax.random.randint(k5, (B, T), 4, VOCAB + max_n_oov, dtype=jnp.int32)

    log_p, cov_loss = pg_decoder_train(
        params, enc_outputs, (s0h, s0c), src, src_ext, tgt, V)
    jax.block_until_ready((log_p, cov_loss))

    log_p_ref, cov_loss_ref = pg_decoder_train_ref(
        params, enc_outputs, (s0h, s0c), src, src_ext, tgt, V)

    assert log_p.shape == (B, T, V) and cov_loss.shape == (B, T)
    assert np.allclose(np.asarray(log_p), np.asarray(log_p_ref), rtol=2e-3, atol=2e-3)
    assert np.allclose(np.asarray(cov_loss), np.asarray(cov_loss_ref), rtol=2e-3, atol=2e-3)
    print("KERNEL_OK")
</pallas_src>

<mosaic_0001>
module attributes {stable_mosaic.version = 11 : i64} {
  func.func @_pg_decoder_kernel(%arg0: memref<5x2x65xf32, #tpu.memory_space<vmem>>, %arg1: memref<2x8x32xf32, #tpu.memory_space<vmem>>, %arg2: memref<2x8x32xf32, #tpu.memory_space<vmem>>, %arg3: memref<2x8xi32, #tpu.memory_space<vmem>>, %arg4: memref<2x8xi32, #tpu.memory_space<vmem>>, %arg5: memref<2x32xf32, #tpu.memory_space<vmem>>, %arg6: memref<32x65xf32, #tpu.memory_space<vmem>>, %arg7: memref<16x64xf32, #tpu.memory_space<vmem>>, %arg8: memref<16x49xf32, #tpu.memory_space<vmem>>, %arg9: memref<16x33xf32, #tpu.memory_space<vmem>>, %arg10: memref<32x17xf32, #tpu.memory_space<vmem>>, %arg11: memref<16x128xf32, #tpu.memory_space<vmem>>, %arg12: memref<8x128xf32, #tpu.memory_space<vmem>>, %arg13: memref<2x5x128xf32, #tpu.memory_space<vmem>>, %arg14: memref<2x128xf32, #tpu.memory_space<vmem>>, %arg15: memref<2x5x8xf32, #tpu.memory_space<vmem>>, %arg16: memref<2x5x32xf32, #tpu.memory_space<vmem>>, %arg17: memref<2x5x1xf32, #tpu.memory_space<vmem>>, %arg18: memref<2x5x16xf32, #tpu.memory_space<vmem>>) attributes {dimension_semantics = [], scalar_prefetch = 0 : i64, scratch_operands = 4 : i64, tpu.core_type = #tpu.core_type<tc>} {
    %c0 = arith.constant 0 : index
    %c0_0 = arith.constant 0 : index
    %c0_1 = arith.constant 0 : index
    %0 = vector.load %arg1[%c0, %c0_0, %c0_1] : memref<2x8x32xf32, #tpu.memory_space<vmem>>, vector<2x8x32xf32>
    %c0_2 = arith.constant 0 : index
    %c0_3 = arith.constant 0 : index
    %c0_4 = arith.constant 0 : index
    %1 = vector.load %arg2[%c0_2, %c0_3, %c0_4] : memref<2x8x32xf32, #tpu.memory_space<vmem>>, vector<2x8x32xf32>
    %c0_5 = arith.constant 0 : index
    %c0_6 = arith.constant 0 : index
    %2 = vector.load %arg3[%c0_5, %c0_6] : memref<2x8xi32, #tpu.memory_space<vmem>>, vector<2x8xi32>
    %c0_i32 = arith.constant 0 : i32
    %3 = vector.broadcast %c0_i32 : i32 to vector<2x8xi32>
    %4 = arith.cmpi eq, %2, %3 : vector<2x8xi32>
    %c0_7 = arith.constant 0 : index
    %c0_8 = arith.constant 0 : index
    %5 = vector.load %arg6[%c0_7, %c0_8] : memref<32x65xf32, #tpu.memory_space<vmem>>, vector<32x65xf32>
    %c0_9 = arith.constant 0 : index
    %c0_10 = arith.constant 0 : index
    %6 = vector.load %arg7[%c0_9, %c0_10] : memref<16x64xf32, #tpu.memory_space<vmem>>, vector<16x64xf32>
    %c0_11 = arith.constant 0 : index
    %c0_12 = arith.constant 0 : index
    %7 = vector.load %arg8[%c0_11, %c0_12] : memref<16x49xf32, #tpu.memory_space<vmem>>, vector<16x49xf32>
    %c0_13 = arith.constant 0 : index
    %c0_14 = arith.constant 0 : index
    %8 = vector.load %arg9[%c0_13, %c0_14] : memref<16x33xf32, #tpu.memory_space<vmem>>, vector<16x33xf32>
    %c0_15 = arith.constant 0 : index
    %c0_16 = arith.constant 0 : index
    %9 = vector.load %arg12[%c0_15, %c0_16] : memref<8x128xf32, #tpu.memory_space<vmem>>, vector<8x128xf32>
    %10 = vector.extract_strided_slice %9 {offsets = [0, 0], sizes = [1, 64], strides = [1, 1]} : vector<8x128xf32> to vector<1x64xf32>
    %11 = vector.extract_strided_slice %9 {offsets = [1, 0], sizes = [1, 32], strides = [1, 1]} : vector<8x128xf32> to vector<1x32xf32>
    %12 = vector.shape_cast %11 : vector<1x32xf32> to vector<1x1x32xf32>
    %13 = vector.extract_strided_slice %9 {offsets = [2, 0], sizes = [1, 32], strides = [1, 1]} : vector<8x128xf32> to vector<1x32xf32>
    %14 = vector.shape_cast %13 : vector<1x32xf32> to vector<1x1x32xf32>
    %15 = vector.extract_strided_slice %9 {offsets = [3, 0], sizes = [1, 32], strides = [1, 1]} : vector<8x128xf32> to vector<1x32xf32>
    %16 = vector.shape_cast %15 : vector<1x32xf32> to vector<1x1x32xf32>
    %17 = vector.extract_strided_slice %9 {offsets = [4, 0], sizes = [1, 16], strides = [1, 1]} : vector<8x128xf32> to vector<1x16xf32>
    %18 = vector.extract_strided_slice %9 {offsets = [5, 0], sizes = [1, 128], strides = [1, 1]} : vector<8x128xf32> to vector<1x128xf32>
    %19 = vector.extract_strided_slice %9 {offsets = [6, 0], sizes = [1, 1], strides = [1, 1]} : vector<8x128xf32> to vector<1x1xf32>
    %cst = arith.constant 0.000000e+00 : f32
    %20 = vector.broadcast %cst : f32 to vector<2x128xf32>
    %c0_17 = arith.constant 0 : index
    %c0_18 = arith.constant 0 : index
    %21 = vector.load %arg14[%c0_17, %c0_18] : memref<2x128xf32, #tpu.memory_space<vmem>>, vector<2x128xf32>
    tpu.vector_store %arg14[%c0_17, %c0_18], %20 {strides = array<i32>} : memref<2x128xf32, #tpu.memory_space<vmem>>, vector<2x128xf32>,
    %c0_19 = arith.constant 0 : index
    %c0_20 = arith.constant 0 : index
    %22 = vector.load %arg5[%c0_19, %c0_20] : memref<2x32xf32, #tpu.memory_space<vmem>>, vector<2x16xf32>
    %c0_21 = arith.constant 0 : index
    %c16 = arith.constant 16 : index
    %23 = vector.load %arg5[%c0_21, %c16] : memref<2x32xf32, #tpu.memory_space<vmem>>, vector<2x16xf32>
    %cst_22 = arith.constant 0.000000e+00 : f32
    %24 = vector.broadcast %cst_22 : f32 to vector<2x8xf32>
    %cst_23 = arith.constant 0.000000e+00 : f32
    %25 = vector.broadcast %cst_23 : f32 to vector<2x32xf32>
    %c0_24 = arith.constant 0 : index
    %c0_25 = arith.constant 0 : index
    %c0_26 = arith.constant 0 : index
    %26 = vector.load %arg0[%c0_24, %c0_25, %c0_26] : memref<5x2x65xf32, #tpu.memory_space<vmem>>, vector<1x2x65xf32>
    %27 = vector.shape_cast %26 : vector<1x2x65xf32> to vector<2x65xf32>
    %cst_27 = arith.constant dense<0.000000e+00> : vector<2x65xf32>
    %28 = tpu.matmul %25, %5, %cst_27 {dimension_numbers = #tpu.dot_dimension_numbers<[1], [0], [0], [1], [0, 0, 1, 1], [], []>} : vector<2x32xf32>, vector<32x65xf32>, vector<2x65xf32> -> vector<2x65xf32>
    %29 = vector.extract_strided_slice %27 {offsets = [0, 0], sizes = [2, 64], strides = [1, 1]} : vector<2x65xf32> to vector<2x64xf32>
    %30 = vector.extract_strided_slice %28 {offsets = [0, 0], sizes = [2, 64], strides = [1, 1]} : vector<2x65xf32> to vector<2x64xf32>
    %31 = arith.addf %29, %30 : vector<2x64xf32>
    %cst_28 = arith.constant dense<0.000000e+00> : vector<2x64xf32>
    %32 = tpu.matmul %22, %6, %cst_28 {dimension_numbers = #tpu.dot_dimension_numbers<[1], [0], [0], [1], [0, 0, 1, 1], [], []>} : vector<2x16xf32>, vector<16x64xf32>, vector<2x64xf32> -> vector<2x64xf32>
    %33 = arith.addf %31, %32 : vector<2x64xf32>
    %34 = vector.broadcast %10 : vector<1x64xf32> to vector<2x64xf32>
    %35 = arith.addf %33, %34 : vector<2x64xf32>
    %36 = arith.negf %35 : vector<2x64xf32>
    %37 = math.exp %36 : vector<2x64xf32>
    %cst_29 = arith.constant 1.000000e+00 : f32
    %38 = vector.broadcast %cst_29 : f32 to vector<2x64xf32>
    %39 = arith.addf %38, %37 : vector<2x64xf32>
    %40 = arith.divf %38, %39 : vector<2x64xf32>
    %41 = math.tanh %35 : vector<2x64xf32>
    %42 = vector.extract_strided_slice %40 {offsets = [0, 0], sizes = [2, 16], strides = [1, 1]} : vector<2x64xf32> to vector<2x16xf32>
    %43 = vector.extract_strided_slice %40 {offsets = [0, 16], sizes = [2, 16], strides = [1, 1]} : vector<2x64xf32> to vector<2x16xf32>
    %44 = vector.extract_strided_slice %41 {offsets = [0, 32], sizes = [2, 16], strides = [1, 1]} : vector<2x64xf32> to vector<2x16xf32>
    %45 = vector.extract_strided_slice %40 {offsets = [0, 48], sizes = [2, 16], strides = [1, 1]} : vector<2x64xf32> to vector<2x16xf32>
    %46 = arith.mulf %43, %23 : vector<2x16xf32>
    %47 = arith.mulf %42, %44 : vector<2x16xf32>
    %48 = arith.addf %46, %47 : vector<2x16xf32>
    %49 = math.tanh %48 : vector<2x16xf32>
    %50 = arith.mulf %45, %49 : vector<2x16xf32>
    %cst_30 = arith.constant dense<0.000000e+00> : vector<2x49xf32>
    %51 = tpu.matmul %50, %7, %cst_30 {dimension_numbers = #tpu.dot_dimension_numbers<[1], [0], [0], [1], [0, 0, 1, 1], [], []>} : vector<2x16xf32>, vector<16x49xf32>, vector<2x49xf32> -> vector<2x49xf32>
    %cst_31 = arith.constant dense<0.000000e+00> : vector<2x33xf32>
    %52 = tpu.matmul %48, %8, %cst_31 {dimension_numbers = #tpu.dot_dimension_numbers<[1], [0], [0], [1], [0, 0, 1, 1], [], []>} : vector<2x16xf32>, vector<16x33xf32>, vector<2x33xf32> -> vector<2x33xf32>
    %53 = vector.extract_strided_slice %51 {offsets = [0, 0], sizes = [2, 32], strides = [1, 1]} : vector<2x49xf32> to vector<2x32xf32>
    %54 = vector.extract_strided_slice %52 {offsets = [0, 0], sizes = [2, 32], strides = [1, 1]} : vector<2x33xf32> to vector<2x32xf32>
    %55 = arith.addf %53, %54 : vector<2x32xf32>
    %56 = vector.shape_cast %55 : vector<2x32xf32> to vector<2x1x32xf32>
    %57 = vector.broadcast %56 : vector<2x1x32xf32> to vector<2x8x32xf32>
    %58 = arith.addf %1, %57 : vector<2x8x32xf32>
    %59 = vector.shape_cast %24 : vector<2x8xf32> to vector<2x8x1xf32>
    %60 = vector.broadcast %59 : vector<2x8x1xf32> to vector<2x8x32xf32>
    %61 = vector.broadcast %16 : vector<1x1x32xf32> to vector<2x8x32xf32>
    %62 = arith.mulf %60, %61 : vector<2x8x32xf32>
    %63 = arith.addf %58, %62 : vector<2x8x32xf32>
    %64 = vector.broadcast %12 : vector<1x1x32xf32> to vector<2x8x32xf32>
    %65 = arith.addf %63, %64 : vector<2x8x32xf32>
    %66 = math.tanh %65 : vector<2x8x32xf32>
    %67 = vector.broadcast %14 : vector<1x1x32xf32> to vector<2x8x32xf32>
    %68 = arith.mulf %66, %67 : vector<2x8x32xf32>
    %cst_32 = arith.constant dense<0.000000e+00> : vector<2x8xf32>
    %69 = vector.multi_reduction <add>, %68, %cst_32 [2] : vector<2x8x32xf32> to vector<2x8xf32>
    %cst_33 = arith.constant -1.000000e+09 : f32
    %70 = vector.broadcast %cst_33 : f32 to vector<2x8xf32>
    %71 = arith.select %4, %70, %69 : vector<2x8xi1>, vector<2x8xf32>
    %cst_34 = arith.constant dense<0xFF800000> : vector<2xf32>
    %72 = vector.multi_reduction <maximumf>, %71, %cst_34 [1] : vector<2x8xf32> to vector<2xf32>
    %73 = vector.shape_cast %72 : vector<2xf32> to vector<2x1xf32>
    %74 = vector.broadcast %73 : vector<2x1xf32> to vector<2x8xf32>
    %75 = arith.subf %71, %74 : vector<2x8xf32>
    %76 = math.exp %75 : vector<2x8xf32>
    %cst_35 = arith.constant dense<0.000000e+00> : vector<2xf32>
    %77 = vector.multi_reduction <add>, %76, %cst_35 [1] : vector<2x8xf32> to vector<2xf32>
    %78 = vector.shape_cast %77 : vector<2xf32> to vector<2x1xf32>
    %79 = tpu.reciprocal %78 {approx = true} : vector<2x1xf32> -> vector<2x1xf32>
    %80 = arith.mulf %78, %79 : vector<2x1xf32>
    %cst_36 = arith.constant 2.000000e+00 : f32
    %81 = vector.broadcast %cst_36 : f32 to vector<2x1xf32>
    %82 = arith.subf %81, %80 : vector<2x1xf32>
    %83 = arith.mulf %79, %82 : vector<2x1xf32>
    %84 = vector.broadcast %83 : vector<2x1xf32> to vector<2x8xf32>
    %85 = arith.mulf %76, %84 : vector<2x8xf32>
    %86 = vector.shape_cast %85 : vector<2x8xf32> to vector<2x8x1xf32>
    %87 = vector.broadcast %86 : vector<2x8x1xf32> to vector<2x8x32xf32>
    %88 = arith.mulf %87, %0 : vector<2x8x32xf32>
    %cst_37 = arith.constant dense<0.000000e+00> : vector<2x32xf32>
    %89 = vector.multi_reduction <add>, %88, %cst_37 [1] : vector<2x8x32xf32> to vector<2x32xf32>
    %90 = arith.minimumf %85, %24 : vector<2x8xf32>
    %cst_38 = arith.constant dense<0.000000e+00> : vector<2xf32>
    %91 = vector.multi_reduction <add>, %90, %cst_38 [1] : vector<2x8xf32> to vector<2xf32>
    %92 = vector.shape_cast %91 : vector<2xf32> to vector<2x1xf32>
    %93 = arith.addf %24, %85 : vector<2x8xf32>
    %94 = vector.shape_cast %85 : vector<2x8xf32> to vector<2x1x8xf32>
    %c0_39 = arith.constant 0 : index
    %c0_40 = arith.constant 0 : index
    %c0_41 = arith.constant 0 : index
    %95 = vector.load %arg15[%c0_39, %c0_40, %c0_41] : memref<2x5x8xf32, #tpu.memory_space<vmem>>, vector<2x1x8xf32>
    tpu.vector_store %arg15[%c0_39, %c0_40, %c0_41], %94 {strides = array<i32>} : memref<2x5x8xf32, #tpu.memory_space<vmem>>, vector<2x1x8xf32>,
    %96 = vector.shape_cast %89 : vector<2x32xf32> to vector<2x1x32xf32>
    %c0_42 = arith.constant 0 : index
    %c0_43 = arith.constant 0 : index
    %c0_44 = arith.constant 0 : index
    %97 = vector.load %arg16[%c0_42, %c0_43, %c0_44] : memref<2x5x32xf32, #tpu.memory_space<vmem>>, vector<2x1x32xf32>
    tpu.vector_store %arg16[%c0_42, %c0_43, %c0_44], %96 {strides = array<i32>} : memref<2x5x32xf32, #tpu.memory_space<vmem>>, vector<2x1x32xf32>,
    %98 = vector.extract_strided_slice %51 {offsets = [0, 32], sizes = [2, 1], strides = [1, 1]} : vector<2x49xf32> to vector<2x1xf32>
    %99 = vector.extract_strided_slice %52 {offsets = [0, 32], sizes = [2, 1], strides = [1, 1]} : vector<2x33xf32> to vector<2x1xf32>
    %100 = arith.addf %98, %99 : vector<2x1xf32>
    %101 = vector.extract_strided_slice %27 {offsets = [0, 64], sizes = [2, 1], strides = [1, 1]} : vector<2x65xf32> to vector<2x1xf32>
    %102 = arith.addf %100, %101 : vector<2x1xf32>
    %103 = vector.extract_strided_slice %28 {offsets = [0, 64], sizes = [2, 1], strides = [1, 1]} : vector<2x65xf32> to vector<2x1xf32>
    %104 = arith.addf %102, %103 : vector<2x1xf32>
    %105 = vector.shape_cast %104 : vector<2x1xf32> to vector<2x1x1xf32>
    %c0_45 = arith.constant 0 : index
    %c0_46 = arith.constant 0 : index
    %c0_47 = arith.constant 0 : index
    %106 = vector.load %arg17[%c0_45, %c0_46, %c0_47] : memref<2x5x1xf32, #tpu.memory_space<vmem>>, vector<2x1x1xf32>
    tpu.vector_store %arg17[%c0_45, %c0_46, %c0_47], %105 {strides = array<i32>} : memref<2x5x1xf32, #tpu.memory_space<vmem>>, vector<2x1x1xf32>,
    %107 = vector.extract_strided_slice %51 {offsets = [0, 33], sizes = [2, 16], strides = [1, 1]} : vector<2x49xf32> to vector<2x16xf32>
    %108 = vector.shape_cast %107 : vector<2x16xf32> to vector<2x1x16xf32>
    %c0_48 = arith.constant 0 : index
    %c0_49 = arith.constant 0 : index
    %c0_50 = arith.constant 0 : index
    %109 = vector.load %arg18[%c0_48, %c0_49, %c0_50] : memref<2x5x16xf32, #tpu.memory_space<vmem>>, vector<2x1x16xf32>
    tpu.vector_store %arg18[%c0_48, %c0_49, %c0_50], %108 {strides = array<i32>} : memref<2x5x16xf32, #tpu.memory_space<vmem>>, vector<2x1x16xf32>,
    %c0_51 = arith.constant 0 : index
    %c0_52 = arith.constant 0 : index
    %110 = vector.load %arg14[%c0_51, %c0_52] : memref<2x128xf32, #tpu.memory_space<vmem>>, vector<2x1xf32>
    tpu.vector_store %arg14[%c0_51, %c0_52], %92 {strides = array<i32>} : memref<2x128xf32, #tpu.memory_space<vmem>>, vector<2x1xf32>,
    %c1 = arith.constant 1 : index
    %c0_53 = arith.constant 0 : index
    %c0_54 = arith.constant 0 : index
    %111 = vector.load %arg0[%c1, %c0_53, %c0_54] : memref<5x2x65xf32, #tpu.memory_space<vmem>>, vector<1x2x65xf32>
    %112 = vector.shape_cast %111 : vector<1x2x65xf32> to vector<2x65xf32>
    %cst_55 = arith.constant dense<0.000000e+00> : vector<2x65xf32>
    %113 = tpu.matmul %89, %5, %cst_55 {dimension_numbers = #tpu.dot_dimension_numbers<[1], [0], [0], [1], [0, 0, 1, 1], [], []>} : vector<2x32xf32>, vector<32x65xf32>, vector<2x65xf32> -> vector<2x65xf32>
    %114 = vector.extract_strided_slice %112 {offsets = [0, 0], sizes = [2, 64], strides = [1, 1]} : vector<2x65xf32> to vector<2x64xf32>
    %115 = vector.extract_strided_slice %113 {offsets = [0, 0], sizes = [2, 64], strides = [1, 1]} : vector<2x65xf32> to vector<2x64xf32>
    %116 = arith.addf %114, %115 : vector<2x64xf32>
    %cst_56 = arith.constant dense<0.000000e+00> : vector<2x64xf32>
    %117 = tpu.matmul %50, %6, %cst_56 {dimension_numbers = #tpu.dot_dimension_numbers<[1], [0], [0], [1], [0, 0, 1, 1], [], []>} : vector<2x16xf32>, vector<16x64xf32>, vector<2x64xf32> -> vector<2x64xf32>
    %118 = arith.addf %116, %117 : vector<2x64xf32>
    %119 = vector.broadcast %10 : vector<1x64xf32> to vector<2x64xf32>
    %120 = arith.addf %118, %119 : vector<2x64xf32>
    %121 = arith.negf %120 : vector<2x64xf32>
    %122 = math.exp %121 : vector<2x64xf32>
    %cst_57 = arith.constant 1.000000e+00 : f32
    %123 = vector.broadcast %cst_57 : f32 to vector<2x64xf32>
    %124 = arith.addf %123, %122 : vector<2x64xf32>
    %125 = arith.divf %123, %124 : vector<2x64xf32>
    %126 = math.tanh %120 : vector<2x64xf32>
    %127 = vector.extract_strided_slice %125 {offsets = [0, 0], sizes = [2, 16], strides = [1, 1]} : vector<2x64xf32> to vector<2x16xf32>
    %128 = vector.extract_strided_slice %125 {offsets = [0, 16], sizes = [2, 16], strides = [1, 1]} : vector<2x64xf32> to vector<2x16xf32>
    %129 = vector.extract_strided_slice %126 {offsets = [0, 32], sizes = [2, 16], strides = [1, 1]} : vector<2x64xf32> to vector<2x16xf32>
    %130 = vector.extract_strided_slice %125 {offsets = [0, 48], sizes = [2, 16], strides = [1, 1]} : vector<2x64xf32> to vector<2x16xf32>
    %131 = arith.mulf %128, %48 : vector<2x16xf32>
    %132 = arith.mulf %127, %129 : vector<2x16xf32>
    %133 = arith.addf %131, %132 : vector<2x16xf32>
    %134 = math.tanh %133 : vector<2x16xf32>
    %135 = arith.mulf %130, %134 : vector<2x16xf32>
    %cst_58 = arith.constant dense<0.000000e+00> : vector<2x49xf32>
    %136 = tpu.matmul %135, %7, %cst_58 {dimension_numbers = #tpu.dot_dimension_numbers<[1], [0], [0], [1], [0, 0, 1, 1], [], []>} : vector<2x16xf32>, vector<16x49xf32>, vector<2x49xf32> -> vector<2x49xf32>
    %cst_59 = arith.constant dense<0.000000e+00> : vector<2x33xf32>
    %137 = tpu.matmul %133, %8, %cst_59 {dimension_numbers = #tpu.dot_dimension_numbers<[1], [0], [0], [1], [0, 0, 1, 1], [], []>} : vector<2x16xf32>, vector<16x33xf32>, vector<2x33xf32> -> vector<2x33xf32>
    %138 = vector.extract_strided_slice %136 {offsets = [0, 0], sizes = [2, 32], strides = [1, 1]} : vector<2x49xf32> to vector<2x32xf32>
    %139 = vector.extract_strided_slice %137 {offsets = [0, 0], sizes = [2, 32], strides = [1, 1]} : vector<2x33xf32> to vector<2x32xf32>
    %140 = arith.addf %138, %139 : vector<2x32xf32>
    %141 = vector.shape_cast %140 : vector<2x32xf32> to vector<2x1x32xf32>
    %142 = vector.broadcast %141 : vector<2x1x32xf32> to vector<2x8x32xf32>
    %143 = arith.addf %1, %142 : vector<2x8x32xf32>
    %144 = vector.shape_cast %93 : vector<2x8xf32> to vector<2x8x1xf32>
    %145 = vector.broadcast %144 : vector<2x8x1xf32> to vector<2x8x32xf32>
    %146 = vector.broadcast %16 : vector<1x1x32xf32> to vector<2x8x32xf32>
    %147 = arith.mulf %145, %146 : vector<2x8x32xf32>
    %148 = arith.addf %143, %147 : vector<2x8x32xf32>
    %149 = vector.broadcast %12 : vector<1x1x32xf32> to vector<2x8x32xf32>
    %150 = arith.addf %148, %149 : vector<2x8x32xf32>
    %151 = math.tanh %150 : vector<2x8x32xf32>
    %152 = vector.broadcast %14 : vector<1x1x32xf32> to vector<2x8x32xf32>
    %153 = arith.mulf %151, %152 : vector<2x8x32xf32>
    %cst_60 = arith.constant dense<0.000000e+00> : vector<2x8xf32>
    %154 = vector.multi_reduction <add>, %153, %cst_60 [2] : vector<2x8x32xf32> to vector<2x8xf32>
    %cst_61 = arith.constant -1.000000e+09 : f32
    %155 = vector.broadcast %cst_61 : f32 to vector<2x8xf32>
    %156 = arith.select %4, %155, %154 : vector<2x8xi1>, vector<2x8xf32>
    %cst_62 = arith.constant dense<0xFF800000> : vector<2xf32>
    %157 = vector.multi_reduction <maximumf>, %156, %cst_62 [1] : vector<2x8xf32> to vector<2xf32>
    %158 = vector.shape_cast %157 : vector<2xf32> to vector<2x1xf32>
    %159 = vector.broadcast %158 : vector<2x1xf32> to vector<2x8xf32>
    %160 = arith.subf %156, %159 : vector<2x8xf32>
    %161 = math.exp %160 : vector<2x8xf32>
    %cst_63 = arith.constant dense<0.000000e+00> : vector<2xf32>
    %162 = vector.multi_reduction <add>, %161, %cst_63 [1] : vector<2x8xf32> to vector<2xf32>
    %163 = vector.shape_cast %162 : vector<2xf32> to vector<2x1xf32>
    %164 = tpu.reciprocal %163 {approx = true} : vector<2x1xf32> -> vector<2x1xf32>
    %165 = arith.mulf %163, %164 : vector<2x1xf32>
    %cst_64 = arith.constant 2.000000e+00 : f32
    %166 = vector.broadcast %cst_64 : f32 to vector<2x1xf32>
    %167 = arith.subf %166, %165 : vector<2x1xf32>
    %168 = arith.mulf %164, %167 : vector<2x1xf32>
    %169 = vector.broadcast %168 : vector<2x1xf32> to vector<2x8xf32>
    %170 = arith.mulf %161, %169 : vector<2x8xf32>
    %171 = vector.shape_cast %170 : vector<2x8xf32> to vector<2x8x1xf32>
    %172 = vector.broadcast %171 : vector<2x8x1xf32> to vector<2x8x32xf32>
    %173 = arith.mulf %172, %0 : vector<2x8x32xf32>
    %cst_65 = arith.constant dense<0.000000e+00> : vector<2x32xf32>
    %174 = vector.multi_reduction <add>, %173, %cst_65 [1] : vector<2x8x32xf32> to vector<2x32xf32>
    %175 = arith.minimumf %170, %93 : vector<2x8xf32>
    %cst_66 = arith.constant dense<0.000000e+00> : vector<2xf32>
    %176 = vector.multi_reduction <add>, %175, %cst_66 [1] : vector<2x8xf32> to vector<2xf32>
    %177 = vector.shape_cast %176 : vector<2xf32> to vector<2x1xf32>
    %178 = arith.addf %93, %170 : vector<2x8xf32>
    %179 = vector.shape_cast %170 : vector<2x8xf32> to vector<2x1x8xf32>
    %c0_67 = arith.constant 0 : index
    %c1_68 = arith.constant 1 : index
    %c0_69 = arith.constant 0 : index
    %180 = vector.load %arg15[%c0_67, %c1_68, %c0_69] : memref<2x5x8xf32, #tpu.memory_space<vmem>>, vector<2x1x8xf32>
    tpu.vector_store %arg15[%c0_67, %c1_68, %c0_69], %179 {strides = array<i32>} : memref<2x5x8xf32, #tpu.memory_space<vmem>>, vector<2x1x8xf32>,
    %181 = vector.shape_cast %174 : vector<2x32xf32> to vector<2x1x32xf32>
    %c0_70 = arith.constant 0 : index
    %c1_71 = arith.constant 1 : index
    %c0_72 = arith.constant 0 : index
    %182 = vector.load %arg16[%c0_70, %c1_71, %c0_72] : memref<2x5x32xf32, #tpu.memory_space<vmem>>, vector<2x1x32xf32>
    tpu.vector_store %arg16[%c0_70, %c1_71, %c0_72], %181 {strides = array<i32>} : memref<2x5x32xf32, #tpu.memory_space<vmem>>, vector<2x1x32xf32>,
    %183 = vector.extract_strided_slice %136 {offsets = [0, 32], sizes = [2, 1], strides = [1, 1]} : vector<2x49xf32> to vector<2x1xf32>
    %184 = vector.extract_strided_slice %137 {offsets = [0, 32], sizes = [2, 1], strides = [1, 1]} : vector<2x33xf32> to vector<2x1xf32>
    %185 = arith.addf %183, %184 : vector<2x1xf32>
    %186 = vector.extract_strided_slice %112 {offsets = [0, 64], sizes = [2, 1], strides = [1, 1]} : vector<2x65xf32> to vector<2x1xf32>
    %187 = arith.addf %185, %186 : vector<2x1xf32>
    %188 = vector.extract_strided_slice %113 {offsets = [0, 64], sizes = [2, 1], strides = [1, 1]} : vector<2x65xf32> to vector<2x1xf32>
    %189 = arith.addf %187, %188 : vector<2x1xf32>
    %190 = vector.shape_cast %189 : vector<2x1xf32> to vector<2x1x1xf32>
    %c0_73 = arith.constant 0 : index
    %c1_74 = arith.constant 1 : index
    %c0_75 = arith.constant 0 : index
    %191 = vector.load %arg17[%c0_73, %c1_74, %c0_75] : memref<2x5x1xf32, #tpu.memory_space<vmem>>, vector<2x1x1xf32>
    tpu.vector_store %arg17[%c0_73, %c1_74, %c0_75], %190 {strides = array<i32>} : memref<2x5x1xf32, #tpu.memory_space<vmem>>, vector<2x1x1xf32>,
    %192 = vector.extract_strided_slice %136 {offsets = [0, 33], sizes = [2, 16], strides = [1, 1]} : vector<2x49xf32> to vector<2x16xf32>
    %193 = vector.shape_cast %192 : vector<2x16xf32> to vector<2x1x16xf32>
    %c0_76 = arith.constant 0 : index
    %c1_77 = arith.constant 1 : index
    %c0_78 = arith.constant 0 : index
    %194 = vector.load %arg18[%c0_76, %c1_77, %c0_78] : memref<2x5x16xf32, #tpu.memory_space<vmem>>, vector<2x1x16xf32>
    tpu.vector_store %arg18[%c0_76, %c1_77, %c0_78], %193 {strides = array<i32>} : memref<2x5x16xf32, #tpu.memory_space<vmem>>, vector<2x1x16xf32>,
    %c0_79 = arith.constant 0 : index
    %c1_80 = arith.constant 1 : index
    %195 = vector.load %arg14[%c0_79, %c1_80] : memref<2x128xf32, #tpu.memory_space<vmem>>, vector<2x1xf32>
    tpu.vector_store %arg14[%c0_79, %c1_80], %177 {strides = array<i32>} : memref<2x128xf32, #tpu.memory_space<vmem>>, vector<2x1xf32>,
    %c2 = arith.constant 2 : index
    %c0_81 = arith.constant 0 : index
    %c0_82 = arith.constant 0 : index
    %196 = vector.load %arg0[%c2, %c0_81, %c0_82] : memref<5x2x65xf32, #tpu.memory_space<vmem>>, vector<1x2x65xf32>
    %197 = vector.shape_cast %196 : vector<1x2x65xf32> to vector<2x65xf32>
    %cst_83 = arith.constant dense<0.000000e+00> : vector<2x65xf32>
    %198 = tpu.matmul %174, %5, %cst_83 {dimension_numbers = #tpu.dot_dimension_numbers<[1], [0], [0], [1], [0, 0, 1, 1], [], []>} : vector<2x32xf32>, vector<32x65xf32>, vector<2x65xf32> -> vector<2x65xf32>
    %199 = vector.extract_strided_slice %197 {offsets = [0, 0], sizes = [2, 64], strides = [1, 1]} : vector<2x65xf32> to vector<2x64xf32>
    %200 = vector.extract_strided_slice %198 {offsets = [0, 0], sizes = [2, 64], strides = [1, 1]} : vector<2x65xf32> to vector<2x64xf32>
    %201 = arith.addf %199, %200 : vector<2x64xf32>
    %cst_84 = arith.constant dense<0.000000e+00> : vector<2x64xf32>
    %202 = tpu.matmul %135, %6, %cst_84 {dimension_numbers = #tpu.dot_dimension_numbers<[1], [0], [0], [1], [0, 0, 1, 1], [], []>} : vector<2x16xf32>, vector<16x64xf32>, vector<2x64xf32> -> vector<2x64xf32>
    %203 = arith.addf %201, %202 : vector<2x64xf32>
    %204 = vector.broadcast %10 : vector<1x64xf32> to vector<2x64xf32>
    %205 = arith.addf %203, %204 : vector<2x64xf32>
    %206 = arith.negf %205 : vector<2x64xf32>
    %207 = math.exp %206 : vector<2x64xf32>
    %cst_85 = arith.constant 1.000000e+00 : f32
    %208 = vector.broadcast %cst_85 : f32 to vector<2x64xf32>
    %209 = arith.addf %208, %207 : vector<2x64xf32>
    %210 = arith.divf %208, %209 : vector<2x64xf32>
    %211 = math.tanh %205 : vector<2x64xf32>
    %212 = vector.extract_strided_slice %210 {offsets = [0, 0], sizes = [2, 16], strides = [1, 1]} : vector<2x64xf32> to vector<2x16xf32>
    %213 = vector.extract_strided_slice %210 {offsets = [0, 16], sizes = [2, 16], strides = [1, 1]} : vector<2x64xf32> to vector<2x16xf32>
    %214 = vector.extract_strided_slice %211 {offsets = [0, 32], sizes = [2, 16], strides = [1, 1]} : vector<2x64xf32> to vector<2x16xf32>
    %215 = vector.extract_strided_slice %210 {offsets = [0, 48], sizes = [2, 16], strides = [1, 1]} : vector<2x64xf32> to vector<2x16xf32>
    %216 = arith.mulf %213, %133 : vector<2x16xf32>
    %217 = arith.mulf %212, %214 : vector<2x16xf32>
    %218 = arith.addf %216, %217 : vector<2x16xf32>
    %219 = math.tanh %218 : vector<2x16xf32>
    %220 = arith.mulf %215, %219 : vector<2x16xf32>
    %cst_86 = arith.constant dense<0.000000e+00> : vector<2x49xf32>
    %221 = tpu.matmul %220, %7, %cst_86 {dimension_numbers = #tpu.dot_dimension_numbers<[1], [0], [0], [1], [0, 0, 1, 1], [], []>} : vector<2x16xf32>, vector<16x49xf32>, vector<2x49xf32> -> vector<2x49xf32>
    %cst_87 = arith.constant dense<0.000000e+00> : vector<2x33xf32>
    %222 = tpu.matmul %218, %8, %cst_87 {dimension_numbers = #tpu.dot_dimension_numbers<[1], [0], [0], [1], [0, 0, 1, 1], [], []>} : vector<2x16xf32>, vector<16x33xf32>, vector<2x33xf32> -> vector<2x33xf32>
    %223 = vector.extract_strided_slice %221 {offsets = [0, 0], sizes = [2, 32], strides = [1, 1]} : vector<2x49xf32> to vector<2x32xf32>
    %224 = vector.extract_strided_slice %222 {offsets = [0, 0], sizes = [2, 32], strides = [1, 1]} : vector<2x33xf32> to vector<2x32xf32>
    %225 = arith.addf %223, %224 : vector<2x32xf32>
    %226 = vector.shape_cast %225 : vector<2x32xf32> to vector<2x1x32xf32>
    %227 = vector.broadcast %226 : vector<2x1x32xf32> to vector<2x8x32xf32>
    %228 = arith.addf %1, %227 : vector<2x8x32xf32>
    %229 = vector.shape_cast %178 : vector<2x8xf32> to vector<2x8x1xf32>
    %230 = vector.broadcast %229 : vector<2x8x1xf32> to vector<2x8x32xf32>
    %231 = vector.broadcast %16 : vector<1x1x32xf32> to vector<2x8x32xf32>
    %232 = arith.mulf %230, %231 : vector<2x8x32xf32>
    %233 = arith.addf %228, %232 : vector<2x8x32xf32>
    %234 = vector.broadcast %12 : vector<1x1x32xf32> to vector<2x8x32xf32>
    %235 = arith.addf %233, %234 : vector<2x8x32xf32>
    %236 = math.tanh %235 : vector<2x8x32xf32>
    %237 = vector.broadcast %14 : vector<1x1x32xf32> to vector<2x8x32xf32>
    %238 = arith.mulf %236, %237 : vector<2x8x32xf32>
    %cst_88 = arith.constant dense<0.000000e+00> : vector<2x8xf32>
    %239 = vector.multi_reduction <add>, %238, %cst_88 [2] : vector<2x8x32xf32> to vector<2x8xf32>
    %cst_89 = arith.constant -1.000000e+09 : f32
    %240 = vector.broadcast %cst_89 : f32 to vector<2x8xf32>
    %241 = arith.select %4, %240, %239 : vector<2x8xi1>, vector<2x8xf32>
    %cst_90 = arith.constant dense<0xFF800000> : vector<2xf32>
    %242 = vector.multi_reduction <maximumf>, %241, %cst_90 [1] : vector<2x8xf32> to vector<2xf32>
    %243 = vector.shape_cast %242 : vector<2xf32> to vector<2x1xf32>
    %244 = vector.broadcast %243 : vector<2x1xf32> to vector<2x8xf32>
    %245 = arith.subf %241, %244 : vector<2x8xf32>
    %246 = math.exp %245 : vector<2x8xf32>
    %cst_91 = arith.constant dense<0.000000e+00> : vector<2xf32>
    %247 = vector.multi_reduction <add>, %246, %cst_91 [1] : vector<2x8xf32> to vector<2xf32>
    %248 = vector.shape_cast %247 : vector<2xf32> to vector<2x1xf32>
    %249 = tpu.reciprocal %248 {approx = true} : vector<2x1xf32> -> vector<2x1xf32>
    %250 = arith.mulf %248, %249 : vector<2x1xf32>
    %cst_92 = arith.constant 2.000000e+00 : f32
    %251 = vector.broadcast %cst_92 : f32 to vector<2x1xf32>
    %252 = arith.subf %251, %250 : vector<2x1xf32>
    %253 = arith.mulf %249, %252 : vector<2x1xf32>
    %254 = vector.broadcast %253 : vector<2x1xf32> to vector<2x8xf32>
    %255 = arith.mulf %246, %254 : vector<2x8xf32>
    %256 = vector.shape_cast %255 : vector<2x8xf32> to vector<2x8x1xf32>
    %257 = vector.broadcast %256 : vector<2x8x1xf32> to vector<2x8x32xf32>
    %258 = arith.mulf %257, %0 : vector<2x8x32xf32>
    %cst_93 = arith.constant dense<0.000000e+00> : vector<2x32xf32>
    %259 = vector.multi_reduction <add>, %258, %cst_93 [1] : vector<2x8x32xf32> to vector<2x32xf32>
    %260 = arith.minimumf %255, %178 : vector<2x8xf32>
    %cst_94 = arith.constant dense<0.000000e+00> : vector<2xf32>
    %261 = vector.multi_reduction <add>, %260, %cst_94 [1] : vector<2x8xf32> to vector<2xf32>
    %262 = vector.shape_cast %261 : vector<2xf32> to vector<2x1xf32>
    %263 = arith.addf %178, %255 : vector<2x8xf32>
    %264 = vector.shape_cast %255 : vector<2x8xf32> to vector<2x1x8xf32>
    %c0_95 = arith.constant 0 : index
    %c2_96 = arith.constant 2 : index
    %c0_97 = arith.constant 0 : index
    %265 = vector.load %arg15[%c0_95, %c2_96, %c0_97] : memref<2x5x8xf32, #tpu.memory_space<vmem>>, vector<2x1x8xf32>
    tpu.vector_store %arg15[%c0_95, %c2_96, %c0_97], %264 {strides = array<i32>} : memref<2x5x8xf32, #tpu.memory_space<vmem>>, vector<2x1x8xf32>,
    %266 = vector.shape_cast %259 : vector<2x32xf32> to vector<2x1x32xf32>
    %c0_98 = arith.constant 0 : index
    %c2_99 = arith.constant 2 : index
    %c0_100 = arith.constant 0 : index
    %267 = vector.load %arg16[%c0_98, %c2_99, %c0_100] : memref<2x5x32xf32, #tpu.memory_space<vmem>>, vector<2x1x32xf32>
    tpu.vector_store %arg16[%c0_98, %c2_99, %c0_100], %266 {strides = array<i32>} : memref<2x5x32xf32, #tpu.memory_space<vmem>>, vector<2x1x32xf32>,
    %268 = vector.extract_strided_slice %221 {offsets = [0, 32], sizes = [2, 1], strides = [1, 1]} : vector<2x49xf32> to vector<2x1xf32>
    %269 = vector.extract_strided_slice %222 {offsets = [0, 32], sizes = [2, 1], strides = [1, 1]} : vector<2x33xf32> to vector<2x1xf32>
    %270 = arith.addf %268, %269 : vector<2x1xf32>
    %271 = vector.extract_strided_slice %197 {offsets = [0, 64], sizes = [2, 1], strides = [1, 1]} : vector<2x65xf32> to vector<2x1xf32>
    %272 = arith.addf %270, %271 : vector<2x1xf32>
    %273 = vector.extract_strided_slice %198 {offsets = [0, 64], sizes = [2, 1], strides = [1, 1]} : vector<2x65xf32> to vector<2x1xf32>
    %274 = arith.addf %272, %273 : vector<2x1xf32>
    %275 = vector.shape_cast %274 : vector<2x1xf32> to vector<2x1x1xf32>
    %c0_101 = arith.constant 0 : index
    %c2_102 = arith.constant 2 : index
    %c0_103 = arith.constant 0 : index
    %276 = vector.load %arg17[%c0_101, %c2_102, %c0_103] : memref<2x5x1xf32, #tpu.memory_space<vmem>>, vector<2x1x1xf32>
    tpu.vector_store %arg17[%c0_101, %c2_102, %c0_103], %275 {strides = array<i32>} : memref<2x5x1xf32, #tpu.memory_space<vmem>>, vector<2x1x1xf32>,
    %277 = vector.extract_strided_slice %221 {offsets = [0, 33], sizes = [2, 16], strides = [1, 1]} : vector<2x49xf32> to vector<2x16xf32>
    %278 = vector.shape_cast %277 : vector<2x16xf32> to vector<2x1x16xf32>
    %c0_104 = arith.constant 0 : index
    %c2_105 = arith.constant 2 : index
    %c0_106 = arith.constant 0 : index
    %279 = vector.load %arg18[%c0_104, %c2_105, %c0_106] : memref<2x5x16xf32, #tpu.memory_space<vmem>>, vector<2x1x16xf32>
    tpu.vector_store %arg18[%c0_104, %c2_105, %c0_106], %278 {strides = array<i32>} : memref<2x5x16xf32, #tpu.memory_space<vmem>>, vector<2x1x16xf32>,
    %c0_107 = arith.constant 0 : index
    %c2_108 = arith.constant 2 : index
    %280 = vector.load %arg14[%c0_107, %c2_108] : memref<2x128xf32, #tpu.memory_space<vmem>>, vector<2x1xf32>
    tpu.vector_store %arg14[%c0_107, %c2_108], %262 {strides = array<i32>} : memref<2x128xf32, #tpu.memory_space<vmem>>, vector<2x1xf32>,
    %c3 = arith.constant 3 : index
    %c0_109 = arith.constant 0 : index
    %c0_110 = arith.constant 0 : index
    %281 = vector.load %arg0[%c3, %c0_109, %c0_110] : memref<5x2x65xf32, #tpu.memory_space<vmem>>, vector<1x2x65xf32>
    %282 = vector.shape_cast %281 : vector<1x2x65xf32> to vector<2x65xf32>
    %cst_111 = arith.constant dense<0.000000e+00> : vector<2x65xf32>
    %283 = tpu.matmul %259, %5, %cst_111 {dimension_numbers = #tpu.dot_dimension_numbers<[1], [0], [0], [1], [0, 0, 1, 1], [], []>} : vector<2x32xf32>, vector<32x65xf32>, vector<2x65xf32> -> vector<2x65xf32>
    %284 = vector.extract_strided_slice %282 {offsets = [0, 0], sizes = [2, 64], strides = [1, 1]} : vector<2x65xf32> to vector<2x64xf32>
    %285 = vector.extract_strided_slice %283 {offsets = [0, 0], sizes = [2, 64], strides = [1, 1]} : vector<2x65xf32> to vector<2x64xf32>
    %286 = arith.addf %284, %285 : vector<2x64xf32>
    %cst_112 = arith.constant dense<0.000000e+00> : vector<2x64xf32>
    %287 = tpu.matmul %220, %6, %cst_112 {dimension_numbers = #tpu.dot_dimension_numbers<[1], [0], [0], [1], [0, 0, 1, 1], [], []>} : vector<2x16xf32>, vector<16x64xf32>, vector<2x64xf32> -> vector<2x64xf32>
    %288 = arith.addf %286, %287 : vector<2x64xf32>
    %289 = vector.broadcast %10 : vector<1x64xf32> to vector<2x64xf32>
    %290 = arith.addf %288, %289 : vector<2x64xf32>
    %291 = arith.negf %290 : vector<2x64xf32>
    %292 = math.exp %291 : vector<2x64xf32>
    %cst_113 = arith.constant 1.000000e+00 : f32
    %293 = vector.broadcast %cst_113 : f32 to vector<2x64xf32>
    %294 = arith.addf %293, %292 : vector<2x64xf32>
    %295 = arith.divf %293, %294 : vector<2x64xf32>
    %296 = math.tanh %290 : vector<2x64xf32>
    %297 = vector.extract_strided_slice %295 {offsets = [0, 0], sizes = [2, 16], strides = [1, 1]} : vector<2x64xf32> to vector<2x16xf32>
    %298 = vector.extract_strided_slice %295 {offsets = [0, 16], sizes = [2, 16], strides = [1, 1]} : vector<2x64xf32> to vector<2x16xf32>
    %299 = vector.extract_strided_slice %296 {offsets = [0, 32], sizes = [2, 16], strides = [1, 1]} : vector<2x64xf32> to vector<2x16xf32>
    %300 = vector.extract_strided_slice %295 {offsets = [0, 48], sizes = [2, 16], strides = [1, 1]} : vector<2x64xf32> to vector<2x16xf32>
    %301 = arith.mulf %298, %218 : vector<2x16xf32>
    %302 = arith.mulf %297, %299 : vector<2x16xf32>
    %303 = arith.addf %301, %302 : vector<2x16xf32>
    %304 = math.tanh %303 : vector<2x16xf32>
    %305 = arith.mulf %300, %304 : vector<2x16xf32>
    %cst_114 = arith.constant dense<0.000000e+00> : vector<2x49xf32>
    %306 = tpu.matmul %305, %7, %cst_114 {dimension_numbers = #tpu.dot_dimension_numbers<[1], [0], [0], [1], [0, 0, 1, 1], [], []>} : vector<2x16xf32>, vector<16x49xf32>, vector<2x49xf32> -> vector<2x49xf32>
    %cst_115 = arith.constant dense<0.000000e+00> : vector<2x33xf32>
    %307 = tpu.matmul %303, %8, %cst_115 {dimension_numbers = #tpu.dot_dimension_numbers<[1], [0], [0], [1], [0, 0, 1, 1], [], []>} : vector<2x16xf32>, vector<16x33xf32>, vector<2x33xf32> -> vector<2x33xf32>
    %308 = vector.extract_strided_slice %306 {offsets = [0, 0], sizes = [2, 32], strides = [1, 1]} : vector<2x49xf32> to vector<2x32xf32>
    %309 = vector.extract_strided_slice %307 {offsets = [0, 0], sizes = [2, 32], strides = [1, 1]} : vector<2x33xf32> to vector<2x32xf32>
    %310 = arith.addf %308, %309 : vector<2x32xf32>
    %311 = vector.shape_cast %310 : vector<2x32xf32> to vector<2x1x32xf32>
    %312 = vector.broadcast %311 : vector<2x1x32xf32> to vector<2x8x32xf32>
    %313 = arith.addf %1, %312 : vector<2x8x32xf32>
    %314 = vector.shape_cast %263 : vector<2x8xf32> to vector<2x8x1xf32>
    %315 = vector.broadcast %314 : vector<2x8x1xf32> to vector<2x8x32xf32>
    %316 = vector.broadcast %16 : vector<1x1x32xf32> to vector<2x8x32xf32>
    %317 = arith.mulf %315, %316 : vector<2x8x32xf32>
    %318 = arith.addf %313, %317 : vector<2x8x32xf32>
    %319 = vector.broadcast %12 : vector<1x1x32xf32> to vector<2x8x32xf32>
    %320 = arith.addf %318, %319 : vector<2x8x32xf32>
    %321 = math.tanh %320 : vector<2x8x32xf32>
    %322 = vector.broadcast %14 : vector<1x1x32xf32> to vector<2x8x32xf32>
    %323 = arith.mulf %321, %322 : vector<2x8x32xf32>
    %cst_116 = arith.constant dense<0.000000e+00> : vector<2x8xf32>
    %324 = vector.multi_reduction <add>, %323, %cst_116 [2] : vector<2x8x32xf32> to vector<2x8xf32>
    %cst_117 = arith.constant -1.000000e+09 : f32
    %325 = vector.broadcast %cst_117 : f32 to vector<2x8xf32>
    %326 = arith.select %4, %325, %324 : vector<2x8xi1>, vector<2x8xf32>
    %cst_118 = arith.constant dense<0xFF800000> : vector<2xf32>
    %327 = vector.multi_reduction <maximumf>, %326, %cst_118 [1] : vector<2x8xf32> to vector<2xf32>
    %328 = vector.shape_cast %327 : vector<2xf32> to vector<2x1xf32>
    %329 = vector.broadcast %328 : vector<2x1xf32> to vector<2x8xf32>
    %330 = arith.subf %326, %329 : vector<2x8xf32>
    %331 = math.exp %330 : vector<2x8xf32>
    %cst_119 = arith.constant dense<0.000000e+00> : vector<2xf32>
    %332 = vector.multi_reduction <add>, %331, %cst_119 [1] : vector<2x8xf32> to vector<2xf32>
    %333 = vector.shape_cast %332 : vector<2xf32> to vector<2x1xf32>
    %334 = tpu.reciprocal %333 {approx = true} : vector<2x1xf32> -> vector<2x1xf32>
    %335 = arith.mulf %333, %334 : vector<2x1xf32>
    %cst_120 = arith.constant 2.000000e+00 : f32
    %336 = vector.broadcast %cst_120 : f32 to vector<2x1xf32>
    %337 = arith.subf %336, %335 : vector<2x1xf32>
    %338 = arith.mulf %334, %337 : vector<2x1xf32>
    %339 = vector.broadcast %338 : vector<2x1xf32> to vector<2x8xf32>
    %340 = arith.mulf %331, %339 : vector<2x8xf32>
    %341 = vector.shape_cast %340 : vector<2x8xf32> to vector<2x8x1xf32>
    %342 = vector.broadcast %341 : vector<2x8x1xf32> to vector<2x8x32xf32>
    %343 = arith.mulf %342, %0 : vector<2x8x32xf32>
    %cst_121 = arith.constant dense<0.000000e+00> : vector<2x32xf32>
    %344 = vector.multi_reduction <add>, %343, %cst_121 [1] : vector<2x8x32xf32> to vector<2x32xf32>
    %345 = arith.minimumf %340, %263 : vector<2x8xf32>
    %cst_122 = arith.constant dense<0.000000e+00> : vector<2xf32>
    %346 = vector.multi_reduction <add>, %345, %cst_122 [1] : vector<2x8xf32> to vector<2xf32>
    %347 = vector.shape_cast %346 : vector<2xf32> to vector<2x1xf32>
    %348 = arith.addf %263, %340 : vector<2x8xf32>
    %349 = vector.shape_cast %340 : vector<2x8xf32> to vector<2x1x8xf32>
    %c0_123 = arith.constant 0 : index
    %c3_124 = arith.constant 3 : index
    %c0_125 = arith.constant 0 : index
    %350 = vector.load %arg15[%c0_123, %c3_124, %c0_125] : memref<2x5x8xf32, #tpu.memory_space<vmem>>, vector<2x1x8xf32>
    tpu.vector_store %arg15[%c0_123, %c3_124, %c0_125], %349 {strides = array<i32>} : memref<2x5x8xf32, #tpu.memory_space<vmem>>, vector<2x1x8xf32>,
    %351 = vector.shape_cast %344 : vector<2x32xf32> to vector<2x1x32xf32>
    %c0_126 = arith.constant 0 : index
    %c3_127 = arith.constant 3 : index
    %c0_128 = arith.constant 0 : index
    %352 = vector.load %arg16[%c0_126, %c3_127, %c0_128] : memref<2x5x32xf32, #tpu.memory_space<vmem>>, vector<2x1x32xf32>
    tpu.vector_store %arg16[%c0_126, %c3_127, %c0_128], %351 {strides = array<i32>} : memref<2x5x32xf32, #tpu.memory_space<vmem>>, vector<2x1x32xf32>,
    %353 = vector.extract_strided_slice %306 {offsets = [0, 32], sizes = [2, 1], strides = [1, 1]} : vector<2x49xf32> to vector<2x1xf32>
    %354 = vector.extract_strided_slice %307 {offsets = [0, 32], sizes = [2, 1], strides = [1, 1]} : vector<2x33xf32> to vector<2x1xf32>
    %355 = arith.addf %353, %354 : vector<2x1xf32>
    %356 = vector.extract_strided_slice %282 {offsets = [0, 64], sizes = [2, 1], strides = [1, 1]} : vector<2x65xf32> to vector<2x1xf32>
    %357 = arith.addf %355, %356 : vector<2x1xf32>
    %358 = vector.extract_strided_slice %283 {offsets = [0, 64], sizes = [2, 1], strides = [1, 1]} : vector<2x65xf32> to vector<2x1xf32>
    %359 = arith.addf %357, %358 : vector<2x1xf32>
    %360 = vector.shape_cast %359 : vector<2x1xf32> to vector<2x1x1xf32>
    %c0_129 = arith.constant 0 : index
    %c3_130 = arith.constant 3 : index
    %c0_131 = arith.constant 0 : index
    %361 = vector.load %arg17[%c0_129, %c3_130, %c0_131] : memref<2x5x1xf32, #tpu.memory_space<vmem>>, vector<2x1x1xf32>
    tpu.vector_store %arg17[%c0_129, %c3_130, %c0_131], %360 {strides = array<i32>} : memref<2x5x1xf32, #tpu.memory_space<vmem>>, vector<2x1x1xf32>,
    %362 = vector.extract_strided_slice %306 {offsets = [0, 33], sizes = [2, 16], strides = [1, 1]} : vector<2x49xf32> to vector<2x16xf32>
    %363 = vector.shape_cast %362 : vector<2x16xf32> to vector<2x1x16xf32>
    %c0_132 = arith.constant 0 : index
    %c3_133 = arith.constant 3 : index
    %c0_134 = arith.constant 0 : index
    %364 = vector.load %arg18[%c0_132, %c3_133, %c0_134] : memref<2x5x16xf32, #tpu.memory_space<vmem>>, vector<2x1x16xf32>
    tpu.vector_store %arg18[%c0_132, %c3_133, %c0_134], %363 {strides = array<i32>} : memref<2x5x16xf32, #tpu.memory_space<vmem>>, vector<2x1x16xf32>,
    %c0_135 = arith.constant 0 : index
    %c3_136 = arith.constant 3 : index
    %365 = vector.load %arg14[%c0_135, %c3_136] : memref<2x128xf32, #tpu.memory_space<vmem>>, vector<2x1xf32>
    tpu.vector_store %arg14[%c0_135, %c3_136], %347 {strides = array<i32>} : memref<2x128xf32, #tpu.memory_space<vmem>>, vector<2x1xf32>,
    %c4 = arith.constant 4 : index
    %c0_137 = arith.constant 0 : index
    %c0_138 = arith.constant 0 : index
    %366 = vector.load %arg0[%c4, %c0_137, %c0_138] : memref<5x2x65xf32, #tpu.memory_space<vmem>>, vector<1x2x65xf32>
    %367 = vector.shape_cast %366 : vector<1x2x65xf32> to vector<2x65xf32>
    %cst_139 = arith.constant dense<0.000000e+00> : vector<2x65xf32>
    %368 = tpu.matmul %344, %5, %cst_139 {dimension_numbers = #tpu.dot_dimension_numbers<[1], [0], [0], [1], [0, 0, 1, 1], [], []>} : vector<2x32xf32>, vector<32x65xf32>, vector<2x65xf32> -> vector<2x65xf32>
    %369 = vector.extract_strided_slice %367 {offsets = [0, 0], sizes = [2, 64], strides = [1, 1]} : vector<2x65xf32> to vector<2x64xf32>
    %370 = vector.extract_strided_slice %368 {offsets = [0, 0], sizes = [2, 64], strides = [1, 1]} : vector<2x65xf32> to vector<2x64xf32>
    %371 = arith.addf %369, %370 : vector<2x64xf32>
    %cst_140 = arith.constant dense<0.000000e+00> : vector<2x64xf32>
    %372 = tpu.matmul %305, %6, %cst_140 {dimension_numbers = #tpu.dot_dimension_numbers<[1], [0], [0], [1], [0, 0, 1, 1], [], []>} : vector<2x16xf32>, vector<16x64xf32>, vector<2x64xf32> -> vector<2x64xf32>
    %373 = arith.addf %371, %372 : vector<2x64xf32>
    %374 = vector.broadcast %10 : vector<1x64xf32> to vector<2x64xf32>
    %375 = arith.addf %373, %374 : vector<2x64xf32>
    %376 = arith.negf %375 : vector<2x64xf32>
    %377 = math.exp %376 : vector<2x64xf32>
    %cst_141 = arith.constant 1.000000e+00 : f32
    %378 = vector.broadcast %cst_141 : f32 to vector<2x64xf32>
    %379 = arith.addf %378, %377 : vector<2x64xf32>
    %380 = arith.divf %378, %379 : vector<2x64xf32>
    %381 = math.tanh %375 : vector<2x64xf32>
    %382 = vector.extract_strided_slice %380 {offsets = [0, 0], sizes = [2, 16], strides = [1, 1]} : vector<2x64xf32> to vector<2x16xf32>
    %383 = vector.extract_strided_slice %380 {offsets = [0, 16], sizes = [2, 16], strides = [1, 1]} : vector<2x64xf32> to vector<2x16xf32>
    %384 = vector.extract_strided_slice %381 {offsets = [0, 32], sizes = [2, 16], strides = [1, 1]} : vector<2x64xf32> to vector<2x16xf32>
    %385 = vector.extract_strided_slice %380 {offsets = [0, 48], sizes = [2, 16], strides = [1, 1]} : vector<2x64xf32> to vector<2x16xf32>
    %386 = arith.mulf %383, %303 : vector<2x16xf32>
    %387 = arith.mulf %382, %384 : vector<2x16xf32>
    %388 = arith.addf %386, %387 : vector<2x16xf32>
    %389 = math.tanh %388 : vector<2x16xf32>
    %390 = arith.mulf %385, %389 : vector<2x16xf32>
    %cst_142 = arith.constant dense<0.000000e+00> : vector<2x49xf32>
    %391 = tpu.matmul %390, %7, %cst_142 {dimension_numbers = #tpu.dot_dimension_numbers<[1], [0], [0], [1], [0, 0, 1, 1], [], []>} : vector<2x16xf32>, vector<16x49xf32>, vector<2x49xf32> -> vector<2x49xf32>
    %cst_143 = arith.constant dense<0.000000e+00> : vector<2x33xf32>
    %392 = tpu.matmul %388, %8, %cst_143 {dimension_numbers = #tpu.dot_dimension_numbers<[1], [0], [0], [1], [0, 0, 1, 1], [], []>} : vector<2x16xf32>, vector<16x33xf32>, vector<2x33xf32> -> vector<2x33xf32>
    %393 = vector.extract_strided_slice %391 {offsets = [0, 0], sizes = [2, 32], strides = [1, 1]} : vector<2x49xf32> to vector<2x32xf32>
    %394 = vector.extract_strided_slice %392 {offsets = [0, 0], sizes = [2, 32], strides = [1, 1]} : vector<2x33xf32> to vector<2x32xf32>
    %395 = arith.addf %393, %394 : vector<2x32xf32>
    %396 = vector.shape_cast %395 : vector<2x32xf32> to vector<2x1x32xf32>
    %397 = vector.broadcast %396 : vector<2x1x32xf32> to vector<2x8x32xf32>
    %398 = arith.addf %1, %397 : vector<2x8x32xf32>
    %399 = vector.shape_cast %348 : vector<2x8xf32> to vector<2x8x1xf32>
    %400 = vector.broadcast %399 : vector<2x8x1xf32> to vector<2x8x32xf32>
    %401 = vector.broadcast %16 : vector<1x1x32xf32> to vector<2x8x32xf32>
    %402 = arith.mulf %400, %401 : vector<2x8x32xf32>
    %403 = arith.addf %398, %402 : vector<2x8x32xf32>
    %404 = vector.broadcast %12 : vector<1x1x32xf32> to vector<2x8x32xf32>
    %405 = arith.addf %403, %404 : vector<2x8x32xf32>
    %406 = math.tanh %405 : vector<2x8x32xf32>
    %407 = vector.broadcast %14 : vector<1x1x32xf32> to vector<2x8x32xf32>
    %408 = arith.mulf %406, %407 : vector<2x8x32xf32>
    %cst_144 = arith.constant dense<0.000000e+00> : vector<2x8xf32>
    %409 = vector.multi_reduction <add>, %408, %cst_144 [2] : vector<2x8x32xf32> to vector<2x8xf32>
    %cst_145 = arith.constant -1.000000e+09 : f32
    %410 = vector.broadcast %cst_145 : f32 to vector<2x8xf32>
    %411 = arith.select %4, %410, %409 : vector<2x8xi1>, vector<2x8xf32>
    %cst_146 = arith.constant dense<0xFF800000> : vector<2xf32>
    %412 = vector.multi_reduction <maximumf>, %411, %cst_146 [1] : vector<2x8xf32> to vector<2xf32>
    %413 = vector.shape_cast %412 : vector<2xf32> to vector<2x1xf32>
    %414 = vector.broadcast %413 : vector<2x1xf32> to vector<2x8xf32>
    %415 = arith.subf %411, %414 : vector<2x8xf32>
    %416 = math.exp %415 : vector<2x8xf32>
    %cst_147 = arith.constant dense<0.000000e+00> : vector<2xf32>
    %417 = vector.multi_reduction <add>, %416, %cst_147 [1] : vector<2x8xf32> to vector<2xf32>
    %418 = vector.shape_cast %417 : vector<2xf32> to vector<2x1xf32>
    %419 = tpu.reciprocal %418 {approx = true} : vector<2x1xf32> -> vector<2x1xf32>
    %420 = arith.mulf %418, %419 : vector<2x1xf32>
    %cst_148 = arith.constant 2.000000e+00 : f32
    %421 = vector.broadcast %cst_148 : f32 to vector<2x1xf32>
    %422 = arith.subf %421, %420 : vector<2x1xf32>
    %423 = arith.mulf %419, %422 : vector<2x1xf32>
    %424 = vector.broadcast %423 : vector<2x1xf32> to vector<2x8xf32>
    %425 = arith.mulf %416, %424 : vector<2x8xf32>
    %426 = vector.shape_cast %425 : vector<2x8xf32> to vector<2x8x1xf32>
    %427 = vector.broadcast %426 : vector<2x8x1xf32> to vector<2x8x32xf32>
    %428 = arith.mulf %427, %0 : vector<2x8x32xf32>
    %cst_149 = arith.constant dense<0.000000e+00> : vector<2x32xf32>
    %429 = vector.multi_reduction <add>, %428, %cst_149 [1] : vector<2x8x32xf32> to vector<2x32xf32>
    %430 = arith.minimumf %425, %348 : vector<2x8xf32>
    %cst_150 = arith.constant dense<0.000000e+00> : vector<2xf32>
    %431 = vector.multi_reduction <add>, %430, %cst_150 [1] : vector<2x8xf32> to vector<2xf32>
    %432 = vector.shape_cast %431 : vector<2xf32> to vector<2x1xf32>
    %433 = vector.shape_cast %425 : vector<2x8xf32> to vector<2x1x8xf32>
    %c0_151 = arith.constant 0 : index
    %c4_152 = arith.constant 4 : index
    %c0_153 = arith.constant 0 : index
    %434 = vector.load %arg15[%c0_151, %c4_152, %c0_153] : memref<2x5x8xf32, #tpu.memory_space<vmem>>, vector<2x1x8xf32>
    tpu.vector_store %arg15[%c0_151, %c4_152, %c0_153], %433 {strides = array<i32>} : memref<2x5x8xf32, #tpu.memory_space<vmem>>, vector<2x1x8xf32>,
    %435 = vector.shape_cast %429 : vector<2x32xf32> to vector<2x1x32xf32>
    %c0_154 = arith.constant 0 : index
    %c4_155 = arith.constant 4 : index
    %c0_156 = arith.constant 0 : index
    %436 = vector.load %arg16[%c0_154, %c4_155, %c0_156] : memref<2x5x32xf32, #tpu.memory_space<vmem>>, vector<2x1x32xf32>
    tpu.vector_store %arg16[%c0_154, %c4_155, %c0_156], %435 {strides = array<i32>} : memref<2x5x32xf32, #tpu.memory_space<vmem>>, vector<2x1x32xf32>,
    %437 = vector.extract_strided_slice %391 {offsets = [0, 32], sizes = [2, 1], strides = [1, 1]} : vector<2x49xf32> to vector<2x1xf32>
    %438 = vector.extract_strided_slice %392 {offsets = [0, 32], sizes = [2, 1], strides = [1, 1]} : vector<2x33xf32> to vector<2x1xf32>
    %439 = arith.addf %437, %438 : vector<2x1xf32>
    %440 = vector.extract_strided_slice %367 {offsets = [0, 64], sizes = [2, 1], strides = [1, 1]} : vector<2x65xf32> to vector<2x1xf32>
    %441 = arith.addf %439, %440 : vector<2x1xf32>
    %442 = vector.extract_strided_slice %368 {offsets = [0, 64], sizes = [2, 1], strides = [1, 1]} : vector<2x65xf32> to vector<2x1xf32>
    %443 = arith.addf %441, %442 : vector<2x1xf32>
    %444 = vector.shape_cast %443 : vector<2x1xf32> to vector<2x1x1xf32>
    %c0_157 = arith.constant 0 : index
    %c4_158 = arith.constant 4 : index
    %c0_159 = arith.constant 0 : index
    %445 = vector.load %arg17[%c0_157, %c4_158, %c0_159] : memref<2x5x1xf32, #tpu.memory_space<vmem>>, vector<2x1x1xf32>
    tpu.vector_store %arg17[%c0_157, %c4_158, %c0_159], %444 {strides = array<i32>} : memref<2x5x1xf32, #tpu.memory_space<vmem>>, vector<2x1x1xf32>,
    %446 = vector.extract_strided_slice %391 {offsets = [0, 33], sizes = [2, 16], strides = [1, 1]} : vector<2x49xf32> to vector<2x16xf32>
    %447 = vector.shape_cast %446 : vector<2x16xf32> to vector<2x1x16xf32>
    %c0_160 = arith.constant 0 : index
    %c4_161 = arith.constant 4 : index
    %c0_162 = arith.constant 0 : index
    %448 = vector.load %arg18[%c0_160, %c4_161, %c0_162] : memref<2x5x16xf32, #tpu.memory_space<vmem>>, vector<2x1x16xf32>
    tpu.vector_store %arg18[%c0_160, %c4_161, %c0_162], %447 {strides = array<i32>} : memref<2x5x16xf32, #tpu.memory_space<vmem>>, vector<2x1x16xf32>,
    %c0_163 = arith.constant 0 : index
    %c4_164 = arith.constant 4 : index
    %449 = vector.load %arg14[%c0_163, %c4_164] : memref<2x128xf32, #tpu.memory_space<vmem>>, vector<2x1xf32>
    tpu.vector_store %arg14[%c0_163, %c4_164], %432 {strides = array<i32>} : memref<2x128xf32, #tpu.memory_space<vmem>>, vector<2x1xf32>,
    %c0_165 = arith.constant 0 : index
    %c0_166 = arith.constant 0 : index
    %c0_167 = arith.constant 0 : index
    %450 = vector.load %arg15[%c0_165, %c0_166, %c0_167] : memref<2x5x8xf32, #tpu.memory_space<vmem>>, vector<2x5x8xf32>
    %c0_168 = arith.constant 0 : index
    %c0_169 = arith.constant 0 : index
    %c0_170 = arith.constant 0 : index
    %451 = vector.load %arg16[%c0_168, %c0_169, %c0_170] : memref<2x5x32xf32, #tpu.memory_space<vmem>>, vector<2x5x32xf32>
    %c0_171 = arith.constant 0 : index
    %c0_172 = arith.constant 0 : index
    %c0_173 = arith.constant 0 : index
    %452 = vector.load %arg17[%c0_171, %c0_172, %c0_173] : memref<2x5x1xf32, #tpu.memory_space<vmem>>, vector<2x5x1xf32>
    %c0_174 = arith.constant 0 : index
    %c0_175 = arith.constant 0 : index
    %c0_176 = arith.constant 0 : index
    %453 = vector.load %arg18[%c0_174, %c0_175, %c0_176] : memref<2x5x16xf32, #tpu.memory_space<vmem>>, vector<2x5x16xf32>
    %c0_177 = arith.constant 0 : index
    %c0_178 = arith.constant 0 : index
    %454 = vector.load %arg10[%c0_177, %c0_178] : memref<32x17xf32, #tpu.memory_space<vmem>>, vector<32x17xf32>
    %455 = vector.shape_cast %454 : vector<32x17xf32> to vector<1x32x17xf32>
    %456 = vector.broadcast %455 : vector<1x32x17xf32> to vector<2x32x17xf32>
    %c0_179 = arith.constant 0 : index
    %c0_180 = arith.constant 0 : index
    %457 = vector.load %arg11[%c0_179, %c0_180] : memref<16x128xf32, #tpu.memory_space<vmem>>, vector<16x128xf32>
    %458 = vector.shape_cast %457 : vector<16x128xf32> to vector<1x16x128xf32>
    %459 = vector.broadcast %458 : vector<1x16x128xf32> to vector<2x16x128xf32>
    "tpu.trace_start"() <{level = 10 : i32, message = "bth,bhn->btn"}> : () -> ()
    %cst_181 = arith.constant dense<0.000000e+00> : vector<2x5x17xf32>
    %460 = tpu.matmul %451, %456, %cst_181 {dimension_numbers = #tpu.dot_dimension_numbers<[2], [1], [1], [2], [0, 0, 0, 1, 1, 2], [0], [0]>} : vector<2x5x32xf32>, vector<2x32x17xf32>, vector<2x5x17xf32> -> vector<2x5x17xf32>
    "tpu.trace_stop"() : () -> ()
    %461 = vector.extract_strided_slice %460 {offsets = [0, 0, 0], sizes = [2, 5, 1], strides = [1, 1, 1]} : vector<2x5x17xf32> to vector<2x5x1xf32>
    %462 = arith.addf %461, %452 : vector<2x5x1xf32>
    %463 = vector.shape_cast %19 : vector<1x1xf32> to vector<1x1x1xf32>
    %464 = vector.broadcast %463 : vector<1x1x1xf32> to vector<2x5x1xf32>
    %465 = arith.addf %462, %464 : vector<2x5x1xf32>
    %466 = arith.negf %465 : vector<2x5x1xf32>
    %467 = math.exp %466 : vector<2x5x1xf32>
    %cst_182 = arith.constant 1.000000e+00 : f32
    %468 = vector.broadcast %cst_182 : f32 to vector<2x5x1xf32>
    %469 = arith.addf %468, %467 : vector<2x5x1xf32>
    %470 = arith.divf %468, %469 : vector<2x5x1xf32>
    %471 = vector.extract_strided_slice %460 {offsets = [0, 0, 1], sizes = [2, 5, 16], strides = [1, 1, 1]} : vector<2x5x17xf32> to vector<2x5x16xf32>
    %472 = arith.addf %471, %453 : vector<2x5x16xf32>
    %473 = vector.shape_cast %17 : vector<1x16xf32> to vector<1x1x16xf32>
    %474 = vector.broadcast %473 : vector<1x1x16xf32> to vector<2x5x16xf32>
    %475 = arith.addf %472, %474 : vector<2x5x16xf32>
    "tpu.trace_start"() <{level = 10 : i32, message = "btd,bdv->btv"}> : () -> ()
    %cst_183 = arith.constant dense<0.000000e+00> : vector<2x5x128xf32>
    %476 = tpu.matmul %475, %459, %cst_183 {dimension_numbers = #tpu.dot_dimension_numbers<[2], [1], [1], [2], [0, 0, 0, 1, 1, 2], [0], [0]>} : vector<2x5x16xf32>, vector<2x16x128xf32>, vector<2x5x128xf32> -> vector<2x5x128xf32>
    "tpu.trace_stop"() : () -> ()
    %477 = vector.shape_cast %18 : vector<1x128xf32> to vector<1x1x128xf32>
    %478 = vector.broadcast %477 : vector<1x1x128xf32> to vector<2x5x128xf32>
    %479 = arith.addf %476, %478 : vector<2x5x128xf32>
    %cst_184 = arith.constant dense<0xFF800000> : vector<2x5xf32>
    %480 = vector.multi_reduction <maximumf>, %479, %cst_184 [2] : vector<2x5x128xf32> to vector<2x5xf32>
    %481 = vector.shape_cast %480 : vector<2x5xf32> to vector<2x5x1xf32>
    %482 = vector.broadcast %481 : vector<2x5x1xf32> to vector<2x5x128xf32>
    %483 = arith.subf %479, %482 : vector<2x5x128xf32>
    %484 = math.exp %483 : vector<2x5x128xf32>
    %cst_185 = arith.constant dense<0.000000e+00> : vector<2x5xf32>
    %485 = vector.multi_reduction <add>, %484, %cst_185 [2] : vector<2x5x128xf32> to vector<2x5xf32>
    %486 = vector.shape_cast %485 : vector<2x5xf32> to vector<2x5x1xf32>
    %487 = tpu.reciprocal %486 {approx = true} : vector<2x5x1xf32> -> vector<2x5x1xf32>
    %488 = arith.mulf %486, %487 : vector<2x5x1xf32>
    %cst_186 = arith.constant 2.000000e+00 : f32
    %489 = vector.broadcast %cst_186 : f32 to vector<2x5x1xf32>
    %490 = arith.subf %489, %488 : vector<2x5x1xf32>
    %491 = arith.mulf %487, %490 : vector<2x5x1xf32>
    %492 = vector.broadcast %491 : vector<2x5x1xf32> to vector<2x5x128xf32>
    %493 = arith.mulf %484, %492 : vector<2x5x128xf32>
    %494 = tpu.iota {dimensions = array<i32: 2>} : vector<2x8x128xi32>
    %c0_187 = arith.constant 0 : index
    %c0_188 = arith.constant 0 : index
    %495 = vector.load %arg4[%c0_187, %c0_188] : memref<2x8xi32, #tpu.memory_space<vmem>>, vector<2x8xi32>
    %496 = vector.shape_cast %495 : vector<2x8xi32> to vector<2x8x1xi32>
    %497 = vector.broadcast %496 : vector<2x8x1xi32> to vector<2x8x128xi32>
    %498 = arith.cmpi eq, %497, %494 : vector<2x8x128xi32>
    %499 = arith.extui %498 : vector<2x8x128xi1> to vector<2x8x128xi32>
    %500 = arith.sitofp %499 : vector<2x8x128xi32> to vector<2x8x128xf32>
    %cst_189 = arith.constant 1.000000e+00 : f32
    %501 = vector.broadcast %cst_189 : f32 to vector<2x5x1xf32>
    %502 = arith.subf %501, %470 : vector<2x5x1xf32>
    %503 = vector.broadcast %502 : vector<2x5x1xf32> to vector<2x5x8xf32>
    %504 = arith.mulf %503, %450 : vector<2x5x8xf32>
    "tpu.trace_start"() <{level = 10 : i32, message = "bts,bsv->btv"}> : () -> ()
    %cst_190 = arith.constant dense<0.000000e+00> : vector<2x5x128xf32>
    %505 = tpu.matmul %504, %500, %cst_190 {dimension_numbers = #tpu.dot_dimension_numbers<[2], [1], [1], [2], [0, 0, 0, 1, 1, 2], [0], [0]>} : vector<2x5x8xf32>, vector<2x8x128xf32>, vector<2x5x128xf32> -> vector<2x5x128xf32>
    "tpu.trace_stop"() : () -> ()
    %506 = vector.broadcast %470 : vector<2x5x1xf32> to vector<2x5x128xf32>
    %507 = arith.mulf %493, %506 : vector<2x5x128xf32>
    %508 = arith.addf %507, %505 : vector<2x5x128xf32>
    %cst_191 = arith.constant 9.99999996E-13 : f32
    %509 = vector.broadcast %cst_191 : f32 to vector<2x5x128xf32>
    %510 = arith.addf %508, %509 : vector<2x5x128xf32>
    %511 = math.log %510 : vector<2x5x128xf32>
    %c0_192 = arith.constant 0 : index
    %c0_193 = arith.constant 0 : index
    %c0_194 = arith.constant 0 : index
    %512 = vector.load %arg13[%c0_192, %c0_193, %c0_194] : memref<2x5x128xf32, #tpu.memory_space<vmem>>, vector<2x5x128xf32>
    tpu.vector_store %arg13[%c0_192, %c0_193, %c0_194], %511 {strides = array<i32>} : memref<2x5x128xf32, #tpu.memory_space<vmem>>, vector<2x5x128xf32>,
    return
  }
}

</mosaic_0001>

<llo_original>
// kernel: pg_decoder_train.1
$region0: #{pg_decoder_train.1}
  #allocation0 [shape = 'u32[]', space=smem, size = 0x4, offset = 0x4, fixed_abs, tag = 'smem constant byte address 0x4 - core index']
  #allocation1 [shape = 'u32[144,128]{1,0:T(1,128)}', space=vmem, size = 0x12000, scoped, tag = 'internal scratch']
  #allocation2 [shape = 'f32[2,5,8]{2,1,0:T(8,128)}', space=vmem, size = 0x2000, scoped, tag = 'scratch operand']
  #allocation3 [shape = 'f32[2,5,32]{2,1,0:T(8,128)}', space=vmem, size = 0x2000, scoped, tag = 'scratch operand']
  #allocation4 [shape = 'f32[2,5,1]{2,1,0:T(8,128)}', space=vmem, size = 0x2000, scoped, tag = 'scratch operand']
  #allocation5 [shape = 'f32[2,5,16]{2,1,0:T(8,128)}', space=vmem, size = 0x2000, scoped, tag = 'scratch operand']
  %s0 = inlined_call_operand.vmem [shape: f32[5,2,65], index: 0, kind: input, shape index: {}]
  %s1 = inlined_call_operand.vmem [shape: f32[2,8,32], index: 1, kind: input, shape index: {}]
  %s2 = inlined_call_operand.vmem [shape: f32[2,8,32], index: 2, kind: input, shape index: {}]
  %s3 = inlined_call_operand.vmem [shape: s32[2,8], index: 3, kind: input, shape index: {}]
  %s4 = inlined_call_operand.vmem [shape: s32[2,8], index: 4, kind: input, shape index: {}]
  %s5 = inlined_call_operand.vmem [shape: f32[2,32], index: 5, kind: input, shape index: {}]
  %s6 = inlined_call_operand.vmem [shape: f32[32,65], index: 6, kind: input, shape index: {}]
  %s7 = inlined_call_operand.vmem [shape: f32[16,64], index: 7, kind: input, shape index: {}]
  %s8 = inlined_call_operand.vmem [shape: f32[16,49], index: 8, kind: input, shape index: {}]
  %s9 = inlined_call_operand.vmem [shape: f32[16,33], index: 9, kind: input, shape index: {}]
  %s10 = inlined_call_operand.vmem [shape: f32[32,17], index: 10, kind: input, shape index: {}]
  %s11 = inlined_call_operand.vmem [shape: f32[16,128], index: 11, kind: input, shape index: {}]
  %s12 = inlined_call_operand.vmem [shape: f32[8,128], index: 12, kind: input, shape index: {}]
  %s13 = inlined_call_operand.vmem [shape: f32[2,5,128], index: 13, kind: output, shape index: {0}]
  %s14 = inlined_call_operand.hbm [shape: f32[2,128], index: 14, kind: output, shape index: {1}]
  %15 = xla_tuple %s13, %s14
  %s16 = sld [smem:[#allocation0]]
  $region70: #{pg_decoder_train.1} parent=0
    _
  %s18 = ssub.s32 1, %s16
  %s19 = scalar_select 0, %s18, %s16
  $region1: #{pg_decoder_train.1} parent=0
    #allocation6 [shape = 'u8[1024]{0}', space=vmem, size = 0x400, scoped, tag = 'output window, operand 1, single buffered']
    #allocation7 [shape = 's32[1]{0}', space=sflag, size = 0x4, scoped, tag = 'scoped memory for pg_decoder_train.1']
    %20 = vsyncpa [#allocation7], 0
    // Predicated region
    $region2: #{pg_decoder_train.1} parent=1 // pred_check
      _
    $region3: #{pg_decoder_train.1} parent=1 // pred_check_branch
      %22 = sbr.rel (0) target = $region5
    $region4: #{pg_decoder_train.1} parent=1 // pred_region
      _
    $region5: #{pg_decoder_train.1} parent=1 // pred_fallthru
      _
    // Predicated region
    $region6: #{pg_decoder_train.1} parent=1 // pred_check
      _
    $region7: #{pg_decoder_train.1} parent=1 // pred_check_branch
      %24 = sbr.rel (0) target = $region9
    $region8: #{pg_decoder_train.1} parent=1 // pred_region
      _
    $region9: #{pg_decoder_train.1} parent=1 // pred_fallthru
      _
    // Predicated region
    $region10: #{pg_decoder_train.1} parent=1 // pred_check
      _
    $region11: #{pg_decoder_train.1} parent=1 // pred_check_branch
      %26 = sbr.rel (0) target = $region13
    $region12: #{pg_decoder_train.1} parent=1 // pred_region
      _
    $region13: #{pg_decoder_train.1} parent=1 // pred_fallthru
      _
    // Predicated region
    $region14: #{pg_decoder_train.1} parent=1 // pred_check
      _
    $region15: #{pg_decoder_train.1} parent=1 // pred_check_branch
      %28 = sbr.rel (0) target = $region17
    $region16: #{pg_decoder_train.1} parent=1 // pred_region
      _
    $region17: #{pg_decoder_train.1} parent=1 // pred_fallthru
      _
    // Predicated region
    $region18: #{pg_decoder_train.1} parent=1 // pred_check
      _
    $region19: #{pg_decoder_train.1} parent=1 // pred_check_branch
      %30 = sbr.rel (0) target = $region21
    $region20: #{pg_decoder_train.1} parent=1 // pred_region
      _
    $region21: #{pg_decoder_train.1} parent=1 // pred_fallthru
      _
    // Predicated region
    $region22: #{pg_decoder_train.1} parent=1 // pred_check
      _
    $region23: #{pg_decoder_train.1} parent=1 // pred_check_branch
      %32 = sbr.rel (0) target = $region25
    $region24: #{pg_decoder_train.1} parent=1 // pred_region
      _
    $region25: #{pg_decoder_train.1} parent=1 // pred_fallthru
      _
    // Predicated region
    $region26: #{pg_decoder_train.1} parent=1 // pred_check
      _
    $region27: #{pg_decoder_train.1} parent=1 // pred_check_branch
      %34 = sbr.rel (0) target = $region29
    $region28: #{pg_decoder_train.1} parent=1 // pred_region
      _
    $region29: #{pg_decoder_train.1} parent=1 // pred_fallthru
      _
    // Predicated region
    $region30: #{pg_decoder_train.1} parent=1 // pred_check
      _
    $region31: #{pg_decoder_train.1} parent=1 // pred_check_branch
      %36 = sbr.rel (0) target = $region33
    $region32: #{pg_decoder_train.1} parent=1 // pred_region
      _
    $region33: #{pg_decoder_train.1} parent=1 // pred_fallthru
      _
    // Predicated region
    $region34: #{pg_decoder_train.1} parent=1 // pred_check
      _
    $region35: #{pg_decoder_train.1} parent=1 // pred_check_branch
      %38 = sbr.rel (0) target = $region37
    $region36: #{pg_decoder_train.1} parent=1 // pred_region
      _
    $region37: #{pg_decoder_train.1} parent=1 // pred_fallthru
      _
    // Predicated region
    $region38: #{pg_decoder_train.1} parent=1 // pred_check
      _
    $region39: #{pg_decoder_train.1} parent=1 // pred_check_branch
      %40 = sbr.rel (0) target = $region41
    $region40: #{pg_decoder_train.1} parent=1 // pred_region
      _
    $region41: #{pg_decoder_train.1} parent=1 // pred_fallthru
      _
    // Predicated region
    $region42: #{pg_decoder_train.1} parent=1 // pred_check
      _
    $region43: #{pg_decoder_train.1} parent=1 // pred_check_branch
      %42 = sbr.rel (0) target = $region45
    $region44: #{pg_decoder_train.1} parent=1 // pred_region
      _
    $region45: #{pg_decoder_train.1} parent=1 // pred_fallthru
      _
    // Predicated region
    $region46: #{pg_decoder_train.1} parent=1 // pred_check
      _
    $region47: #{pg_decoder_train.1} parent=1 // pred_check_branch
      %44 = sbr.rel (0) target = $region49
    $region48: #{pg_decoder_train.1} parent=1 // pred_region
      _
    $region49: #{pg_decoder_train.1} parent=1 // pred_fallthru
      _
    // Predicated region
    $region50: #{pg_decoder_train.1} parent=1 // pred_check
      _
    $region51: #{pg_decoder_train.1} parent=1 // pred_check_branch
      %46 = sbr.rel (0) target = $region53
    $region52: #{pg_decoder_train.1} parent=1 // pred_region
      _
    $region53: #{pg_decoder_train.1} parent=1 // pred_fallthru
      _
    %v47 = vld [vmem:[%s1] sm:$0xff]
    %v48 = vld [vmem:[%s1 + $0x8] sm:$0xff]
    %v49 = vld [vmem:[%s2] sm:$0xff]
    %v50 = vld [vmem:[%s2 + $0x8] sm:$0xff]
    %v51 = vld [vmem:[%s3] sm:$0x3]
    %vm52 = vcmp.eq.s32.totalorder %v51, 0
    %v53 = vld [vmem:[%s6] sm:$0xff]
    %v54 = vld [vmem:[%s6 + $0x8] sm:$0xff]
    %v55 = vld [vmem:[%s6 + $0x10] sm:$0xff]
    %v56 = vld [vmem:[%s6 + $0x18] sm:$0xff]
    %v57 = vld [vmem:[%s7] sm:$0xff]
    %v58 = vld [vmem:[%s7 + $0x8] sm:$0xff]
    %v59 = vld [vmem:[%s8] sm:$0xff]
    %v60 = vld [vmem:[%s8 + $0x8] sm:$0xff]
    %v61 = vld [vmem:[%s9] sm:$0xff]
    %v62 = vld [vmem:[%s9 + $0x8] sm:$0xff]
    %v63 = vld [vmem:[%s12] sm:$0xff]
    %64 = vst [vmem:[#allocation6] sm:$0x3] 0.0
    %v65 = vld [vmem:[%s5] sm:$0x3]
    %v66 = vld [vmem:[%s0] sm:$0x3]
    %vm67 = vcmask 261120
    %v69 = vsel %vm67, 0.0, 0
    %71 = vmatprep.subr.mxu0 0.0
    %72 = vmatpush1.msra.mxu0 0.0
    %73 = vmatprep.subr.mxu0 0.0
    %74 = vmatpush1.msra.mxu0 0.0
    %75 = vmatprep.subr.mxu0 0.0
    %76 = vmatpush1.msra.mxu0 0.0
    %77 = vmatprep.subr.mxu0 0.0
    %78 = vmatpush1.msra.mxu0 0.0
    %79 = vmatprep.subr.mxu0 0.0
    %80 = vmatpush1.msra.mxu0 0.0
    %81 = vmatprep.subr.mxu0 0.0
    %82 = vmatpush1.msra.mxu0 0.0
    %83 = vmatprep.subr.mxu0 0.0
    %84 = vmatpush1.msra.mxu0 0.0
    %85 = vmatprep.subr.mxu0 0.0
    %86 = vmatpush1.msra.mxu0 0.0
    %87 = vmatprep.subr.mxu0 0.0
    %88 = vmatpush1.msra.mxu0 0.0
    %89 = vmatprep.subr.mxu0 0.0
    %90 = vmatpush1.msra.mxu0 0.0
    %91 = vmatprep.subr.mxu0 0.0
    %92 = vmatpush1.msra.mxu0 0.0
    %93 = vmatprep.subr.mxu0 0.0
    %94 = vmatpush1.msra.mxu0 0.0
    %95 = vmatprep.subr.mxu0 0.0
    %96 = vmatpush1.msra.mxu0 %v56
    %97 = vmatprep.subr.mxu0 0.0
    %98 = vmatpush1.msra.mxu0 %v55
    %99 = vmatprep.subr.mxu0 0.0
    %100 = vmatpush1.msra.mxu0 %v54
    %101 = vmatprep.subr.mxu0 0.0
    %102 = vmatpush1.msra.mxu0 %v53
    %103 = vmatprep.subr.mxu0 0.0
    %104 = vmatpush2.msra.mxu0 0.0
    %105 = vmatprep.subr.mxu0 0.0
    %106 = vmatpush2.msra.mxu0 0.0
    %107 = vmatprep.subr.mxu0 0.0
    %108 = vmatpush2.msra.mxu0 0.0
    %109 = vmatprep.subr.mxu0 0.0
    %110 = vmatpush2.msra.mxu0 0.0
    %111 = vmatprep.subr.mxu0 0.0
    %112 = vmatpush2.msra.mxu0 0.0
    %113 = vmatprep.subr.mxu0 0.0
    %114 = vmatpush2.msra.mxu0 0.0
    %115 = vmatprep.subr.mxu0 0.0
    %116 = vmatpush2.msra.mxu0 0.0
    %117 = vmatprep.subr.mxu0 0.0
    %118 = vmatpush2.msra.mxu0 0.0
    %119 = vmatprep.subr.mxu0 0.0
    %120 = vmatpush2.msra.mxu0 0.0
    %121 = vmatprep.subr.mxu0 0.0
    %122 = vmatpush2.msra.mxu0 0.0
    %123 = vmatprep.subr.mxu0 0.0
    %124 = vmatpush2.msra.mxu0 0.0
    %125 = vmatprep.subr.mxu0 0.0
    %126 = vmatpush2.msra.mxu0 0.0
    %127 = vmatprep.subr.mxu0 0.0
    %128 = vmatpush2.msra.mxu0 0.0
    %129 = vmatprep.subr.mxu0 0.0
    %130 = vmatpush2.msra.mxu0 0.0
    %131 = vmatprep.subr.mxu0 0.0
    %132 = vmatpush2.msra.mxu0 0.0
    %133 = vmatprep.subr.mxu0 0.0
    %134 = vmatpush2.msra.mxu0 0.0
    %135 = vmatprep.mubr.f32.mxu0 0.0
    %136 = vmatmul.mubr.f32.gmra.mxu0 %v69
    %v137 = vpop.f32.mrf.mxu0
    %v138 = vadd.f32 0.0, %v137
    %v139 = vpop.f32.mrf.mxu0
    %140 = vdwg.mxu0
    %v141 = vadd.f32 %v66, %v138
    %vm142 = vcmask 130048
    %v144 = vsel %vm142, %v65, 0
    %146 = vmatprep.subr.mxu0 0.0
    %147 = vmatpush1.msra.mxu0 0.0
    %148 = vmatprep.subr.mxu0 0.0
    %149 = vmatpush1.msra.mxu0 0.0
    %150 = vmatprep.subr.mxu0 0.0
    %151 = vmatpush1.msra.mxu0 0.0
    %152 = vmatprep.subr.mxu0 0.0
    %153 = vmatpush1.msra.mxu0 0.0
    %154 = vmatprep.subr.mxu0 0.0
    %155 = vmatpush1.msra.mxu0 0.0
    %156 = vmatprep.subr.mxu0 0.0
    %157 = vmatpush1.msra.mxu0 0.0
    %158 = vmatprep.subr.mxu0 0.0
    %159 = vmatpush1.msra.mxu0 0.0
    %160 = vmatprep.subr.mxu0 0.0
    %161 = vmatpush1.msra.mxu0 0.0
    %162 = vmatprep.subr.mxu0 0.0
    %163 = vmatpush1.msra.mxu0 0.0
    %164 = vmatprep.subr.mxu0 0.0
    %165 = vmatpush1.msra.mxu0 0.0
    %166 = vmatprep.subr.mxu0 0.0
    %167 = vmatpush1.msra.mxu0 0.0
    %168 = vmatprep.subr.mxu0 0.0
    %169 = vmatpush1.msra.mxu0 0.0
    %170 = vmatprep.subr.mxu0 0.0
    %171 = vmatpush1.msra.mxu0 0.0
    %172 = vmatprep.subr.mxu0 0.0
    %173 = vmatpush1.msra.mxu0 0.0
    %174 = vmatprep.subr.mxu0 0.0
    %175 = vmatpush1.msra.mxu0 %v58
    %176 = vmatprep.subr.mxu0 0.0
    %177 = vmatpush1.msra.mxu0 %v57
    %178 = vmatprep.subr.mxu0 0.0
    %179 = vmatpush2.msra.mxu0 0.0
    %180 = vmatprep.subr.mxu0 0.0
    %181 = vmatpush2.msra.mxu0 0.0
    %182 = vmatprep.subr.mxu0 0.0
    %183 = vmatpush2.msra.mxu0 0.0
    %184 = vmatprep.subr.mxu0 0.0
    %185 = vmatpush2.msra.mxu0 0.0
    %186 = vmatprep.subr.mxu0 0.0
    %187 = vmatpush2.msra.mxu0 0.0
    %188 = vmatprep.subr.mxu0 0.0
    %189 = vmatpush2.msra.mxu0 0.0
    %190 = vmatprep.subr.mxu0 0.0
    %191 = vmatpush2.msra.mxu0 0.0
    %192 = vmatprep.subr.mxu0 0.0
    %193 = vmatpush2.msra.mxu0 0.0
    %194 = vmatprep.subr.mxu0 0.0
    %195 = vmatpush2.msra.mxu0 0.0
    %196 = vmatprep.subr.mxu0 0.0
    %197 = vmatpush2.msra.mxu0 0.0
    %198 = vmatprep.subr.mxu0 0.0
    %199 = vmatpush2.msra.mxu0 0.0
    %200 = vmatprep.subr.mxu0 0.0
    %201 = vmatpush2.msra.mxu0 0.0
    %202 = vmatprep.subr.mxu0 0.0
    %203 = vmatpush2.msra.mxu0 0.0
    %204 = vmatprep.subr.mxu0 0.0
    %205 = vmatpush2.msra.mxu0 0.0
    %206 = vmatprep.subr.mxu0 0.0
    %207 = vmatpush2.msra.mxu0 0.0
    %208 = vmatprep.subr.mxu0 0.0
    %209 = vmatpush2.msra.mxu0 0.0
    %210 = vmatprep.mubr.f32.mxu0 0.0
    %211 = vmatmul.mubr.f32.gmra.mxu0 %v144
    %v212 = vpop.f32.mrf.mxu0
    %v213 = vadd.f32 0.0, %v212
    %v214 = vpop.f32.mrf.mxu0
    %215 = vdwg.mxu0
    %v216 = vadd.f32 %v141, %v213
    %v217 = vlaneseq
    %v218 = vshrl.u32 %v217, 7
    %v219 = vsub.s32 0, %v218
    %v220 = vrot.slane %v63, %v219
    %v221 = vadd.f32 %v216, %v220
    %v222 = vxor.u32 %v221, 2147483648
    %v223 = vmul.f32 %v222, 1.442695
    %v224 = vpow.pop %v223
    %v225 = vadd.f32 %v224, 1.0
    %v226 = vrcp.pop %v225
    %v227 = vmul.f32 1.0, %v226
    %v228 = vtanh.pop %v221
    %v229 = vmul.f32 %v227, %v65
    %231 = vrot.lane.b32.xlu0 %v228, 96
    %v232 = vpop.permute.xlu0 %231
    %v234 = vmul.f32 %v227, %v232
    %236 = vrot.lane.b32.xlu0 %v234, 16
    %v237 = vpop.permute.xlu0 %236
    %v239 = vadd.f32 %v229, %v237
    %v240 = vtanh.pop %v239
    %242 = vrot.lane.b32.xlu0 %v240, 32
    %v243 = vpop.permute.xlu0 %242
    %v245 = vmul.f32 %v227, %v243
    %247 = vrot.lane.b32.xlu0 %v245, 80
    %v248 = vpop.permute.xlu0 %247
    %v249 = vsel %vm142, %v248, 0
    %251 = vmatprep.subr.mxu0 0.0
    %252 = vmatpush1.msra.mxu0 0.0
    %253 = vmatprep.subr.mxu0 0.0
    %254 = vmatpush1.msra.mxu0 0.0
    %255 = vmatprep.subr.mxu0 0.0
    %256 = vmatpush1.msra.mxu0 0.0
    %257 = vmatprep.subr.mxu0 0.0
    %258 = vmatpush1.msra.mxu0 0.0
    %259 = vmatprep.subr.mxu0 0.0
    %260 = vmatpush1.msra.mxu0 0.0
    %261 = vmatprep.subr.mxu0 0.0
    %262 = vmatpush1.msra.mxu0 0.0
    %263 = vmatprep.subr.mxu0 0.0
    %264 = vmatpush1.msra.mxu0 0.0
    %265 = vmatprep.subr.mxu0 0.0
    %266 = vmatpush1.msra.mxu0 0.0
    %267 = vmatprep.subr.mxu0 0.0
    %268 = vmatpush1.msra.mxu0 0.0
    %269 = vmatprep.subr.mxu0 0.0
    %270 = vmatpush1.msra.mxu0 0.0
    %271 = vmatprep.subr.mxu0 0.0
    %272 = vmatpush1.msra.mxu0 0.0
    %273 = vmatprep.subr.mxu0 0.0
    %274 = vmatpush1.msra.mxu0 0.0
    %275 = vmatprep.subr.mxu0 0.0
    %276 = vmatpush1.msra.mxu0 0.0
    %277 = vmatprep.subr.mxu0 0.0
    %278 = vmatpush1.msra.mxu0 0.0
    %279 = vmatprep.subr.mxu0 0.0
    %280 = vmatpush1.msra.mxu0 %v60
    %281 = vmatprep.subr.mxu0 0.0
    %282 = vmatpush1.msra.mxu0 %v59
    %283 = vmatprep.subr.mxu0 0.0
    %284 = vmatpush2.msra.mxu0 0.0
    %285 = vmatprep.subr.mxu0 0.0
    %286 = vmatpush2.msra.mxu0 0.0
    %287 = vmatprep.subr.mxu0 0.0
    %288 = vmatpush2.msra.mxu0 0.0
    %289 = vmatprep.subr.mxu0 0.0
    %290 = vmatpush2.msra.mxu0 0.0
    %291 = vmatprep.subr.mxu0 0.0
    %292 = vmatpush2.msra.mxu0 0.0
    %293 = vmatprep.subr.mxu0 0.0
    %294 = vmatpush2.msra.mxu0 0.0
    %295 = vmatprep.subr.mxu0 0.0
    %296 = vmatpush2.msra.mxu0 0.0
    %297 = vmatprep.subr.mxu0 0.0
    %298 = vmatpush2.msra.mxu0 0.0
    %299 = vmatprep.subr.mxu0 0.0
    %300 = vmatpush2.msra.mxu0 0.0
    %301 = vmatprep.subr.mxu0 0.0
    %302 = vmatpush2.msra.mxu0 0.0
    %303 = vmatprep.subr.mxu0 0.0
    %304 = vmatpush2.msra.mxu0 0.0
    %305 = vmatprep.subr.mxu0 0.0
    %306 = vmatpush2.msra.mxu0 0.0
    %307 = vmatprep.subr.mxu0 0.0
    %308 = vmatpush2.msra.mxu0 0.0
    %309 = vmatprep.subr.mxu0 0.0
    %310 = vmatpush2.msra.mxu0 0.0
    %311 = vmatprep.subr.mxu0 0.0
    %312 = vmatpush2.msra.mxu0 0.0
    %313 = vmatprep.subr.mxu0 0.0
    %314 = vmatpush2.msra.mxu0 0.0
    %315 = vmatprep.mubr.f32.mxu0 0.0
    %316 = vmatmul.mubr.f32.gmra.mxu0 %v249
    %v317 = vpop.f32.mrf.mxu0
    %v318 = vadd.f32 0.0, %v317
    %v319 = vpop.f32.mrf.mxu0
    %320 = vdwg.mxu0
    %322 = vrot.lane.b32.xlu0 %v239, 112
    %v323 = vpop.permute.xlu0 %322
    %v324 = vsel %vm142, %v323, 0
    %326 = vmatprep.subr.mxu0 0.0
    %327 = vmatpush1.msra.mxu0 0.0
    %328 = vmatprep.subr.mxu0 0.0
    %329 = vmatpush1.msra.mxu0 0.0
    %330 = vmatprep.subr.mxu0 0.0
    %331 = vmatpush1.msra.mxu0 0.0
    %332 = vmatprep.subr.mxu0 0.0
    %333 = vmatpush1.msra.mxu0 0.0
    %334 = vmatprep.subr.mxu0 0.0
    %335 = vmatpush1.msra.mxu0 0.0
    %336 = vmatprep.subr.mxu0 0.0
    %337 = vmatpush1.msra.mxu0 0.0
    %338 = vmatprep.subr.mxu0 0.0
    %339 = vmatpush1.msra.mxu0 0.0
    %340 = vmatprep.subr.mxu0 0.0
    %341 = vmatpush1.msra.mxu0 0.0
    %342 = vmatprep.subr.mxu0 0.0
    %343 = vmatpush1.msra.mxu0 0.0
    %344 = vmatprep.subr.mxu0 0.0
    %345 = vmatpush1.msra.mxu0 0.0
    %346 = vmatprep.subr.mxu0 0.0
    %347 = vmatpush1.msra.mxu0 0.0
    %348 = vmatprep.subr.mxu0 0.0
    %349 = vmatpush1.msra.mxu0 0.0
    %350 = vmatprep.subr.mxu0 0.0
    %351 = vmatpush1.msra.mxu0 0.0
    %352 = vmatprep.subr.mxu0 0.0
    %353 = vmatpush1.msra.mxu0 0.0
    %354 = vmatprep.subr.mxu0 0.0
    %355 = vmatpush1.msra.mxu0 %v62
    %356 = vmatprep.subr.mxu0 0.0
    %357 = vmatpush1.msra.mxu0 %v61
    %358 = vmatprep.subr.mxu0 0.0
    %359 = vmatpush2.msra.mxu0 0.0
    %360 = vmatprep.subr.mxu0 0.0
    %361 = vmatpush2.msra.mxu0 0.0
    %362 = vmatprep.subr.mxu0 0.0
    %363 = vmatpush2.msra.mxu0 0.0
    %364 = vmatprep.subr.mxu0 0.0
    %365 = vmatpush2.msra.mxu0 0.0
    %366 = vmatprep.subr.mxu0 0.0
    %367 = vmatpush2.msra.mxu0 0.0
    %368 = vmatprep.subr.mxu0 0.0
    %369 = vmatpush2.msra.mxu0 0.0
    %370 = vmatprep.subr.mxu0 0.0
    %371 = vmatpush2.msra.mxu0 0.0
    %372 = vmatprep.subr.mxu0 0.0
    %373 = vmatpush2.msra.mxu0 0.0
    %374 = vmatprep.subr.mxu0 0.0
    %375 = vmatpush2.msra.mxu0 0.0
    %376 = vmatprep.subr.mxu0 0.0
    %377 = vmatpush2.msra.mxu0 0.0
    %378 = vmatprep.subr.mxu0 0.0
    %379 = vmatpush2.msra.mxu0 0.0
    %380 = vmatprep.subr.mxu0 0.0
    %381 = vmatpush2.msra.mxu0 0.0
    %382 = vmatprep.subr.mxu0 0.0
    %383 = vmatpush2.msra.mxu0 0.0
    %384 = vmatprep.subr.mxu0 0.0
    %385 = vmatpush2.msra.mxu0 0.0
    %386 = vmatprep.subr.mxu0 0.0
    %387 = vmatpush2.msra.mxu0 0.0
    %388 = vmatprep.subr.mxu0 0.0
    %389 = vmatpush2.msra.mxu0 0.0
    %390 = vmatprep.mubr.f32.mxu0 0.0
    %391 = vmatmul.mubr.f32.gmra.mxu0 %v324
    %v392 = vpop.f32.mrf.mxu0
    %v393 = vadd.f32 0.0, %v392
    %v394 = vpop.f32.mrf.mxu0
    %395 = vdwg.mxu0
    %v396 = vadd.f32 %v318, %v393
    %v399 = vunpack.c.l.s4 1966171168
    %v400 = vunpack.c.0.s8 %v399
    %v401 = vlaneseq
    %v402 = vshrl.u32 %v401, 7
    %v403 = vsub.s32 %v400, %v402
    %v404 = vrot.slane %v396, %v403
    %v405 = vcombine.high %v404, %v404
    %v407 = vunpack.c.l.s4 1966171168
    %v408 = vunpack.c.0.s8 %v407
    %v409 = vlaneseq
    %v410 = vshrl.u32 %v409, 7
    %v411 = vsub.s32 %v408, %v410
    %v412 = vrot.slane %v404, %v411
    %v414 = vunpack.c.l.s4 1966171168
    %v415 = vunpack.c.0.s8 %v414
    %v416 = vlaneseq
    %v417 = vshrl.u32 %v416, 7
    %v418 = vsub.s32 %v415, %v417
    %v419 = vrot.slane %v405, %v418
    %v420 = vlaneseq
    %v421 = vshrl.u32 %v420, 7
    %v422 = vsub.s32 0, %v421
    %v423 = vrot.slane %v412, %v422
    %v424 = vlaneseq
    %v425 = vshrl.u32 %v424, 7
    %v426 = vsub.s32 0, %v425
    %v427 = vrot.slane %v419, %v426
    %v430 = vadd.f32 %v49, %v423
    %v431 = vadd.f32 %v50, %v427
    %v432 = vlaneseq
    %v433 = vshrl.u32 %v432, 7
    %v434 = vsub.s32 3, %v433
    %v435 = vrot.slane %v63, %v434
    %v436 = vmul.f32 %v435, 0.0
    %v437 = vadd.f32 %v430, %v436
    %v438 = vadd.f32 %v431, %v436
    %v439 = vlaneseq
    %v440 = vshrl.u32 %v439, 7
    %v441 = vsub.s32 1, %v440
    %v442 = vrot.slane %v63, %v441
    %v443 = vadd.f32 %v437, %v442
    %v444 = vadd.f32 %v438, %v442
    %v445 = vtanh.pop %v443
    %v446 = vtanh.pop %v444
    %v447 = vlaneseq
    %v448 = vshrl.u32 %v447, 7
    %v449 = vsub.s32 2, %v448
    %v450 = vrot.slane %v63, %v449
    %v451 = vmul.f32 %v445, %v450
    %v452 = vmul.f32 %v446, %v450
    %v453 = vsel %vm67, %v451, 0.0
    %454 = vadd.xlane.f32.xlu0 %v453
    %v455 = vpop.xlane.xlu0 %454
    %v456 = vsel %vm67, %v452, 0.0
    %457 = vadd.xlane.f32.xlu0 %v456
    %v458 = vpop.xlane.xlu0 %457
    %v461 = vlaneseq
    %v462 = vand.u32 %v461, 127
    %v463 = vlaneseq
    %v464 = vshrl.u32 %v463, 7
    %v465 = vsub.s32 %v462, %v464
    %v466 = vrot.slane %v455, %v465
    %v467 = vlaneseq
    %v468 = vshrl.u32 %v467, 7
    %v469 = vsub.s32 %v462, %v468
    %v470 = vrot.slane %v458, %v469
    %vm471 = vcmask 1041409
    %v472 = vsel %vm471, %v470, %v466
    %v474 = vsel %vm52, -1e+09, %v472
    %vm475 = vcmask 58368
    %v476 = vsel %vm475, %v474, -inf
    %477 = vmax.xlane.f32.xlu0 %v476
    %v478 = vpop.xlane.xlu0 %477
    %v479 = vsub.f32 %v474, %v478
    %v480 = vmul.f32 %v479, 1.442695
    %v481 = vpow.pop %v480
    %v482 = vsel %vm475, %v481, 0.0
    %483 = vadd.xlane.f32.xlu0 %v482
    %v484 = vpop.xlane.xlu0 %483
    %v485 = vrcp.pop %v484
    %v486 = vmul.f32 %v484, %v485
    %v487 = vsub.f32 2.0, %v486
    %v488 = vmul.f32 %v485, %v487
    %v489 = vmul.f32 %v481, %v488
    %v490 = vlaneseq
    %v491 = vshrl.u32 %v490, 7
    %v492 = vsub.s32 0, %v491
    %v493 = vrot.slane %v489, %v492
    %495 = vbcast.lane.b32.xlu0 %v493, 256
    %v496 = vpop.permute.xlu0 %495
    %v497 = vlaneseq
    %v498 = vshrl.u32 %v497, 7
    %v499 = vsub.s32 1, %v498
    %v500 = vrot.slane %v489, %v499
    %502 = vbcast.lane.b32.xlu0 %v500, 256
    %v503 = vpop.permute.xlu0 %502
    %v504 = vmul.f32 %v496, %v47
    %v505 = vmul.f32 %v503, %v48
    %v506 = vsel %vm67, %v504, 0.0
    %v507 = vrot.slane %v506, 4
    %v508 = vadd.f32 %v506, %v507
    %v509 = vrot.slane %v508, 2
    %v510 = vadd.f32 %v508, %v509
    %v511 = vrot.slane %v510, 1
    %v512 = vadd.f32 %v510, %v511
    %v513 = vsel %vm67, %v505, 0.0
    %v514 = vrot.slane %v513, 4
    %v515 = vadd.f32 %v513, %v514
    %v516 = vrot.slane %v515, 2
    %v517 = vadd.f32 %v515, %v516
    %v518 = vrot.slane %v517, 1
    %v519 = vadd.f32 %v517, %v518
    %v520 = vmin.f32 %v489, 0.0
    %v521 = vsel %vm475, %v520, 0.0
    %522 = vadd.xlane.f32.xlu0 %v521
    %v523 = vpop.xlane.xlu0 %522
    %v524 = vadd.f32 %v489, 0.0
    %v527 = vunpack.c.l.s4 1966171168
    %v528 = vunpack.c.0.s8 %v527
    %v529 = vlaneseq
    %v530 = vshrl.u32 %v529, 7
    %v531 = vsub.s32 %v528, %v530
    %v532 = vrot.slane %v489, %v531
    %v533 = vcombine.high %v532, %v532
    %v535 = vunpack.c.l.s4 1966171168
    %v536 = vunpack.c.0.s8 %v535
    %v537 = vlaneseq
    %v538 = vshrl.u32 %v537, 7
    %v539 = vsub.s32 %v536, %v538
    %v540 = vrot.slane %v532, %v539
    %v542 = vunpack.c.l.s4 1966171168
    %v543 = vunpack.c.0.s8 %v542
    %v544 = vlaneseq
    %v545 = vshrl.u32 %v544, 7
    %v546 = vsub.s32 %v543, %v545
    %v547 = vrot.slane %v533, %v546
    %vm550 = vcmask 57344
    %551 = vst.msk [vmem:[#allocation2] sm:$0x1] %vm550, %v540
    %552 = vst.msk [vmem:[#allocation2 + $0x8] sm:$0x1] %vm550, %v547
    %vm553 = vcmask 253952
    %554 = vst.msk [vmem:[#allocation3] sm:$0x1] %vm553, %v512
    %555 = vst.msk [vmem:[#allocation3 + $0x8] sm:$0x1] %vm553, %v519
    %557 = vrot.lane.b32.xlu0 %v66, 96
    %v558 = vpop.permute.xlu0 %557
    %v560 = vadd.f32 %v396, %v558
    %562 = vrot.lane.b32.xlu0 %v138, 96
    %v563 = vpop.permute.xlu0 %562
    %v565 = vadd.f32 %v560, %v563
    %v568 = vunpack.c.l.s4 1966171168
    %v569 = vunpack.c.0.s8 %v568
    %v570 = vlaneseq
    %v571 = vshrl.u32 %v570, 7
    %v572 = vsub.s32 %v569, %v571
    %v573 = vrot.slane %v565, %v572
    %v574 = vcombine.high %v573, %v573
    %v576 = vunpack.c.l.s4 1966171168
    %v577 = vunpack.c.0.s8 %v576
    %v578 = vlaneseq
    %v579 = vshrl.u32 %v578, 7
    %v580 = vsub.s32 %v577, %v579
    %v581 = vrot.slane %v573, %v580
    %v583 = vunpack.c.l.s4 1966171168
    %v584 = vunpack.c.0.s8 %v583
    %v585 = vlaneseq
    %v586 = vshrl.u32 %v585, 7
    %v587 = vsub.s32 %v584, %v586
    %v588 = vrot.slane %v574, %v587
    %v589 = vlaneseq
    %v590 = vshrl.u32 %v589, 7
    %v591 = vsub.s32 0, %v590
    %v592 = vrot.slane %v581, %v591
    %v593 = vlaneseq
    %v594 = vshrl.u32 %v593, 7
    %v595 = vsub.s32 0, %v594
    %v596 = vrot.slane %v588, %v595
    %597 = vrot.lane.b32.xlu0 %v592, 96
    %v598 = vpop.permute.xlu0 %597
    %599 = vrot.lane.b32.xlu0 %v596, 96
    %v600 = vpop.permute.xlu0 %599
    %vm603 = vcmask 0
    %604 = vst.msk [vmem:[#allocation4] sm:$0x1] %vm603, %v598
    %605 = vst.msk [vmem:[#allocation4 + $0x8] sm:$0x1] %vm603, %v600
    %v608 = vunpack.c.l.s4 1966171168
    %v609 = vunpack.c.0.s8 %v608
    %v610 = vlaneseq
    %v611 = vshrl.u32 %v610, 7
    %v612 = vsub.s32 %v609, %v611
    %v613 = vrot.slane %v318, %v612
    %v614 = vcombine.high %v613, %v613
    %v616 = vunpack.c.l.s4 1966171168
    %v617 = vunpack.c.0.s8 %v616
    %v618 = vlaneseq
    %v619 = vshrl.u32 %v618, 7
    %v620 = vsub.s32 %v617, %v619
    %v621 = vrot.slane %v613, %v620
    %v623 = vunpack.c.l.s4 1966171168
    %v624 = vunpack.c.0.s8 %v623
    %v625 = vlaneseq
    %v626 = vshrl.u32 %v625, 7
    %v627 = vsub.s32 %v624, %v626
    %v628 = vrot.slane %v614, %v627
    %v629 = vlaneseq
    %v630 = vshrl.u32 %v629, 7
    %v631 = vsub.s32 0, %v630
    %v632 = vrot.slane %v621, %v631
    %v633 = vlaneseq
    %v634 = vshrl.u32 %v633, 7
    %v635 = vsub.s32 0, %v634
    %v636 = vrot.slane %v628, %v635
    %637 = vrot.lane.b32.xlu0 %v632, 95
    %v638 = vpop.permute.xlu0 %637
    %639 = vrot.lane.b32.xlu0 %v636, 95
    %v640 = vpop.permute.xlu0 %639
    %vm643 = vcmask 122880
    %644 = vst.msk [vmem:[#allocation5] sm:$0x1] %vm643, %v638
    %645 = vst.msk [vmem:[#allocation5 + $0x8] sm:$0x1] %vm643, %v640
    %vm646 = vcmask 1024
    %647 = vst.msk [vmem:[#allocation6] sm:$0x3] %vm646, %v523
    %s648 = scalar_lea.vmem %s0, 2
    %v649 = vld [vmem:[%s648] sm:$0x3]
    %v652 = vsel %vm471, %v519, %v512
    %v653 = vsel %vm67, %v652, 0
    %655 = vmatprep.subr.mxu0 0.0
    %656 = vmatpush1.msra.mxu0 0.0
    %657 = vmatprep.subr.mxu0 0.0
    %658 = vmatpush1.msra.mxu0 0.0
    %659 = vmatprep.subr.mxu0 0.0
    %660 = vmatpush1.msra.mxu0 0.0
    %661 = vmatprep.subr.mxu0 0.0
    %662 = vmatpush1.msra.mxu0 0.0
    %663 = vmatprep.subr.mxu0 0.0
    %664 = vmatpush1.msra.mxu0 0.0
    %665 = vmatprep.subr.mxu0 0.0
    %666 = vmatpush1.msra.mxu0 0.0
    %667 = vmatprep.subr.mxu0 0.0
    %668 = vmatpush1.msra.mxu0 0.0
    %669 = vmatprep.subr.mxu0 0.0
    %670 = vmatpush1.msra.mxu0 0.0
    %671 = vmatprep.subr.mxu0 0.0
    %672 = vmatpush1.msra.mxu0 0.0
    %673 = vmatprep.subr.mxu0 0.0
    %674 = vmatpush1.msra.mxu0 0.0
    %675 = vmatprep.subr.mxu0 0.0
    %676 = vmatpush1.msra.mxu0 0.0
    %677 = vmatprep.subr.mxu0 0.0
    %678 = vmatpush1.msra.mxu0 0.0
    %679 = vmatprep.subr.mxu0 0.0
    %680 = vmatpush1.msra.mxu0 %v56
    %681 = vmatprep.subr.mxu0 0.0
    %682 = vmatpush1.msra.mxu0 %v55
    %683 = vmatprep.subr.mxu0 0.0
    %684 = vmatpush1.msra.mxu0 %v54
    %685 = vmatprep.subr.mxu0 0.0
    %686 = vmatpush1.msra.mxu0 %v53
    %687 = vmatprep.subr.mxu0 0.0
    %688 = vmatpush2.msra.mxu0 0.0
    %689 = vmatprep.subr.mxu0 0.0
    %690 = vmatpush2.msra.mxu0 0.0
    %691 = vmatprep.subr.mxu0 0.0
    %692 = vmatpush2.msra.mxu0 0.0
    %693 = vmatprep.subr.mxu0 0.0
    %694 = vmatpush2.msra.mxu0 0.0
    %695 = vmatprep.subr.mxu0 0.0
    %696 = vmatpush2.msra.mxu0 0.0
    %697 = vmatprep.subr.mxu0 0.0
    %698 = vmatpush2.msra.mxu0 0.0
    %699 = vmatprep.subr.mxu0 0.0
    %700 = vmatpush2.msra.mxu0 0.0
    %701 = vmatprep.subr.mxu0 0.0
    %702 = vmatpush2.msra.mxu0 0.0
    %703 = vmatprep.subr.mxu0 0.0
    %704 = vmatpush2.msra.mxu0 0.0
    %705 = vmatprep.subr.mxu0 0.0
    %706 = vmatpush2.msra.mxu0 0.0
    %707 = vmatprep.subr.mxu0 0.0
    %708 = vmatpush2.msra.mxu0 0.0
    %709 = vmatprep.subr.mxu0 0.0
    %710 = vmatpush2.msra.mxu0 0.0
    %711 = vmatprep.subr.mxu0 0.0
    %712 = vmatpush2.msra.mxu0 0.0
    %713 = vmatprep.subr.mxu0 0.0
    %714 = vmatpush2.msra.mxu0 0.0
    %715 = vmatprep.subr.mxu0 0.0
    %716 = vmatpush2.msra.mxu0 0.0
    %717 = vmatprep.subr.mxu0 0.0
    %718 = vmatpush2.msra.mxu0 0.0
    %719 = vmatprep.mubr.f32.mxu0 0.0
    %720 = vmatmul.mubr.f32.gmra.mxu0 %v653
    %v721 = vpop.f32.mrf.mxu0
    %v722 = vadd.f32 0.0, %v721
    %v723 = vpop.f32.mrf.mxu0
    %724 = vdwg.mxu0
    %v725 = vadd.f32 %v649, %v722
    %726 = vmatprep.subr.mxu0 0.0
    %727 = vmatpush1.msra.mxu0 0.0
    %728 = vmatprep.subr.mxu0 0.0
    %729 = vmatpush1.msra.mxu0 0.0
    %730 = vmatprep.subr.mxu0 0.0
    %731 = vmatpush1.msra.mxu0 0.0
    %732 = vmatprep.subr.mxu0 0.0
    %733 = vmatpush1.msra.mxu0 0.0
    %734 = vmatprep.subr.mxu0 0.0
    %735 = vmatpush1.msra.mxu0 0.0
    %736 = vmatprep.subr.mxu0 0.0
    %737 = vmatpush1.msra.mxu0 0.0
    %738 = vmatprep.subr.mxu0 0.0
    %739 = vmatpush1.msra.mxu0 0.0
    %740 = vmatprep.subr.mxu0 0.0
    %741 = vmatpush1.msra.mxu0 0.0
    %742 = vmatprep.subr.mxu0 0.0
    %743 = vmatpush1.msra.mxu0 0.0
    %744 = vmatprep.subr.mxu0 0.0
    %745 = vmatpush1.msra.mxu0 0.0
    %746 = vmatprep.subr.mxu0 0.0
    %747 = vmatpush1.msra.mxu0 0.0
    %748 = vmatprep.subr.mxu0 0.0
    %749 = vmatpush1.msra.mxu0 0.0
    %750 = vmatprep.subr.mxu0 0.0
    %751 = vmatpush1.msra.mxu0 0.0
    %752 = vmatprep.subr.mxu0 0.0
    %753 = vmatpush1.msra.mxu0 0.0
    %754 = vmatprep.subr.mxu0 0.0
    %755 = vmatpush1.msra.mxu0 %v58
    %756 = vmatprep.subr.mxu0 0.0
    %757 = vmatpush1.msra.mxu0 %v57
    %758 = vmatprep.subr.mxu0 0.0
    %759 = vmatpush2.msra.mxu0 0.0
    %760 = vmatprep.subr.mxu0 0.0
    %761 = vmatpush2.msra.mxu0 0.0
    %762 = vmatprep.subr.mxu0 0.0
    %763 = vmatpush2.msra.mxu0 0.0
    %764 = vmatprep.subr.mxu0 0.0
    %765 = vmatpush2.msra.mxu0 0.0
    %766 = vmatprep.subr.mxu0 0.0
    %767 = vmatpush2.msra.mxu0 0.0
    %768 = vmatprep.subr.mxu0 0.0
    %769 = vmatpush2.msra.mxu0 0.0
    %770 = vmatprep.subr.mxu0 0.0
    %771 = vmatpush2.msra.mxu0 0.0
    %772 = vmatprep.subr.mxu0 0.0
    %773 = vmatpush2.msra.mxu0 0.0
    %774 = vmatprep.subr.mxu0 0.0
    %775 = vmatpush2.msra.mxu0 0.0
    %776 = vmatprep.subr.mxu0 0.0
    %777 = vmatpush2.msra.mxu0 0.0
    %778 = vmatprep.subr.mxu0 0.0
    %779 = vmatpush2.msra.mxu0 0.0
    %780 = vmatprep.subr.mxu0 0.0
    %781 = vmatpush2.msra.mxu0 0.0
    %782 = vmatprep.subr.mxu0 0.0
    %783 = vmatpush2.msra.mxu0 0.0
    %784 = vmatprep.subr.mxu0 0.0
    %785 = vmatpush2.msra.mxu0 0.0
    %786 = vmatprep.subr.mxu0 0.0
    %787 = vmatpush2.msra.mxu0 0.0
    %788 = vmatprep.subr.mxu0 0.0
    %789 = vmatpush2.msra.mxu0 0.0
    %790 = vmatprep.mubr.f32.mxu0 0.0
    %791 = vmatmul.mubr.f32.gmra.mxu0 %v249
    %v792 = vpop.f32.mrf.mxu0
    %v793 = vadd.f32 0.0, %v792
    %v794 = vpop.f32.mrf.mxu0
    %795 = vdwg.mxu0
    %v796 = vadd.f32 %v725, %v793
    %v797 = vadd.f32 %v796, %v220
    %v798 = vxor.u32 %v797, 2147483648
    %v799 = vmul.f32 %v798, 1.442695
    %v800 = vpow.pop %v799
    %v801 = vadd.f32 %v800, 1.0
    %v802 = vrcp.pop %v801
    %v803 = vmul.f32 1.0, %v802
    %v804 = vtanh.pop %v797
    %v805 = vmul.f32 %v803, %v239
    %807 = vrot.lane.b32.xlu0 %v804, 96
    %v808 = vpop.permute.xlu0 %807
    %v810 = vmul.f32 %v803, %v808
    %812 = vrot.lane.b32.xlu0 %v810, 16
    %v813 = vpop.permute.xlu0 %812
    %v815 = vadd.f32 %v805, %v813
    %v816 = vtanh.pop %v815
    %818 = vrot.lane.b32.xlu0 %v816, 32
    %v819 = vpop.permute.xlu0 %818
    %v821 = vmul.f32 %v803, %v819
    %823 = vrot.lane.b32.xlu0 %v821, 80
    %v824 = vpop.permute.xlu0 %823
    %v825 = vsel %vm142, %v824, 0
    %827 = vmatprep.subr.mxu0 0.0
    %828 = vmatpush1.msra.mxu0 0.0
    %829 = vmatprep.subr.mxu0 0.0
    %830 = vmatpush1.msra.mxu0 0.0
    %831 = vmatprep.subr.mxu0 0.0
    %832 = vmatpush1.msra.mxu0 0.0
    %833 = vmatprep.subr.mxu0 0.0
    %834 = vmatpush1.msra.mxu0 0.0
    %835 = vmatprep.subr.mxu0 0.0
    %836 = vmatpush1.msra.mxu0 0.0
    %837 = vmatprep.subr.mxu0 0.0
    %838 = vmatpush1.msra.mxu0 0.0
    %839 = vmatprep.subr.mxu0 0.0
    %840 = vmatpush1.msra.mxu0 0.0
    %841 = vmatprep.subr.mxu0 0.0
    %842 = vmatpush1.msra.mxu0 0.0
    %843 = vmatprep.subr.mxu0 0.0
    %844 = vmatpush1.msra.mxu0 0.0
    %845 = vmatprep.subr.mxu0 0.0
    %846 = vmatpush1.msra.mxu0 0.0
    %847 = vmatprep.subr.mxu0 0.0
    %848 = vmatpush1.msra.mxu0 0.0
    %849 = vmatprep.subr.mxu0 0.0
    %850 = vmatpush1.msra.mxu0 0.0
    %851 = vmatprep.subr.mxu0 0.0
    %852 = vmatpush1.msra.mxu0 0.0
    %853 = vmatprep.subr.mxu0 0.0
    %854 = vmatpush1.msra.mxu0 0.0
    %855 = vmatprep.subr.mxu0 0.0
    %856 = vmatpush1.msra.mxu0 %v60
    %857 = vmatprep.subr.mxu0 0.0
    %858 = vmatpush1.msra.mxu0 %v59
    %859 = vmatprep.subr.mxu0 0.0
    %860 = vmatpush2.msra.mxu0 0.0
    %861 = vmatprep.subr.mxu0 0.0
    %862 = vmatpush2.msra.mxu0 0.0
    %863 = vmatprep.subr.mxu0 0.0
    %864 = vmatpush2.msra.mxu0 0.0
    %865 = vmatprep.subr.mxu0 0.0
    %866 = vmatpush2.msra.mxu0 0.0
    %867 = vmatprep.subr.mxu0 0.0
    %868 = vmatpush2.msra.mxu0 0.0
    %869 = vmatprep.subr.mxu0 0.0
    %870 = vmatpush2.msra.mxu0 0.0
    %871 = vmatprep.subr.mxu0 0.0
    %872 = vmatpush2.msra.mxu0 0.0
    %873 = vmatprep.subr.mxu0 0.0
    %874 = vmatpush2.msra.mxu0 0.0
    %875 = vmatprep.subr.mxu0 0.0
    %876 = vmatpush2.msra.mxu0 0.0
    %877 = vmatprep.subr.mxu0 0.0
    %878 = vmatpush2.msra.mxu0 0.0
    %879 = vmatprep.subr.mxu0 0.0
    %880 = vmatpush2.msra.mxu0 0.0
    %881 = vmatprep.subr.mxu0 0.0
    %882 = vmatpush2.msra.mxu0 0.0
    %883 = vmatprep.subr.mxu0 0.0
    %884 = vmatpush2.msra.mxu0 0.0
    %885 = vmatprep.subr.mxu0 0.0
    %886 = vmatpush2.msra.mxu0 0.0
    %887 = vmatprep.subr.mxu0 0.0
    %888 = vmatpush2.msra.mxu0 0.0
    %889 = vmatprep.subr.mxu0 0.0
    %890 = vmatpush2.msra.mxu0 0.0
    %891 = vmatprep.mubr.f32.mxu0 0.0
    %892 = vmatmul.mubr.f32.gmra.mxu0 %v825
    %v893 = vpop.f32.mrf.mxu0
    %v894 = vadd.f32 0.0, %v893
    %v895 = vpop.f32.mrf.mxu0
    %896 = vdwg.mxu0
    %898 = vrot.lane.b32.xlu0 %v815, 112
    %v899 = vpop.permute.xlu0 %898
    %v900 = vsel %vm142, %v899, 0
    %902 = vmatprep.subr.mxu0 0.0
    %903 = vmatpush1.msra.mxu0 0.0
    %904 = vmatprep.subr.mxu0 0.0
    %905 = vmatpush1.msra.mxu0 0.0
    %906 = vmatprep.subr.mxu0 0.0
    %907 = vmatpush1.msra.mxu0 0.0
    %908 = vmatprep.subr.mxu0 0.0
    %909 = vmatpush1.msra.mxu0 0.0
    %910 = vmatprep.subr.mxu0 0.0
    %911 = vmatpush1.msra.mxu0 0.0
    %912 = vmatprep.subr.mxu0 0.0
    %913 = vmatpush1.msra.mxu0 0.0
    %914 = vmatprep.subr.mxu0 0.0
    %915 = vmatpush1.msra.mxu0 0.0
    %916 = vmatprep.subr.mxu0 0.0
    %917 = vmatpush1.msra.mxu0 0.0
    %918 = vmatprep.subr.mxu0 0.0
    %919 = vmatpush1.msra.mxu0 0.0
    %920 = vmatprep.subr.mxu0 0.0
    %921 = vmatpush1.msra.mxu0 0.0
    %922 = vmatprep.subr.mxu0 0.0
    %923 = vmatpush1.msra.mxu0 0.0
    %924 = vmatprep.subr.mxu0 0.0
    %925 = vmatpush1.msra.mxu0 0.0
    %926 = vmatprep.subr.mxu0 0.0
    %927 = vmatpush1.msra.mxu0 0.0
    %928 = vmatprep.subr.mxu0 0.0
    %929 = vmatpush1.msra.mxu0 0.0
    %930 = vmatprep.subr.mxu0 0.0
    %931 = vmatpush1.msra.mxu0 %v62
    %932 = vmatprep.subr.mxu0 0.0
    %933 = vmatpush1.msra.mxu0 %v61
    %934 = vmatprep.subr.mxu0 0.0
    %935 = vmatpush2.msra.mxu0 0.0
    %936 = vmatprep.subr.mxu0 0.0
    %937 = vmatpush2.msra.mxu0 0.0
    %938 = vmatprep.subr.mxu0 0.0
    %939 = vmatpush2.msra.mxu0 0.0
    %940 = vmatprep.subr.mxu0 0.0
    %941 = vmatpush2.msra.mxu0 0.0
    %942 = vmatprep.subr.mxu0 0.0
    %943 = vmatpush2.msra.mxu0 0.0
    %944 = vmatprep.subr.mxu0 0.0
    %945 = vmatpush2.msra.mxu0 0.0
    %946 = vmatprep.subr.mxu0 0.0
    %947 = vmatpush2.msra.mxu0 0.0
    %948 = vmatprep.subr.mxu0 0.0
    %949 = vmatpush2.msra.mxu0 0.0
    %950 = vmatprep.subr.mxu0 0.0
    %951 = vmatpush2.msra.mxu0 0.0
    %952 = vmatprep.subr.mxu0 0.0
    %953 = vmatpush2.msra.mxu0 0.0
    %954 = vmatprep.subr.mxu0 0.0
    %955 = vmatpush2.msra.mxu0 0.0
    %956 = vmatprep.subr.mxu0 0.0
    %957 = vmatpush2.msra.mxu0 0.0
    %958 = vmatprep.subr.mxu0 0.0
    %959 = vmatpush2.msra.mxu0 0.0
    %960 = vmatprep.subr.mxu0 0.0
    %961 = vmatpush2.msra.mxu0 0.0
    %962 = vmatprep.subr.mxu0 0.0
    %963 = vmatpush2.msra.mxu0 0.0
    %964 = vmatprep.subr.mxu0 0.0
    %965 = vmatpush2.msra.mxu0 0.0
    %966 = vmatprep.mubr.f32.mxu0 0.0
    %967 = vmatmul.mubr.f32.gmra.mxu0 %v900
    %v968 = vpop.f32.mrf.mxu0
    %v969 = vadd.f32 0.0, %v968
    %v970 = vpop.f32.mrf.mxu0
    %971 = vdwg.mxu0
    %v972 = vadd.f32 %v894, %v969
    %v975 = vunpack.c.l.s4 1966171168
    %v976 = vunpack.c.0.s8 %v975
    %v977 = vlaneseq
    %v978 = vshrl.u32 %v977, 7
    %v979 = vsub.s32 %v976, %v978
    %v980 = vrot.slane %v972, %v979
    %v981 = vcombine.high %v980, %v980
    %v983 = vunpack.c.l.s4 1966171168
    %v984 = vunpack.c.0.s8 %v983
    %v985 = vlaneseq
    %v986 = vshrl.u32 %v985, 7
    %v987 = vsub.s32 %v984, %v986
    %v988 = vrot.slane %v980, %v987
    %v990 = vunpack.c.l.s4 1966171168
    %v991 = vunpack.c.0.s8 %v990
    %v992 = vlaneseq
    %v993 = vshrl.u32 %v992, 7
    %v994 = vsub.s32 %v991, %v993
    %v995 = vrot.slane %v981, %v994
    %v996 = vlaneseq
    %v997 = vshrl.u32 %v996, 7
    %v998 = vsub.s32 0, %v997
    %v999 = vrot.slane %v988, %v998
    %v1000 = vlaneseq
    %v1001 = vshrl.u32 %v1000, 7
    %v1002 = vsub.s32 0, %v1001
    %v1003 = vrot.slane %v995, %v1002
    %v1006 = vadd.f32 %v49, %v999
    %v1007 = vadd.f32 %v50, %v1003
    %v1008 = vlaneseq
    %v1009 = vshrl.u32 %v1008, 7
    %v1010 = vsub.s32 0, %v1009
    %v1011 = vrot.slane %v524, %v1010
    %1013 = vbcast.lane.b32.xlu0 %v1011, 256
    %v1014 = vpop.permute.xlu0 %1013
    %v1015 = vlaneseq
    %v1016 = vshrl.u32 %v1015, 7
    %v1017 = vsub.s32 1, %v1016
    %v1018 = vrot.slane %v524, %v1017
    %1020 = vbcast.lane.b32.xlu0 %v1018, 256
    %v1021 = vpop.permute.xlu0 %1020
    %v1022 = vmul.f32 %v1014, %v435
    %v1023 = vmul.f32 %v1021, %v435
    %v1024 = vadd.f32 %v1006, %v1022
    %v1025 = vadd.f32 %v1007, %v1023
    %v1026 = vadd.f32 %v1024, %v442
    %v1027 = vadd.f32 %v1025, %v442
    %v1028 = vtanh.pop %v1026
    %v1029 = vtanh.pop %v1027
    %v1030 = vmul.f32 %v1028, %v450
    %v1031 = vmul.f32 %v1029, %v450
    %v1032 = vsel %vm67, %v1030, 0.0
    %1033 = vadd.xlane.f32.xlu0 %v1032
    %v1034 = vpop.xlane.xlu0 %1033
    %v1035 = vsel %vm67, %v1031, 0.0
    %1036 = vadd.xlane.f32.xlu0 %v1035
    %v1037 = vpop.xlane.xlu0 %1036
    %v1040 = vlaneseq
    %v1041 = vshrl.u32 %v1040, 7
    %v1042 = vsub.s32 %v462, %v1041
    %v1043 = vrot.slane %v1034, %v1042
    %v1044 = vlaneseq
    %v1045 = vshrl.u32 %v1044, 7
    %v1046 = vsub.s32 %v462, %v1045
    %v1047 = vrot.slane %v1037, %v1046
    %v1048 = vsel %vm471, %v1047, %v1043
    %v1050 = vsel %vm52, -1e+09, %v1048
    %v1051 = vsel %vm475, %v1050, -inf
    %1052 = vmax.xlane.f32.xlu0 %v1051
    %v1053 = vpop.xlane.xlu0 %1052
    %v1054 = vsub.f32 %v1050, %v1053
    %v1055 = vmul.f32 %v1054, 1.442695
    %v1056 = vpow.pop %v1055
    %v1057 = vsel %vm475, %v1056, 0.0
    %1058 = vadd.xlane.f32.xlu0 %v1057
    %v1059 = vpop.xlane.xlu0 %1058
    %v1060 = vrcp.pop %v1059
    %v1061 = vmul.f32 %v1059, %v1060
    %v1062 = vsub.f32 2.0, %v1061
    %v1063 = vmul.f32 %v1060, %v1062
    %v1064 = vmul.f32 %v1056, %v1063
    %v1065 = vlaneseq
    %v1066 = vshrl.u32 %v1065, 7
    %v1067 = vsub.s32 0, %v1066
    %v1068 = vrot.slane %v1064, %v1067
    %1070 = vbcast.lane.b32.xlu0 %v1068, 256
    %v1071 = vpop.permute.xlu0 %1070
    %v1072 = vlaneseq
    %v1073 = vshrl.u32 %v1072, 7
    %v1074 = vsub.s32 1, %v1073
    %v1075 = vrot.slane %v1064, %v1074
    %1077 = vbcast.lane.b32.xlu0 %v1075, 256
    %v1078 = vpop.permute.xlu0 %1077
    %v1079 = vmul.f32 %v1071, %v47
    %v1080 = vmul.f32 %v1078, %v48
    %v1081 = vsel %vm67, %v1079, 0.0
    %v1082 = vrot.slane %v1081, 4
    %v1083 = vadd.f32 %v1081, %v1082
    %v1084 = vrot.slane %v1083, 2
    %v1085 = vadd.f32 %v1083, %v1084
    %v1086 = vrot.slane %v1085, 1
    %v1087 = vadd.f32 %v1085, %v1086
    %v1088 = vsel %vm67, %v1080, 0.0
    %v1089 = vrot.slane %v1088, 4
    %v1090 = vadd.f32 %v1088, %v1089
    %v1091 = vrot.slane %v1090, 2
    %v1092 = vadd.f32 %v1090, %v1091
    %v1093 = vrot.slane %v1092, 1
    %v1094 = vadd.f32 %v1092, %v1093
    %v1095 = vmin.f32 %v1064, %v524
    %v1096 = vsel %vm475, %v1095, 0.0
    %1097 = vadd.xlane.f32.xlu0 %v1096
    %v1098 = vpop.xlane.xlu0 %1097
    %v1099 = vadd.f32 %v524, %v1064
    %v1102 = vunpack.c.l.s4 1966171168
    %v1103 = vunpack.c.0.s8 %v1102
    %v1104 = vlaneseq
    %v1105 = vshrl.u32 %v1104, 7
    %v1106 = vsub.s32 %v1103, %v1105
    %v1107 = vrot.slane %v1064, %v1106
    %v1108 = vcombine.high %v1107, %v1107
    %v1110 = vunpack.c.l.s4 1966171168
    %v1111 = vunpack.c.0.s8 %v1110
    %v1112 = vlaneseq
    %v1113 = vshrl.u32 %v1112, 7
    %v1114 = vsub.s32 %v1111, %v1113
    %v1115 = vrot.slane %v1107, %v1114
    %v1117 = vunpack.c.l.s4 1966171168
    %v1118 = vunpack.c.0.s8 %v1117
    %v1119 = vlaneseq
    %v1120 = vshrl.u32 %v1119, 7
    %v1121 = vsub.s32 %v1118, %v1120
    %v1122 = vrot.slane %v1108, %v1121
    %1125 = vst.msk [vmem:[#allocation2 + $0x1] sm:$0x1] %vm550, %v1115
    %1126 = vst.msk [vmem:[#allocation2 + $0x9] sm:$0x1] %vm550, %v1122
    %1127 = vst.msk [vmem:[#allocation3 + $0x1] sm:$0x1] %vm553, %v1087
    %1128 = vst.msk [vmem:[#allocation3 + $0x9] sm:$0x1] %vm553, %v1094
    %1130 = vrot.lane.b32.xlu0 %v649, 96
    %v1131 = vpop.permute.xlu0 %1130
    %v1133 = vadd.f32 %v972, %v1131
    %1135 = vrot.lane.b32.xlu0 %v722, 96
    %v1136 = vpop.permute.xlu0 %1135
    %v1138 = vadd.f32 %v1133, %v1136
    %v1141 = vunpack.c.l.s4 1966171168
    %v1142 = vunpack.c.0.s8 %v1141
    %v1143 = vlaneseq
    %v1144 = vshrl.u32 %v1143, 7
    %v1145 = vsub.s32 %v1142, %v1144
    %v1146 = vrot.slane %v1138, %v1145
    %v1147 = vcombine.high %v1146, %v1146
    %v1149 = vunpack.c.l.s4 1966171168
    %v1150 = vunpack.c.0.s8 %v1149
    %v1151 = vlaneseq
    %v1152 = vshrl.u32 %v1151, 7
    %v1153 = vsub.s32 %v1150, %v1152
    %v1154 = vrot.slane %v1146, %v1153
    %v1156 = vunpack.c.l.s4 1966171168
    %v1157 = vunpack.c.0.s8 %v1156
    %v1158 = vlaneseq
    %v1159 = vshrl.u32 %v1158, 7
    %v1160 = vsub.s32 %v1157, %v1159
    %v1161 = vrot.slane %v1147, %v1160
    %v1162 = vlaneseq
    %v1163 = vshrl.u32 %v1162, 7
    %v1164 = vsub.s32 0, %v1163
    %v1165 = vrot.slane %v1154, %v1164
    %v1166 = vlaneseq
    %v1167 = vshrl.u32 %v1166, 7
    %v1168 = vsub.s32 0, %v1167
    %v1169 = vrot.slane %v1161, %v1168
    %1170 = vrot.lane.b32.xlu0 %v1165, 96
    %v1171 = vpop.permute.xlu0 %1170
    %1172 = vrot.lane.b32.xlu0 %v1169, 96
    %v1173 = vpop.permute.xlu0 %1172
    %1176 = vst.msk [vmem:[#allocation4 + $0x1] sm:$0x1] %vm603, %v1171
    %1177 = vst.msk [vmem:[#allocation4 + $0x9] sm:$0x1] %vm603, %v1173
    %v1180 = vunpack.c.l.s4 1966171168
    %v1181 = vunpack.c.0.s8 %v1180
    %v1182 = vlaneseq
    %v1183 = vshrl.u32 %v1182, 7
    %v1184 = vsub.s32 %v1181, %v1183
    %v1185 = vrot.slane %v894, %v1184
    %v1186 = vcombine.high %v1185, %v1185
    %v1188 = vunpack.c.l.s4 1966171168
    %v1189 = vunpack.c.0.s8 %v1188
    %v1190 = vlaneseq
    %v1191 = vshrl.u32 %v1190, 7
    %v1192 = vsub.s32 %v1189, %v1191
    %v1193 = vrot.slane %v1185, %v1192
    %v1195 = vunpack.c.l.s4 1966171168
    %v1196 = vunpack.c.0.s8 %v1195
    %v1197 = vlaneseq
    %v1198 = vshrl.u32 %v1197, 7
    %v1199 = vsub.s32 %v1196, %v1198
    %v1200 = vrot.slane %v1186, %v1199
    %v1201 = vlaneseq
    %v1202 = vshrl.u32 %v1201, 7
    %v1203 = vsub.s32 0, %v1202
    %v1204 = vrot.slane %v1193, %v1203
    %v1205 = vlaneseq
    %v1206 = vshrl.u32 %v1205, 7
    %v1207 = vsub.s32 0, %v1206
    %v1208 = vrot.slane %v1200, %v1207
    %1209 = vrot.lane.b32.xlu0 %v1204, 95
    %v1210 = vpop.permute.xlu0 %1209
    %1211 = vrot.lane.b32.xlu0 %v1208, 95
    %v1212 = vpop.permute.xlu0 %1211
    %1215 = vst.msk [vmem:[#allocation5 + $0x1] sm:$0x1] %vm643, %v1210
    %1216 = vst.msk [vmem:[#allocation5 + $0x9] sm:$0x1] %vm643, %v1212
    %vm1217 = vcmask 9224
    %1218 = vst.msk [vmem:[#allocation6] sm:$0x3] %vm1217, %v1098
    %s1219 = scalar_lea.vmem %s0, 4
    %v1220 = vld [vmem:[%s1219] sm:$0x3]
    %v1223 = vsel %vm471, %v1094, %v1087
    %v1224 = vsel %vm67, %v1223, 0
    %1226 = vmatprep.subr.mxu0 0.0
    %1227 = vmatpush1.msra.mxu0 0.0
    %1228 = vmatprep.subr.mxu0 0.0
    %1229 = vmatpush1.msra.mxu0 0.0
    %1230 = vmatprep.subr.mxu0 0.0
    %1231 = vmatpush1.msra.mxu0 0.0
    %1232 = vmatprep.subr.mxu0 0.0
    %1233 = vmatpush1.msra.mxu0 0.0
    %1234 = vmatprep.subr.mxu0 0.0
    %1235 = vmatpush1.msra.mxu0 0.0
    %1236 = vmatprep.subr.mxu0 0.0
    %1237 = vmatpush1.msra.mxu0 0.0
    %1238 = vmatprep.subr.mxu0 0.0
    %1239 = vmatpush1.msra.mxu0 0.0
    %1240 = vmatprep.subr.mxu0 0.0
    %1241 = vmatpush1.msra.mxu0 0.0
    %1242 = vmatprep.subr.mxu0 0.0
    %1243 = vmatpush1.msra.mxu0 0.0
    %1244 = vmatprep.subr.mxu0 0.0
    %1245 = vmatpush1.msra.mxu0 0.0
    %1246 = vmatprep.subr.mxu0 0.0
    %1247 = vmatpush1.msra.mxu0 0.0
    %1248 = vmatprep.subr.mxu0 0.0
    %1249 = vmatpush1.msra.mxu0 0.0
    %1250 = vmatprep.subr.mxu0 0.0
    %1251 = vmatpush1.msra.mxu0 %v56
    %1252 = vmatprep.subr.mxu0 0.0
    %1253 = vmatpush1.msra.mxu0 %v55
    %1254 = vmatprep.subr.mxu0 0.0
    %1255 = vmatpush1.msra.mxu0 %v54
    %1256 = vmatprep.subr.mxu0 0.0
    %1257 = vmatpush1.msra.mxu0 %v53
    %1258 = vmatprep.subr.mxu0 0.0
    %1259 = vmatpush2.msra.mxu0 0.0
    %1260 = vmatprep.subr.mxu0 0.0
    %1261 = vmatpush2.msra.mxu0 0.0
    %1262 = vmatprep.subr.mxu0 0.0
    %1263 = vmatpush2.msra.mxu0 0.0
    %1264 = vmatprep.subr.mxu0 0.0
    %1265 = vmatpush2.msra.mxu0 0.0
    %1266 = vmatprep.subr.mxu0 0.0
    %1267 = vmatpush2.msra.mxu0 0.0
    %1268 = vmatprep.subr.mxu0 0.0
    %1269 = vmatpush2.msra.mxu0 0.0
    %1270 = vmatprep.subr.mxu0 0.0
    %1271 = vmatpush2.msra.mxu0 0.0
    %1272 = vmatprep.subr.mxu0 0.0
    %1273 = vmatpush2.msra.mxu0 0.0
    %1274 = vmatprep.subr.mxu0 0.0
    %1275 = vmatpush2.msra.mxu0 0.0
    %1276 = vmatprep.subr.mxu0 0.0
    %1277 = vmatpush2.msra.mxu0 0.0
    %1278 = vmatprep.subr.mxu0 0.0
    %1279 = vmatpush2.msra.mxu0 0.0
    %1280 = vmatprep.subr.mxu0 0.0
    %1281 = vmatpush2.msra.mxu0 0.0
    %1282 = vmatprep.subr.mxu0 0.0
    %1283 = vmatpush2.msra.mxu0 0.0
    %1284 = vmatprep.subr.mxu0 0.0
    %1285 = vmatpush2.msra.mxu0 0.0
    %1286 = vmatprep.subr.mxu0 0.0
    %1287 = vmatpush2.msra.mxu0 0.0
    %1288 = vmatprep.subr.mxu0 0.0
    %1289 = vmatpush2.msra.mxu0 0.0
    %1290 = vmatprep.mubr.f32.mxu0 0.0
    %1291 = vmatmul.mubr.f32.gmra.mxu0 %v1224
    %v1292 = vpop.f32.mrf.mxu0
    %v1293 = vadd.f32 0.0, %v1292
    %v1294 = vpop.f32.mrf.mxu0
    %1295 = vdwg.mxu0
    %v1296 = vadd.f32 %v1220, %v1293
    %1297 = vmatprep.subr.mxu0 0.0
    %1298 = vmatpush1.msra.mxu0 0.0
    %1299 = vmatprep.subr.mxu0 0.0
    %1300 = vmatpush1.msra.mxu0 0.0
    %1301 = vmatprep.subr.mxu0 0.0
    %1302 = vmatpush1.msra.mxu0 0.0
    %1303 = vmatprep.subr.mxu0 0.0
    %1304 = vmatpush1.msra.mxu0 0.0
    %1305 = vmatprep.subr.mxu0 0.0
    %1306 = vmatpush1.msra.mxu0 0.0
    %1307 = vmatprep.subr.mxu0 0.0
    %1308 = vmatpush1.msra.mxu0 0.0
    %1309 = vmatprep.subr.mxu0 0.0
    %1310 = vmatpush1.msra.mxu0 0.0
    %1311 = vmatprep.subr.mxu0 0.0
    %1312 = vmatpush1.msra.mxu0 0.0
    %1313 = vmatprep.subr.mxu0 0.0
    %1314 = vmatpush1.msra.mxu0 0.0
    %1315 = vmatprep.subr.mxu0 0.0
    %1316 = vmatpush1.msra.mxu0 0.0
    %1317 = vmatprep.subr.mxu0 0.0
    %1318 = vmatpush1.msra.mxu0 0.0
    %1319 = vmatprep.subr.mxu0 0.0
    %1320 = vmatpush1.msra.mxu0 0.0
    %1321 = vmatprep.subr.mxu0 0.0
    %1322 = vmatpush1.msra.mxu0 0.0
    %1323 = vmatprep.subr.mxu0 0.0
    %1324 = vmatpush1.msra.mxu0 0.0
    %1325 = vmatprep.subr.mxu0 0.0
    %1326 = vmatpush1.msra.mxu0 %v58
    %1327 = vmatprep.subr.mxu0 0.0
    %1328 = vmatpush1.msra.mxu0 %v57
    %1329 = vmatprep.subr.mxu0 0.0
    %1330 = vmatpush2.msra.mxu0 0.0
    %1331 = vmatprep.subr.mxu0 0.0
    %1332 = vmatpush2.msra.mxu0 0.0
    %1333 = vmatprep.subr.mxu0 0.0
    %1334 = vmatpush2.msra.mxu0 0.0
    %1335 = vmatprep.subr.mxu0 0.0
    %1336 = vmatpush2.msra.mxu0 0.0
    %1337 = vmatprep.subr.mxu0 0.0
    %1338 = vmatpush2.msra.mxu0 0.0
    %1339 = vmatprep.subr.mxu0 0.0
    %1340 = vmatpush2.msra.mxu0 0.0
    %1341 = vmatprep.subr.mxu0 0.0
    %1342 = vmatpush2.msra.mxu0 0.0
    %1343 = vmatprep.subr.mxu0 0.0
    %1344 = vmatpush2.msra.mxu0 0.0
    %1345 = vmatprep.subr.mxu0 0.0
    %1346 = vmatpush2.msra.mxu0 0.0
    %1347 = vmatprep.subr.mxu0 0.0
    %1348 = vmatpush2.msra.mxu0 0.0
    %1349 = vmatprep.subr.mxu0 0.0
    %1350 = vmatpush2.msra.mxu0 0.0
    %1351 = vmatprep.subr.mxu0 0.0
    %1352 = vmatpush2.msra.mxu0 0.0
    %1353 = vmatprep.subr.mxu0 0.0
    %1354 = vmatpush2.msra.mxu0 0.0
    %1355 = vmatprep.subr.mxu0 0.0
    %1356 = vmatpush2.msra.mxu0 0.0
    %1357 = vmatprep.subr.mxu0 0.0
    %1358 = vmatpush2.msra.mxu0 0.0
    %1359 = vmatprep.subr.mxu0 0.0
    %1360 = vmatpush2.msra.mxu0 0.0
    %1361 = vmatprep.mubr.f32.mxu0 0.0
    %1362 = vmatmul.mubr.f32.gmra.mxu0 %v825
    %v1363 = vpop.f32.mrf.mxu0
    %v1364 = vadd.f32 0.0, %v1363
    %v1365 = vpop.f32.mrf.mxu0
    %1366 = vdwg.mxu0
    %v1367 = vadd.f32 %v1296, %v1364
    %v1368 = vadd.f32 %v1367, %v220
    %v1369 = vxor.u32 %v1368, 2147483648
    %v1370 = vmul.f32 %v1369, 1.442695
    %v1371 = vpow.pop %v1370
    %v1372 = vadd.f32 %v1371, 1.0
    %v1373 = vrcp.pop %v1372
    %v1374 = vmul.f32 1.0, %v1373
    %v1375 = vtanh.pop %v1368
    %v1376 = vmul.f32 %v1374, %v815
    %1378 = vrot.lane.b32.xlu0 %v1375, 96
    %v1379 = vpop.permute.xlu0 %1378
    %v1381 = vmul.f32 %v1374, %v1379
    %1383 = vrot.lane.b32.xlu0 %v1381, 16
    %v1384 = vpop.permute.xlu0 %1383
    %v1386 = vadd.f32 %v1376, %v1384
    %v1387 = vtanh.pop %v1386
    %1389 = vrot.lane.b32.xlu0 %v1387, 32
    %v1390 = vpop.permute.xlu0 %1389
    %v1392 = vmul.f32 %v1374, %v1390
    %1394 = vrot.lane.b32.xlu0 %v1392, 80
    %v1395 = vpop.permute.xlu0 %1394
    %v1396 = vsel %vm142, %v1395, 0
    %1398 = vmatprep.subr.mxu0 0.0
    %1399 = vmatpush1.msra.mxu0 0.0
    %1400 = vmatprep.subr.mxu0 0.0
    %1401 = vmatpush1.msra.mxu0 0.0
    %1402 = vmatprep.subr.mxu0 0.0
    %1403 = vmatpush1.msra.mxu0 0.0
    %1404 = vmatprep.subr.mxu0 0.0
    %1405 = vmatpush1.msra.mxu0 0.0
    %1406 = vmatprep.subr.mxu0 0.0
    %1407 = vmatpush1.msra.mxu0 0.0
    %1408 = vmatprep.subr.mxu0 0.0
    %1409 = vmatpush1.msra.mxu0 0.0
    %1410 = vmatprep.subr.mxu0 0.0
    %1411 = vmatpush1.msra.mxu0 0.0
    %1412 = vmatprep.subr.mxu0 0.0
    %1413 = vmatpush1.msra.mxu0 0.0
    %1414 = vmatprep.subr.mxu0 0.0
    %1415 = vmatpush1.msra.mxu0 0.0
    %1416 = vmatprep.subr.mxu0 0.0
    %1417 = vmatpush1.msra.mxu0 0.0
    %1418 = vmatprep.subr.mxu0 0.0
    %1419 = vmatpush1.msra.mxu0 0.0
    %1420 = vmatprep.subr.mxu0 0.0
    %1421 = vmatpush1.msra.mxu0 0.0
    %1422 = vmatprep.subr.mxu0 0.0
    %1423 = vmatpush1.msra.mxu0 0.0
    %1424 = vmatprep.subr.mxu0 0.0
    %1425 = vmatpush1.msra.mxu0 0.0
    %1426 = vmatprep.subr.mxu0 0.0
    %1427 = vmatpush1.msra.mxu0 %v60
    %1428 = vmatprep.subr.mxu0 0.0
    %1429 = vmatpush1.msra.mxu0 %v59
    %1430 = vmatprep.subr.mxu0 0.0
    %1431 = vmatpush2.msra.mxu0 0.0
    %1432 = vmatprep.subr.mxu0 0.0
    %1433 = vmatpush2.msra.mxu0 0.0
    %1434 = vmatprep.subr.mxu0 0.0
    %1435 = vmatpush2.msra.mxu0 0.0
    %1436 = vmatprep.subr.mxu0 0.0
    %1437 = vmatpush2.msra.mxu0 0.0
    %1438 = vmatprep.subr.mxu0 0.0
    %1439 = vmatpush2.msra.mxu0 0.0
    %1440 = vmatprep.subr.mxu0 0.0
    %1441 = vmatpush2.msra.mxu0 0.0
    %1442 = vmatprep.subr.mxu0 0.0
    %1443 = vmatpush2.msra.mxu0 0.0
    %1444 = vmatprep.subr.mxu0 0.0
    %1445 = vmatpush2.msra.mxu0 0.0
    %1446 = vmatprep.subr.mxu0 0.0
    %1447 = vmatpush2.msra.mxu0 0.0
    %1448 = vmatprep.subr.mxu0 0.0
    %1449 = vmatpush2.msra.mxu0 0.0
    %1450 = vmatprep.subr.mxu0 0.0
    %1451 = vmatpush2.msra.mxu0 0.0
    %1452 = vmatprep.subr.mxu0 0.0
    %1453 = vmatpush2.msra.mxu0 0.0
    %1454 = vmatprep.subr.mxu0 0.0
    %1455 = vmatpush2.msra.mxu0 0.0
    %1456 = vmatprep.subr.mxu0 0.0
    %1457 = vmatpush2.msra.mxu0 0.0
    %1458 = vmatprep.subr.mxu0 0.0
    %1459 = vmatpush2.msra.mxu0 0.0
    %1460 = vmatprep.subr.mxu0 0.0
    %1461 = vmatpush2.msra.mxu0 0.0
    %1462 = vmatprep.mubr.f32.mxu0 0.0
    %1463 = vmatmul.mubr.f32.gmra.mxu0 %v1396
    %v1464 = vpop.f32.mrf.mxu0
    %v1465 = vadd.f32 0.0, %v1464
    %v1466 = vpop.f32.mrf.mxu0
    %1467 = vdwg.mxu0
    %1469 = vrot.lane.b32.xlu0 %v1386, 112
    %v1470 = vpop.permute.xlu0 %1469
    %v1471 = vsel %vm142, %v1470, 0
    %1473 = vmatprep.subr.mxu0 0.0
    %1474 = vmatpush1.msra.mxu0 0.0
    %1475 = vmatprep.subr.mxu0 0.0
    %1476 = vmatpush1.msra.mxu0 0.0
    %1477 = vmatprep.subr.mxu0 0.0
    %1478 = vmatpush1.msra.mxu0 0.0
    %1479 = vmatprep.subr.mxu0 0.0
    %1480 = vmatpush1.msra.mxu0 0.0
    %1481 = vmatprep.subr.mxu0 0.0
    %1482 = vmatpush1.msra.mxu0 0.0
    %1483 = vmatprep.subr.mxu0 0.0
    %1484 = vmatpush1.msra.mxu0 0.0
    %1485 = vmatprep.subr.mxu0 0.0
    %1486 = vmatpush1.msra.mxu0 0.0
    %1487 = vmatprep.subr.mxu0 0.0
    %1488 = vmatpush1.msra.mxu0 0.0
    %1489 = vmatprep.subr.mxu0 0.0
    %1490 = vmatpush1.msra.mxu0 0.0
    %1491 = vmatprep.subr.mxu0 0.0
    %1492 = vmatpush1.msra.mxu0 0.0
    %1493 = vmatprep.subr.mxu0 0.0
    %1494 = vmatpush1.msra.mxu0 0.0
    %1495 = vmatprep.subr.mxu0 0.0
    %1496 = vmatpush1.msra.mxu0 0.0
    %1497 = vmatprep.subr.mxu0 0.0
    %1498 = vmatpush1.msra.mxu0 0.0
    %1499 = vmatprep.subr.mxu0 0.0
    %1500 = vmatpush1.msra.mxu0 0.0
    %1501 = vmatprep.subr.mxu0 0.0
    %1502 = vmatpush1.msra.mxu0 %v62
    %1503 = vmatprep.subr.mxu0 0.0
    %1504 = vmatpush1.msra.mxu0 %v61
    %1505 = vmatprep.subr.mxu0 0.0
    %1506 = vmatpush2.msra.mxu0 0.0
    %1507 = vmatprep.subr.mxu0 0.0
    %1508 = vmatpush2.msra.mxu0 0.0
    %1509 = vmatprep.subr.mxu0 0.0
    %1510 = vmatpush2.msra.mxu0 0.0
    %1511 = vmatprep.subr.mxu0 0.0
    %1512 = vmatpush2.msra.mxu0 0.0
    %1513 = vmatprep.subr.mxu0 0.0
    %1514 = vmatpush2.msra.mxu0 0.0
    %1515 = vmatprep.subr.mxu0 0.0
    %1516 = vmatpush2.msra.mxu0 0.0
    %1517 = vmatprep.subr.mxu0 0.0
    %1518 = vmatpush2.msra.mxu0 0.0
    %1519 = vmatprep.subr.mxu0 0.0
    %1520 = vmatpush2.msra.mxu0 0.0
    %1521 = vmatprep.subr.mxu0 0.0
    %1522 = vmatpush2.msra.mxu0 0.0
    %1523 = vmatprep.subr.mxu0 0.0
    %1524 = vmatpush2.msra.mxu0 0.0
    %1525 = vmatprep.subr.mxu0 0.0
    %1526 = vmatpush2.msra.mxu0 0.0
    %1527 = vmatprep.subr.mxu0 0.0
    %1528 = vmatpush2.msra.mxu0 0.0
    %1529 = vmatprep.subr.mxu0 0.0
    %1530 = vmatpush2.msra.mxu0 0.0
    %1531 = vmatprep.subr.mxu0 0.0
    %1532 = vmatpush2.msra.mxu0 0.0
    %1533 = vmatprep.subr.mxu0 0.0
    %1534 = vmatpush2.msra.mxu0 0.0
    %1535 = vmatprep.subr.mxu0 0.0
    %1536 = vmatpush2.msra.mxu0 0.0
    %1537 = vmatprep.mubr.f32.mxu0 0.0
    %1538 = vmatmul.mubr.f32.gmra.mxu0 %v1471
    %v1539 = vpop.f32.mrf.mxu0
    %v1540 = vadd.f32 0.0, %v1539
    %v1541 = vpop.f32.mrf.mxu0
    %1542 = vdwg.mxu0
    %v1543 = vadd.f32 %v1465, %v1540
    %v1546 = vunpack.c.l.s4 1966171168
    %v1547 = vunpack.c.0.s8 %v1546
    %v1548 = vlaneseq
    %v1549 = vshrl.u32 %v1548, 7
    %v1550 = vsub.s32 %v1547, %v1549
    %v1551 = vrot.slane %v1543, %v1550
    %v1552 = vcombine.high %v1551, %v1551
    %v1554 = vunpack.c.l.s4 1966171168
    %v1555 = vunpack.c.0.s8 %v1554
    %v1556 = vlaneseq
    %v1557 = vshrl.u32 %v1556, 7
    %v1558 = vsub.s32 %v1555, %v1557
    %v1559 = vrot.slane %v1551, %v1558
    %v1561 = vunpack.c.l.s4 1966171168
    %v1562 = vunpack.c.0.s8 %v1561
    %v1563 = vlaneseq
    %v1564 = vshrl.u32 %v1563, 7
    %v1565 = vsub.s32 %v1562, %v1564
    %v1566 = vrot.slane %v1552, %v1565
    %v1567 = vlaneseq
    %v1568 = vshrl.u32 %v1567, 7
    %v1569 = vsub.s32 0, %v1568
    %v1570 = vrot.slane %v1559, %v1569
    %v1571 = vlaneseq
    %v1572 = vshrl.u32 %v1571, 7
    %v1573 = vsub.s32 0, %v1572
    %v1574 = vrot.slane %v1566, %v1573
    %v1577 = vadd.f32 %v49, %v1570
    %v1578 = vadd.f32 %v50, %v1574
    %v1579 = vlaneseq
    %v1580 = vshrl.u32 %v1579, 7
    %v1581 = vsub.s32 0, %v1580
    %v1582 = vrot.slane %v1099, %v1581
    %1584 = vbcast.lane.b32.xlu0 %v1582, 256
    %v1585 = vpop.permute.xlu0 %1584
    %v1586 = vlaneseq
    %v1587 = vshrl.u32 %v1586, 7
    %v1588 = vsub.s32 1, %v1587
    %v1589 = vrot.slane %v1099, %v1588
    %1591 = vbcast.lane.b32.xlu0 %v1589, 256
    %v1592 = vpop.permute.xlu0 %1591
    %v1593 = vmul.f32 %v1585, %v435
    %v1594 = vmul.f32 %v1592, %v435
    %v1595 = vadd.f32 %v1577, %v1593
    %v1596 = vadd.f32 %v1578, %v1594
    %v1597 = vadd.f32 %v1595, %v442
    %v1598 = vadd.f32 %v1596, %v442
    %v1599 = vtanh.pop %v1597
    %v1600 = vtanh.pop %v1598
    %v1601 = vmul.f32 %v1599, %v450
    %v1602 = vmul.f32 %v1600, %v450
    %v1603 = vsel %vm67, %v1601, 0.0
    %1604 = vadd.xlane.f32.xlu0 %v1603
    %v1605 = vpop.xlane.xlu0 %1604
    %v1606 = vsel %vm67, %v1602, 0.0
    %1607 = vadd.xlane.f32.xlu0 %v1606
    %v1608 = vpop.xlane.xlu0 %1607
    %v1611 = vlaneseq
    %v1612 = vshrl.u32 %v1611, 7
    %v1613 = vsub.s32 %v462, %v1612
    %v1614 = vrot.slane %v1605, %v1613
    %v1615 = vlaneseq
    %v1616 = vshrl.u32 %v1615, 7
    %v1617 = vsub.s32 %v462, %v1616
    %v1618 = vrot.slane %v1608, %v1617
    %v1619 = vsel %vm471, %v1618, %v1614
    %v1621 = vsel %vm52, -1e+09, %v1619
    %v1622 = vsel %vm475, %v1621, -inf
    %1623 = vmax.xlane.f32.xlu0 %v1622
    %v1624 = vpop.xlane.xlu0 %1623
    %v1625 = vsub.f32 %v1621, %v1624
    %v1626 = vmul.f32 %v1625, 1.442695
    %v1627 = vpow.pop %v1626
    %v1628 = vsel %vm475, %v1627, 0.0
    %1629 = vadd.xlane.f32.xlu0 %v1628
    %v1630 = vpop.xlane.xlu0 %1629
    %v1631 = vrcp.pop %v1630
    %v1632 = vmul.f32 %v1630, %v1631
    %v1633 = vsub.f32 2.0, %v1632
    %v1634 = vmul.f32 %v1631, %v1633
    %v1635 = vmul.f32 %v1627, %v1634
    %v1636 = vlaneseq
    %v1637 = vshrl.u32 %v1636, 7
    %v1638 = vsub.s32 0, %v1637
    %v1639 = vrot.slane %v1635, %v1638
    %1641 = vbcast.lane.b32.xlu0 %v1639, 256
    %v1642 = vpop.permute.xlu0 %1641
    %v1643 = vlaneseq
    %v1644 = vshrl.u32 %v1643, 7
    %v1645 = vsub.s32 1, %v1644
    %v1646 = vrot.slane %v1635, %v1645
    %1648 = vbcast.lane.b32.xlu0 %v1646, 256
    %v1649 = vpop.permute.xlu0 %1648
    %v1650 = vmul.f32 %v1642, %v47
    %v1651 = vmul.f32 %v1649, %v48
    %v1652 = vsel %vm67, %v1650, 0.0
    %v1653 = vrot.slane %v1652, 4
    %v1654 = vadd.f32 %v1652, %v1653
    %v1655 = vrot.slane %v1654, 2
    %v1656 = vadd.f32 %v1654, %v1655
    %v1657 = vrot.slane %v1656, 1
    %v1658 = vadd.f32 %v1656, %v1657
    %v1659 = vsel %vm67, %v1651, 0.0
    %v1660 = vrot.slane %v1659, 4
    %v1661 = vadd.f32 %v1659, %v1660
    %v1662 = vrot.slane %v1661, 2
    %v1663 = vadd.f32 %v1661, %v1662
    %v1664 = vrot.slane %v1663, 1
    %v1665 = vadd.f32 %v1663, %v1664
    %v1666 = vmin.f32 %v1635, %v1099
    %v1667 = vsel %vm475, %v1666, 0.0
    %1668 = vadd.xlane.f32.xlu0 %v1667
    %v1669 = vpop.xlane.xlu0 %1668
    %v1670 = vadd.f32 %v1099, %v1635
    %v1673 = vunpack.c.l.s4 1966171168
    %v1674 = vunpack.c.0.s8 %v1673
    %v1675 = vlaneseq
    %v1676 = vshrl.u32 %v1675, 7
    %v1677 = vsub.s32 %v1674, %v1676
    %v1678 = vrot.slane %v1635, %v1677
    %v1679 = vcombine.high %v1678, %v1678
    %v1681 = vunpack.c.l.s4 1966171168
    %v1682 = vunpack.c.0.s8 %v1681
    %v1683 = vlaneseq
    %v1684 = vshrl.u32 %v1683, 7
    %v1685 = vsub.s32 %v1682, %v1684
    %v1686 = vrot.slane %v1678, %v1685
    %v1688 = vunpack.c.l.s4 1966171168
    %v1689 = vunpack.c.0.s8 %v1688
    %v1690 = vlaneseq
    %v1691 = vshrl.u32 %v1690, 7
    %v1692 = vsub.s32 %v1689, %v1691
    %v1693 = vrot.slane %v1679, %v1692
    %1696 = vst.msk [vmem:[#allocation2 + $0x2] sm:$0x1] %vm550, %v1686
    %1697 = vst.msk [vmem:[#allocation2 + $0xa] sm:$0x1] %vm550, %v1693
    %1698 = vst.msk [vmem:[#allocation3 + $0x2] sm:$0x1] %vm553, %v1658
    %1699 = vst.msk [vmem:[#allocation3 + $0xa] sm:$0x1] %vm553, %v1665
    %1701 = vrot.lane.b32.xlu0 %v1220, 96
    %v1702 = vpop.permute.xlu0 %1701
    %v1704 = vadd.f32 %v1543, %v1702
    %1706 = vrot.lane.b32.xlu0 %v1293, 96
    %v1707 = vpop.permute.xlu0 %1706
    %v1709 = vadd.f32 %v1704, %v1707
    %v1712 = vunpack.c.l.s4 1966171168
    %v1713 = vunpack.c.0.s8 %v1712
    %v1714 = vlaneseq
    %v1715 = vshrl.u32 %v1714, 7
    %v1716 = vsub.s32 %v1713, %v1715
    %v1717 = vrot.slane %v1709, %v1716
    %v1718 = vcombine.high %v1717, %v1717
    %v1720 = vunpack.c.l.s4 1966171168
    %v1721 = vunpack.c.0.s8 %v1720
    %v1722 = vlaneseq
    %v1723 = vshrl.u32 %v1722, 7
    %v1724 = vsub.s32 %v1721, %v1723
    %v1725 = vrot.slane %v1717, %v1724
    %v1727 = vunpack.c.l.s4 1966171168
    %v1728 = vunpack.c.0.s8 %v1727
    %v1729 = vlaneseq
    %v1730 = vshrl.u32 %v1729, 7
    %v1731 = vsub.s32 %v1728, %v1730
    %v1732 = vrot.slane %v1718, %v1731
    %v1733 = vlaneseq
    %v1734 = vshrl.u32 %v1733, 7
    %v1735 = vsub.s32 0, %v1734
    %v1736 = vrot.slane %v1725, %v1735
    %v1737 = vlaneseq
    %v1738 = vshrl.u32 %v1737, 7
    %v1739 = vsub.s32 0, %v1738
    %v1740 = vrot.slane %v1732, %v1739
    %1741 = vrot.lane.b32.xlu0 %v1736, 96
    %v1742 = vpop.permute.xlu0 %1741
    %1743 = vrot.lane.b32.xlu0 %v1740, 96
    %v1744 = vpop.permute.xlu0 %1743
    %1747 = vst.msk [vmem:[#allocation4 + $0x2] sm:$0x1] %vm603, %v1742
    %1748 = vst.msk [vmem:[#allocation4 + $0xa] sm:$0x1] %vm603, %v1744
    %v1751 = vunpack.c.l.s4 1966171168
    %v1752 = vunpack.c.0.s8 %v1751
    %v1753 = vlaneseq
    %v1754 = vshrl.u32 %v1753, 7
    %v1755 = vsub.s32 %v1752, %v1754
    %v1756 = vrot.slane %v1465, %v1755
    %v1757 = vcombine.high %v1756, %v1756
    %v1759 = vunpack.c.l.s4 1966171168
    %v1760 = vunpack.c.0.s8 %v1759
    %v1761 = vlaneseq
    %v1762 = vshrl.u32 %v1761, 7
    %v1763 = vsub.s32 %v1760, %v1762
    %v1764 = vrot.slane %v1756, %v1763
    %v1766 = vunpack.c.l.s4 1966171168
    %v1767 = vunpack.c.0.s8 %v1766
    %v1768 = vlaneseq
    %v1769 = vshrl.u32 %v1768, 7
    %v1770 = vsub.s32 %v1767, %v1769
    %v1771 = vrot.slane %v1757, %v1770
    %v1772 = vlaneseq
    %v1773 = vshrl.u32 %v1772, 7
    %v1774 = vsub.s32 0, %v1773
    %v1775 = vrot.slane %v1764, %v1774
    %v1776 = vlaneseq
    %v1777 = vshrl.u32 %v1776, 7
    %v1778 = vsub.s32 0, %v1777
    %v1779 = vrot.slane %v1771, %v1778
    %1780 = vrot.lane.b32.xlu0 %v1775, 95
    %v1781 = vpop.permute.xlu0 %1780
    %1782 = vrot.lane.b32.xlu0 %v1779, 95
    %v1783 = vpop.permute.xlu0 %1782
    %1786 = vst.msk [vmem:[#allocation5 + $0x2] sm:$0x1] %vm643, %v1781
    %1787 = vst.msk [vmem:[#allocation5 + $0xa] sm:$0x1] %vm643, %v1783
    %vm1788 = vcmask 17424
    %1789 = vst.msk [vmem:[#allocation6] sm:$0x3] %vm1788, %v1669
    %s1790 = scalar_lea.vmem %s0, 6
    %v1791 = vld [vmem:[%s1790] sm:$0x3]
    %v1794 = vsel %vm471, %v1665, %v1658
    %v1795 = vsel %vm67, %v1794, 0
    %1797 = vmatprep.subr.mxu0 0.0
    %1798 = vmatpush1.msra.mxu0 0.0
    %1799 = vmatprep.subr.mxu0 0.0
    %1800 = vmatpush1.msra.mxu0 0.0
    %1801 = vmatprep.subr.mxu0 0.0
    %1802 = vmatpush1.msra.mxu0 0.0
    %1803 = vmatprep.subr.mxu0 0.0
    %1804 = vmatpush1.msra.mxu0 0.0
    %1805 = vmatprep.subr.mxu0 0.0
    %1806 = vmatpush1.msra.mxu0 0.0
    %1807 = vmatprep.subr.mxu0 0.0
    %1808 = vmatpush1.msra.mxu0 0.0
    %1809 = vmatprep.subr.mxu0 0.0
    %1810 = vmatpush1.msra.mxu0 0.0
    %1811 = vmatprep.subr.mxu0 0.0
    %1812 = vmatpush1.msra.mxu0 0.0
    %1813 = vmatprep.subr.mxu0 0.0
    %1814 = vmatpush1.msra.mxu0 0.0
    %1815 = vmatprep.subr.mxu0 0.0
    %1816 = vmatpush1.msra.mxu0 0.0
    %1817 = vmatprep.subr.mxu0 0.0
    %1818 = vmatpush1.msra.mxu0 0.0
    %1819 = vmatprep.subr.mxu0 0.0
    %1820 = vmatpush1.msra.mxu0 0.0
    %1821 = vmatprep.subr.mxu0 0.0
    %1822 = vmatpush1.msra.mxu0 %v56
    %1823 = vmatprep.subr.mxu0 0.0
    %1824 = vmatpush1.msra.mxu0 %v55
    %1825 = vmatprep.subr.mxu0 0.0
    %1826 = vmatpush1.msra.mxu0 %v54
    %1827 = vmatprep.subr.mxu0 0.0
    %1828 = vmatpush1.msra.mxu0 %v53
    %1829 = vmatprep.subr.mxu0 0.0
    %1830 = vmatpush2.msra.mxu0 0.0
    %1831 = vmatprep.subr.mxu0 0.0
    %1832 = vmatpush2.msra.mxu0 0.0
    %1833 = vmatprep.subr.mxu0 0.0
    %1834 = vmatpush2.msra.mxu0 0.0
    %1835 = vmatprep.subr.mxu0 0.0
    %1836 = vmatpush2.msra.mxu0 0.0
    %1837 = vmatprep.subr.mxu0 0.0
    %1838 = vmatpush2.msra.mxu0 0.0
    %1839 = vmatprep.subr.mxu0 0.0
    %1840 = vmatpush2.msra.mxu0 0.0
    %1841 = vmatprep.subr.mxu0 0.0
    %1842 = vmatpush2.msra.mxu0 0.0
    %1843 = vmatprep.subr.mxu0 0.0
    %1844 = vmatpush2.msra.mxu0 0.0
    %1845 = vmatprep.subr.mxu0 0.0
    %1846 = vmatpush2.msra.mxu0 0.0
    %1847 = vmatprep.subr.mxu0 0.0
    %1848 = vmatpush2.msra.mxu0 0.0
    %1849 = vmatprep.subr.mxu0 0.0
    %1850 = vmatpush2.msra.mxu0 0.0
    %1851 = vmatprep.subr.mxu0 0.0
    %1852 = vmatpush2.msra.mxu0 0.0
    %1853 = vmatprep.subr.mxu0 0.0
    %1854 = vmatpush2.msra.mxu0 0.0
    %1855 = vmatprep.subr.mxu0 0.0
    %1856 = vmatpush2.msra.mxu0 0.0
    %1857 = vmatprep.subr.mxu0 0.0
    %1858 = vmatpush2.msra.mxu0 0.0
    %1859 = vmatprep.subr.mxu0 0.0
    %1860 = vmatpush2.msra.mxu0 0.0
    %1861 = vmatprep.mubr.f32.mxu0 0.0
    %1862 = vmatmul.mubr.f32.gmra.mxu0 %v1795
    %v1863 = vpop.f32.mrf.mxu0
    %v1864 = vadd.f32 0.0, %v1863
    %v1865 = vpop.f32.mrf.mxu0
    %1866 = vdwg.mxu0
    %v1867 = vadd.f32 %v1791, %v1864
    %1868 = vmatprep.subr.mxu0 0.0
    %1869 = vmatpush1.msra.mxu0 0.0
    %1870 = vmatprep.subr.mxu0 0.0
    %1871 = vmatpush1.msra.mxu0 0.0
    %1872 = vmatprep.subr.mxu0 0.0
    %1873 = vmatpush1.msra.mxu0 0.0
    %1874 = vmatprep.subr.mxu0 0.0
    %1875 = vmatpush1.msra.mxu0 0.0
    %1876 = vmatprep.subr.mxu0 0.0
    %1877 = vmatpush1.msra.mxu0 0.0
    %1878 = vmatprep.subr.mxu0 0.0
    %1879 = vmatpush1.msra.mxu0 0.0
    %1880 = vmatprep.subr.mxu0 0.0
    %1881 = vmatpush1.msra.mxu0 0.0
    %1882 = vmatprep.subr.mxu0 0.0
    %1883 = vmatpush1.msra.mxu0 0.0
    %1884 = vmatprep.subr.mxu0 0.0
    %1885 = vmatpush1.msra.mxu0 0.0
    %1886 = vmatprep.subr.mxu0 0.0
    %1887 = vmatpush1.msra.mxu0 0.0
    %1888 = vmatprep.subr.mxu0 0.0
    %1889 = vmatpush1.msra.mxu0 0.0
    %1890 = vmatprep.subr.mxu0 0.0
    %1891 = vmatpush1.msra.mxu0 0.0
    %1892 = vmatprep.subr.mxu0 0.0
    %1893 = vmatpush1.msra.mxu0 0.0
    %1894 = vmatprep.subr.mxu0 0.0
    %1895 = vmatpush1.msra.mxu0 0.0
    %1896 = vmatprep.subr.mxu0 0.0
    %1897 = vmatpush1.msra.mxu0 %v58
    %1898 = vmatprep.subr.mxu0 0.0
    %1899 = vmatpush1.msra.mxu0 %v57
    %1900 = vmatprep.subr.mxu0 0.0
    %1901 = vmatpush2.msra.mxu0 0.0
    %1902 = vmatprep.subr.mxu0 0.0
    %1903 = vmatpush2.msra.mxu0 0.0
    %1904 = vmatprep.subr.mxu0 0.0
    %1905 = vmatpush2.msra.mxu0 0.0
    %1906 = vmatprep.subr.mxu0 0.0
    %1907 = vmatpush2.msra.mxu0 0.0
    %1908 = vmatprep.subr.mxu0 0.0
    %1909 = vmatpush2.msra.mxu0 0.0
    %1910 = vmatprep.subr.mxu0 0.0
    %1911 = vmatpush2.msra.mxu0 0.0
    %1912 = vmatprep.subr.mxu0 0.0
    %1913 = vmatpush2.msra.mxu0 0.0
    %1914 = vmatprep.subr.mxu0 0.0
    %1915 = vmatpush2.msra.mxu0 0.0
    %1916 = vmatprep.subr.mxu0 0.0
    %1917 = vmatpush2.msra.mxu0 0.0
    %1918 = vmatprep.subr.mxu0 0.0
    %1919 = vmatpush2.msra.mxu0 0.0
    %1920 = vmatprep.subr.mxu0 0.0
    %1921 = vmatpush2.msra.mxu0 0.0
    %1922 = vmatprep.subr.mxu0 0.0
    %1923 = vmatpush2.msra.mxu0 0.0
    %1924 = vmatprep.subr.mxu0 0.0
    %1925 = vmatpush2.msra.mxu0 0.0
    %1926 = vmatprep.subr.mxu0 0.0
    %1927 = vmatpush2.msra.mxu0 0.0
    %1928 = vmatprep.subr.mxu0 0.0
    %1929 = vmatpush2.msra.mxu0 0.0
    %1930 = vmatprep.subr.mxu0 0.0
    %1931 = vmatpush2.msra.mxu0 0.0
    %1932 = vmatprep.mubr.f32.mxu0 0.0
    %1933 = vmatmul.mubr.f32.gmra.mxu0 %v1396
    %v1934 = vpop.f32.mrf.mxu0
    %v1935 = vadd.f32 0.0, %v1934
    %v1936 = vpop.f32.mrf.mxu0
    %1937 = vdwg.mxu0
    %v1938 = vadd.f32 %v1867, %v1935
    %v1939 = vadd.f32 %v1938, %v220
    %v1940 = vxor.u32 %v1939, 2147483648
    %v1941 = vmul.f32 %v1940, 1.442695
    %v1942 = vpow.pop %v1941
    %v1943 = vadd.f32 %v1942, 1.0
    %v1944 = vrcp.pop %v1943
    %v1945 = vmul.f32 1.0, %v1944
    %v1946 = vtanh.pop %v1939
    %v1947 = vmul.f32 %v1945, %v1386
    %1949 = vrot.lane.b32.xlu0 %v1946, 96
    %v1950 = vpop.permute.xlu0 %1949
    %v1952 = vmul.f32 %v1945, %v1950
    %1954 = vrot.lane.b32.xlu0 %v1952, 16
    %v1955 = vpop.permute.xlu0 %1954
    %v1957 = vadd.f32 %v1947, %v1955
    %v1958 = vtanh.pop %v1957
    %1960 = vrot.lane.b32.xlu0 %v1958, 32
    %v1961 = vpop.permute.xlu0 %1960
    %v1963 = vmul.f32 %v1945, %v1961
    %1965 = vrot.lane.b32.xlu0 %v1963, 80
    %v1966 = vpop.permute.xlu0 %1965
    %v1967 = vsel %vm142, %v1966, 0
    %1969 = vmatprep.subr.mxu0 0.0
    %1970 = vmatpush1.msra.mxu0 0.0
    %1971 = vmatprep.subr.mxu0 0.0
    %1972 = vmatpush1.msra.mxu0 0.0
    %1973 = vmatprep.subr.mxu0 0.0
    %1974 = vmatpush1.msra.mxu0 0.0
    %1975 = vmatprep.subr.mxu0 0.0
    %1976 = vmatpush1.msra.mxu0 0.0
    %1977 = vmatprep.subr.mxu0 0.0
    %1978 = vmatpush1.msra.mxu0 0.0
    %1979 = vmatprep.subr.mxu0 0.0
    %1980 = vmatpush1.msra.mxu0 0.0
    %1981 = vmatprep.subr.mxu0 0.0
    %1982 = vmatpush1.msra.mxu0 0.0
    %1983 = vmatprep.subr.mxu0 0.0
    %1984 = vmatpush1.msra.mxu0 0.0
    %1985 = vmatprep.subr.mxu0 0.0
    %1986 = vmatpush1.msra.mxu0 0.0
    %1987 = vmatprep.subr.mxu0 0.0
    %1988 = vmatpush1.msra.mxu0 0.0
    %1989 = vmatprep.subr.mxu0 0.0
    %1990 = vmatpush1.msra.mxu0 0.0
    %1991 = vmatprep.subr.mxu0 0.0
    %1992 = vmatpush1.msra.mxu0 0.0
    %1993 = vmatprep.subr.mxu0 0.0
    %1994 = vmatpush1.msra.mxu0 0.0
    %1995 = vmatprep.subr.mxu0 0.0
    %1996 = vmatpush1.msra.mxu0 0.0
    %1997 = vmatprep.subr.mxu0 0.0
    %1998 = vmatpush1.msra.mxu0 %v60
    %1999 = vmatprep.subr.mxu0 0.0
    %2000 = vmatpush1.msra.mxu0 %v59
    %2001 = vmatprep.subr.mxu0 0.0
    %2002 = vmatpush2.msra.mxu0 0.0
    %2003 = vmatprep.subr.mxu0 0.0
    %2004 = vmatpush2.msra.mxu0 0.0
    %2005 = vmatprep.subr.mxu0 0.0
    %2006 = vmatpush2.msra.mxu0 0.0
    %2007 = vmatprep.subr.mxu0 0.0
    %2008 = vmatpush2.msra.mxu0 0.0
    %2009 = vmatprep.subr.mxu0 0.0
    %2010 = vmatpush2.msra.mxu0 0.0
    %2011 = vmatprep.subr.mxu0 0.0
    %2012 = vmatpush2.msra.mxu0 0.0
    %2013 = vmatprep.subr.mxu0 0.0
    %2014 = vmatpush2.msra.mxu0 0.0
    %2015 = vmatprep.subr.mxu0 0.0
    %2016 = vmatpush2.msra.mxu0 0.0
    %2017 = vmatprep.subr.mxu0 0.0
    %2018 = vmatpush2.msra.mxu0 0.0
    %2019 = vmatprep.subr.mxu0 0.0
    %2020 = vmatpush2.msra.mxu0 0.0
    %2021 = vmatprep.subr.mxu0 0.0
    %2022 = vmatpush2.msra.mxu0 0.0
    %2023 = vmatprep.subr.mxu0 0.0
    %2024 = vmatpush2.msra.mxu0 0.0
    %2025 = vmatprep.subr.mxu0 0.0
    %2026 = vmatpush2.msra.mxu0 0.0
    %2027 = vmatprep.subr.mxu0 0.0
    %2028 = vmatpush2.msra.mxu0 0.0
    %2029 = vmatprep.subr.mxu0 0.0
    %2030 = vmatpush2.msra.mxu0 0.0
    %2031 = vmatprep.subr.mxu0 0.0
    %2032 = vmatpush2.msra.mxu0 0.0
    %2033 = vmatprep.mubr.f32.mxu0 0.0
    %2034 = vmatmul.mubr.f32.gmra.mxu0 %v1967
    %v2035 = vpop.f32.mrf.mxu0
    %v2036 = vadd.f32 0.0, %v2035
    %v2037 = vpop.f32.mrf.mxu0
    %2038 = vdwg.mxu0
    %2040 = vrot.lane.b32.xlu0 %v1957, 112
    %v2041 = vpop.permute.xlu0 %2040
    %v2042 = vsel %vm142, %v2041, 0
    %2044 = vmatprep.subr.mxu0 0.0
    %2045 = vmatpush1.msra.mxu0 0.0
    %2046 = vmatprep.subr.mxu0 0.0
    %2047 = vmatpush1.msra.mxu0 0.0
    %2048 = vmatprep.subr.mxu0 0.0
    %2049 = vmatpush1.msra.mxu0 0.0
    %2050 = vmatprep.subr.mxu0 0.0
    %2051 = vmatpush1.msra.mxu0 0.0
    %2052 = vmatprep.subr.mxu0 0.0
    %2053 = vmatpush1.msra.mxu0 0.0
    %2054 = vmatprep.subr.mxu0 0.0
    %2055 = vmatpush1.msra.mxu0 0.0
    %2056 = vmatprep.subr.mxu0 0.0
    %2057 = vmatpush1.msra.mxu0 0.0
    %2058 = vmatprep.subr.mxu0 0.0
    %2059 = vmatpush1.msra.mxu0 0.0
    %2060 = vmatprep.subr.mxu0 0.0
    %2061 = vmatpush1.msra.mxu0 0.0
    %2062 = vmatprep.subr.mxu0 0.0
    %2063 = vmatpush1.msra.mxu0 0.0
    %2064 = vmatprep.subr.mxu0 0.0
    %2065 = vmatpush1.msra.mxu0 0.0
    %2066 = vmatprep.subr.mxu0 0.0
    %2067 = vmatpush1.msra.mxu0 0.0
    %2068 = vmatprep.subr.mxu0 0.0
    %2069 = vmatpush1.msra.mxu0 0.0
    %2070 = vmatprep.subr.mxu0 0.0
    %2071 = vmatpush1.msra.mxu0 0.0
    %2072 = vmatprep.subr.mxu0 0.0
    %2073 = vmatpush1.msra.mxu0 %v62
    %2074 = vmatprep.subr.mxu0 0.0
    %2075 = vmatpush1.msra.mxu0 %v61
    %2076 = vmatprep.subr.mxu0 0.0
    %2077 = vmatpush2.msra.mxu0 0.0
    %2078 = vmatprep.subr.mxu0 0.0
    %2079 = vmatpush2.msra.mxu0 0.0
    %2080 = vmatprep.subr.mxu0 0.0
    %2081 = vmatpush2.msra.mxu0 0.0
    %2082 = vmatprep.subr.mxu0 0.0
    %2083 = vmatpush2.msra.mxu0 0.0
    %2084 = vmatprep.subr.mxu0 0.0
    %2085 = vmatpush2.msra.mxu0 0.0
    %2086 = vmatprep.subr.mxu0 0.0
    %2087 = vmatpush2.msra.mxu0 0.0
    %2088 = vmatprep.subr.mxu0 0.0
    %2089 = vmatpush2.msra.mxu0 0.0
    %2090 = vmatprep.subr.mxu0 0.0
    %2091 = vmatpush2.msra.mxu0 0.0
    %2092 = vmatprep.subr.mxu0 0.0
    %2093 = vmatpush2.msra.mxu0 0.0
    %2094 = vmatprep.subr.mxu0 0.0
    %2095 = vmatpush2.msra.mxu0 0.0
    %2096 = vmatprep.subr.mxu0 0.0
    %2097 = vmatpush2.msra.mxu0 0.0
    %2098 = vmatprep.subr.mxu0 0.0
    %2099 = vmatpush2.msra.mxu0 0.0
    %2100 = vmatprep.subr.mxu0 0.0
    %2101 = vmatpush2.msra.mxu0 0.0
    %2102 = vmatprep.subr.mxu0 0.0
    %2103 = vmatpush2.msra.mxu0 0.0
    %2104 = vmatprep.subr.mxu0 0.0
    %2105 = vmatpush2.msra.mxu0 0.0
    %2106 = vmatprep.subr.mxu0 0.0
    %2107 = vmatpush2.msra.mxu0 0.0
    %2108 = vmatprep.mubr.f32.mxu0 0.0
    %2109 = vmatmul.mubr.f32.gmra.mxu0 %v2042
    %v2110 = vpop.f32.mrf.mxu0
    %v2111 = vadd.f32 0.0, %v2110
    %v2112 = vpop.f32.mrf.mxu0
    %2113 = vdwg.mxu0
    %v2114 = vadd.f32 %v2036, %v2111
    %v2117 = vunpack.c.l.s4 1966171168
    %v2118 = vunpack.c.0.s8 %v2117
    %v2119 = vlaneseq
    %v2120 = vshrl.u32 %v2119, 7
    %v2121 = vsub.s32 %v2118, %v2120
    %v2122 = vrot.slane %v2114, %v2121
    %v2123 = vcombine.high %v2122, %v2122
    %v2125 = vunpack.c.l.s4 1966171168
    %v2126 = vunpack.c.0.s8 %v2125
    %v2127 = vlaneseq
    %v2128 = vshrl.u32 %v2127, 7
    %v2129 = vsub.s32 %v2126, %v2128
    %v2130 = vrot.slane %v2122, %v2129
    %v2132 = vunpack.c.l.s4 1966171168
    %v2133 = vunpack.c.0.s8 %v2132
    %v2134 = vlaneseq
    %v2135 = vshrl.u32 %v2134, 7
    %v2136 = vsub.s32 %v2133, %v2135
    %v2137 = vrot.slane %v2123, %v2136
    %v2138 = vlaneseq
    %v2139 = vshrl.u32 %v2138, 7
    %v2140 = vsub.s32 0, %v2139
    %v2141 = vrot.slane %v2130, %v2140
    %v2142 = vlaneseq
    %v2143 = vshrl.u32 %v2142, 7
    %v2144 = vsub.s32 0, %v2143
    %v2145 = vrot.slane %v2137, %v2144
    %v2148 = vadd.f32 %v49, %v2141
    %v2149 = vadd.f32 %v50, %v2145
    %v2150 = vlaneseq
    %v2151 = vshrl.u32 %v2150, 7
    %v2152 = vsub.s32 0, %v2151
    %v2153 = vrot.slane %v1670, %v2152
    %2155 = vbcast.lane.b32.xlu0 %v2153, 256
    %v2156 = vpop.permute.xlu0 %2155
    %v2157 = vlaneseq
    %v2158 = vshrl.u32 %v2157, 7
    %v2159 = vsub.s32 1, %v2158
    %v2160 = vrot.slane %v1670, %v2159
    %2162 = vbcast.lane.b32.xlu0 %v2160, 256
    %v2163 = vpop.permute.xlu0 %2162
    %v2164 = vmul.f32 %v2156, %v435
    %v2165 = vmul.f32 %v2163, %v435
    %v2166 = vadd.f32 %v2148, %v2164
    %v2167 = vadd.f32 %v2149, %v2165
    %v2168 = vadd.f32 %v2166, %v442
    %v2169 = vadd.f32 %v2167, %v442
    %v2170 = vtanh.pop %v2168
    %v2171 = vtanh.pop %v2169
    %v2172 = vmul.f32 %v2170, %v450
    %v2173 = vmul.f32 %v2171, %v450
    %v2174 = vsel %vm67, %v2172, 0.0
    %2175 = vadd.xlane.f32.xlu0 %v2174
    %v2176 = vpop.xlane.xlu0 %2175
    %v2177 = vsel %vm67, %v2173, 0.0
    %2178 = vadd.xlane.f32.xlu0 %v2177
    %v2179 = vpop.xlane.xlu0 %2178
    %v2182 = vlaneseq
    %v2183 = vshrl.u32 %v2182, 7
    %v2184 = vsub.s32 %v462, %v2183
    %v2185 = vrot.slane %v2176, %v2184
    %v2186 = vlaneseq
    %v2187 = vshrl.u32 %v2186, 7
    %v2188 = vsub.s32 %v462, %v2187
    %v2189 = vrot.slane %v2179, %v2188
    %v2190 = vsel %vm471, %v2189, %v2185
    %v2192 = vsel %vm52, -1e+09, %v2190
    %v2193 = vsel %vm475, %v2192, -inf
    %2194 = vmax.xlane.f32.xlu0 %v2193
    %v2195 = vpop.xlane.xlu0 %2194
    %v2196 = vsub.f32 %v2192, %v2195
    %v2197 = vmul.f32 %v2196, 1.442695
    %v2198 = vpow.pop %v2197
    %v2199 = vsel %vm475, %v2198, 0.0
    %2200 = vadd.xlane.f32.xlu0 %v2199
    %v2201 = vpop.xlane.xlu0 %2200
    %v2202 = vrcp.pop %v2201
    %v2203 = vmul.f32 %v2201, %v2202
    %v2204 = vsub.f32 2.0, %v2203
    %v2205 = vmul.f32 %v2202, %v2204
    %v2206 = vmul.f32 %v2198, %v2205
    %v2207 = vlaneseq
    %v2208 = vshrl.u32 %v2207, 7
    %v2209 = vsub.s32 0, %v2208
    %v2210 = vrot.slane %v2206, %v2209
    %2212 = vbcast.lane.b32.xlu0 %v2210, 256
    %v2213 = vpop.permute.xlu0 %2212
    %v2214 = vlaneseq
    %v2215 = vshrl.u32 %v2214, 7
    %v2216 = vsub.s32 1, %v2215
    %v2217 = vrot.slane %v2206, %v2216
    %2219 = vbcast.lane.b32.xlu0 %v2217, 256
    %v2220 = vpop.permute.xlu0 %2219
    %v2221 = vmul.f32 %v2213, %v47
    %v2222 = vmul.f32 %v2220, %v48
    %v2223 = vsel %vm67, %v2221, 0.0
    %v2224 = vrot.slane %v2223, 4
    %v2225 = vadd.f32 %v2223, %v2224
    %v2226 = vrot.slane %v2225, 2
    %v2227 = vadd.f32 %v2225, %v2226
    %v2228 = vrot.slane %v2227, 1
    %v2229 = vadd.f32 %v2227, %v2228
    %v2230 = vsel %vm67, %v2222, 0.0
    %v2231 = vrot.slane %v2230, 4
    %v2232 = vadd.f32 %v2230, %v2231
    %v2233 = vrot.slane %v2232, 2
    %v2234 = vadd.f32 %v2232, %v2233
    %v2235 = vrot.slane %v2234, 1
    %v2236 = vadd.f32 %v2234, %v2235
    %v2237 = vmin.f32 %v2206, %v1670
    %v2238 = vsel %vm475, %v2237, 0.0
    %2239 = vadd.xlane.f32.xlu0 %v2238
    %v2240 = vpop.xlane.xlu0 %2239
    %v2241 = vadd.f32 %v1670, %v2206
    %v2244 = vunpack.c.l.s4 1966171168
    %v2245 = vunpack.c.0.s8 %v2244
    %v2246 = vlaneseq
    %v2247 = vshrl.u32 %v2246, 7
    %v2248 = vsub.s32 %v2245, %v2247
    %v2249 = vrot.slane %v2206, %v2248
    %v2250 = vcombine.high %v2249, %v2249
    %v2252 = vunpack.c.l.s4 1966171168
    %v2253 = vunpack.c.0.s8 %v2252
    %v2254 = vlaneseq
    %v2255 = vshrl.u32 %v2254, 7
    %v2256 = vsub.s32 %v2253, %v2255
    %v2257 = vrot.slane %v2249, %v2256
    %v2259 = vunpack.c.l.s4 1966171168
    %v2260 = vunpack.c.0.s8 %v2259
    %v2261 = vlaneseq
    %v2262 = vshrl.u32 %v2261, 7
    %v2263 = vsub.s32 %v2260, %v2262
    %v2264 = vrot.slane %v2250, %v2263
    %2267 = vst.msk [vmem:[#allocation2 + $0x3] sm:$0x1] %vm550, %v2257
    %2268 = vst.msk [vmem:[#allocation2 + $0xb] sm:$0x1] %vm550, %v2264
    %2269 = vst.msk [vmem:[#allocation3 + $0x3] sm:$0x1] %vm553, %v2229
    %2270 = vst.msk [vmem:[#allocation3 + $0xb] sm:$0x1] %vm553, %v2236
    %2272 = vrot.lane.b32.xlu0 %v1791, 96
    %v2273 = vpop.permute.xlu0 %2272
    %v2275 = vadd.f32 %v2114, %v2273
    %2277 = vrot.lane.b32.xlu0 %v1864, 96
    %v2278 = vpop.permute.xlu0 %2277
    %v2280 = vadd.f32 %v2275, %v2278
    %v2283 = vunpack.c.l.s4 1966171168
    %v2284 = vunpack.c.0.s8 %v2283
    %v2285 = vlaneseq
    %v2286 = vshrl.u32 %v2285, 7
    %v2287 = vsub.s32 %v2284, %v2286
    %v2288 = vrot.slane %v2280, %v2287
    %v2289 = vcombine.high %v2288, %v2288
    %v2291 = vunpack.c.l.s4 1966171168
    %v2292 = vunpack.c.0.s8 %v2291
    %v2293 = vlaneseq
    %v2294 = vshrl.u32 %v2293, 7
    %v2295 = vsub.s32 %v2292, %v2294
    %v2296 = vrot.slane %v2288, %v2295
    %v2298 = vunpack.c.l.s4 1966171168
    %v2299 = vunpack.c.0.s8 %v2298
    %v2300 = vlaneseq
    %v2301 = vshrl.u32 %v2300, 7
    %v2302 = vsub.s32 %v2299, %v2301
    %v2303 = vrot.slane %v2289, %v2302
    %v2304 = vlaneseq
    %v2305 = vshrl.u32 %v2304, 7
    %v2306 = vsub.s32 0, %v2305
    %v2307 = vrot.slane %v2296, %v2306
    %v2308 = vlaneseq
    %v2309 = vshrl.u32 %v2308, 7
    %v2310 = vsub.s32 0, %v2309
    %v2311 = vrot.slane %v2303, %v2310
    %2312 = vrot.lane.b32.xlu0 %v2307, 96
    %v2313 = vpop.permute.xlu0 %2312
    %2314 = vrot.lane.b32.xlu0 %v2311, 96
    %v2315 = vpop.permute.xlu0 %2314
    %2318 = vst.msk [vmem:[#allocation4 + $0x3] sm:$0x1] %vm603, %v2313
    %2319 = vst.msk [vmem:[#allocation4 + $0xb] sm:$0x1] %vm603, %v2315
    %v2322 = vunpack.c.l.s4 1966171168
    %v2323 = vunpack.c.0.s8 %v2322
    %v2324 = vlaneseq
    %v2325 = vshrl.u32 %v2324, 7
    %v2326 = vsub.s32 %v2323, %v2325
    %v2327 = vrot.slane %v2036, %v2326
    %v2328 = vcombine.high %v2327, %v2327
    %v2330 = vunpack.c.l.s4 1966171168
    %v2331 = vunpack.c.0.s8 %v2330
    %v2332 = vlaneseq
    %v2333 = vshrl.u32 %v2332, 7
    %v2334 = vsub.s32 %v2331, %v2333
    %v2335 = vrot.slane %v2327, %v2334
    %v2337 = vunpack.c.l.s4 1966171168
    %v2338 = vunpack.c.0.s8 %v2337
    %v2339 = vlaneseq
    %v2340 = vshrl.u32 %v2339, 7
    %v2341 = vsub.s32 %v2338, %v2340
    %v2342 = vrot.slane %v2328, %v2341
    %v2343 = vlaneseq
    %v2344 = vshrl.u32 %v2343, 7
    %v2345 = vsub.s32 0, %v2344
    %v2346 = vrot.slane %v2335, %v2345
    %v2347 = vlaneseq
    %v2348 = vshrl.u32 %v2347, 7
    %v2349 = vsub.s32 0, %v2348
    %v2350 = vrot.slane %v2342, %v2349
    %2351 = vrot.lane.b32.xlu0 %v2346, 95
    %v2352 = vpop.permute.xlu0 %2351
    %2353 = vrot.lane.b32.xlu0 %v2350, 95
    %v2354 = vpop.permute.xlu0 %2353
    %2357 = vst.msk [vmem:[#allocation5 + $0x3] sm:$0x1] %vm643, %v2352
    %2358 = vst.msk [vmem:[#allocation5 + $0xb] sm:$0x1] %vm643, %v2354
    %vm2359 = vcmask 25624
    %2360 = vst.msk [vmem:[#allocation6] sm:$0x3] %vm2359, %v2240
    %s2361 = scalar_lea.vmem %s0, 8
    %v2362 = vld [vmem:[%s2361] sm:$0x3]
    %v2365 = vsel %vm471, %v2236, %v2229
    %v2366 = vsel %vm67, %v2365, 0
    %2368 = vmatprep.subr.mxu0 0.0
    %2369 = vmatpush1.msra.mxu0 0.0
    %2370 = vmatprep.subr.mxu0 0.0
    %2371 = vmatpush1.msra.mxu0 0.0
    %2372 = vmatprep.subr.mxu0 0.0
    %2373 = vmatpush1.msra.mxu0 0.0
    %2374 = vmatprep.subr.mxu0 0.0
    %2375 = vmatpush1.msra.mxu0 0.0
    %2376 = vmatprep.subr.mxu0 0.0
    %2377 = vmatpush1.msra.mxu0 0.0
    %2378 = vmatprep.subr.mxu0 0.0
    %2379 = vmatpush1.msra.mxu0 0.0
    %2380 = vmatprep.subr.mxu0 0.0
    %2381 = vmatpush1.msra.mxu0 0.0
    %2382 = vmatprep.subr.mxu0 0.0
    %2383 = vmatpush1.msra.mxu0 0.0
    %2384 = vmatprep.subr.mxu0 0.0
    %2385 = vmatpush1.msra.mxu0 0.0
    %2386 = vmatprep.subr.mxu0 0.0
    %2387 = vmatpush1.msra.mxu0 0.0
    %2388 = vmatprep.subr.mxu0 0.0
    %2389 = vmatpush1.msra.mxu0 0.0
    %2390 = vmatprep.subr.mxu0 0.0
    %2391 = vmatpush1.msra.mxu0 0.0
    %2392 = vmatprep.subr.mxu0 0.0
    %2393 = vmatpush1.msra.mxu0 %v56
    %2394 = vmatprep.subr.mxu0 0.0
    %2395 = vmatpush1.msra.mxu0 %v55
    %2396 = vmatprep.subr.mxu0 0.0
    %2397 = vmatpush1.msra.mxu0 %v54
    %2398 = vmatprep.subr.mxu0 0.0
    %2399 = vmatpush1.msra.mxu0 %v53
    %2400 = vmatprep.subr.mxu0 0.0
    %2401 = vmatpush2.msra.mxu0 0.0
    %2402 = vmatprep.subr.mxu0 0.0
    %2403 = vmatpush2.msra.mxu0 0.0
    %2404 = vmatprep.subr.mxu0 0.0
    %2405 = vmatpush2.msra.mxu0 0.0
    %2406 = vmatprep.subr.mxu0 0.0
    %2407 = vmatpush2.msra.mxu0 0.0
    %2408 = vmatprep.subr.mxu0 0.0
    %2409 = vmatpush2.msra.mxu0 0.0
    %2410 = vmatprep.subr.mxu0 0.0
    %2411 = vmatpush2.msra.mxu0 0.0
    %2412 = vmatprep.subr.mxu0 0.0
    %2413 = vmatpush2.msra.mxu0 0.0
    %2414 = vmatprep.subr.mxu0 0.0
    %2415 = vmatpush2.msra.mxu0 0.0
    %2416 = vmatprep.subr.mxu0 0.0
    %2417 = vmatpush2.msra.mxu0 0.0
    %2418 = vmatprep.subr.mxu0 0.0
    %2419 = vmatpush2.msra.mxu0 0.0
    %2420 = vmatprep.subr.mxu0 0.0
    %2421 = vmatpush2.msra.mxu0 0.0
    %2422 = vmatprep.subr.mxu0 0.0
    %2423 = vmatpush2.msra.mxu0 0.0
    %2424 = vmatprep.subr.mxu0 0.0
    %2425 = vmatpush2.msra.mxu0 0.0
    %2426 = vmatprep.subr.mxu0 0.0
    %2427 = vmatpush2.msra.mxu0 0.0
    %2428 = vmatprep.subr.mxu0 0.0
    %2429 = vmatpush2.msra.mxu0 0.0
    %2430 = vmatprep.subr.mxu0 0.0
    %2431 = vmatpush2.msra.mxu0 0.0
    %2432 = vmatprep.mubr.f32.mxu0 0.0
    %2433 = vmatmul.mubr.f32.gmra.mxu0 %v2366
    %v2434 = vpop.f32.mrf.mxu0
    %v2435 = vadd.f32 0.0, %v2434
    %v2436 = vpop.f32.mrf.mxu0
    %2437 = vdwg.mxu0
    %v2438 = vadd.f32 %v2362, %v2435
    %2439 = vmatprep.subr.mxu0 0.0
    %2440 = vmatpush1.msra.mxu0 0.0
    %2441 = vmatprep.subr.mxu0 0.0
    %2442 = vmatpush1.msra.mxu0 0.0
    %2443 = vmatprep.subr.mxu0 0.0
    %2444 = vmatpush1.msra.mxu0 0.0
    %2445 = vmatprep.subr.mxu0 0.0
    %2446 = vmatpush1.msra.mxu0 0.0
    %2447 = vmatprep.subr.mxu0 0.0
    %2448 = vmatpush1.msra.mxu0 0.0
    %2449 = vmatprep.subr.mxu0 0.0
    %2450 = vmatpush1.msra.mxu0 0.0
    %2451 = vmatprep.subr.mxu0 0.0
    %2452 = vmatpush1.msra.mxu0 0.0
    %2453 = vmatprep.subr.mxu0 0.0
    %2454 = vmatpush1.msra.mxu0 0.0
    %2455 = vmatprep.subr.mxu0 0.0
    %2456 = vmatpush1.msra.mxu0 0.0
    %2457 = vmatprep.subr.mxu0 0.0
    %2458 = vmatpush1.msra.mxu0 0.0
    %2459 = vmatprep.subr.mxu0 0.0
    %2460 = vmatpush1.msra.mxu0 0.0
    %2461 = vmatprep.subr.mxu0 0.0
    %2462 = vmatpush1.msra.mxu0 0.0
    %2463 = vmatprep.subr.mxu0 0.0
    %2464 = vmatpush1.msra.mxu0 0.0
    %2465 = vmatprep.subr.mxu0 0.0
    %2466 = vmatpush1.msra.mxu0 0.0
    %2467 = vmatprep.subr.mxu0 0.0
    %2468 = vmatpush1.msra.mxu0 %v58
    %2469 = vmatprep.subr.mxu0 0.0
    %2470 = vmatpush1.msra.mxu0 %v57
    %2471 = vmatprep.subr.mxu0 0.0
    %2472 = vmatpush2.msra.mxu0 0.0
    %2473 = vmatprep.subr.mxu0 0.0
    %2474 = vmatpush2.msra.mxu0 0.0
    %2475 = vmatprep.subr.mxu0 0.0
    %2476 = vmatpush2.msra.mxu0 0.0
    %2477 = vmatprep.subr.mxu0 0.0
    %2478 = vmatpush2.msra.mxu0 0.0
    %2479 = vmatprep.subr.mxu0 0.0
    %2480 = vmatpush2.msra.mxu0 0.0
    %2481 = vmatprep.subr.mxu0 0.0
    %2482 = vmatpush2.msra.mxu0 0.0
    %2483 = vmatprep.subr.mxu0 0.0
    %2484 = vmatpush2.msra.mxu0 0.0
    %2485 = vmatprep.subr.mxu0 0.0
    %2486 = vmatpush2.msra.mxu0 0.0
    %2487 = vmatprep.subr.mxu0 0.0
    %2488 = vmatpush2.msra.mxu0 0.0
    %2489 = vmatprep.subr.mxu0 0.0
    %2490 = vmatpush2.msra.mxu0 0.0
    %2491 = vmatprep.subr.mxu0 0.0
    %2492 = vmatpush2.msra.mxu0 0.0
    %2493 = vmatprep.subr.mxu0 0.0
    %2494 = vmatpush2.msra.mxu0 0.0
    %2495 = vmatprep.subr.mxu0 0.0
    %2496 = vmatpush2.msra.mxu0 0.0
    %2497 = vmatprep.subr.mxu0 0.0
    %2498 = vmatpush2.msra.mxu0 0.0
    %2499 = vmatprep.subr.mxu0 0.0
    %2500 = vmatpush2.msra.mxu0 0.0
    %2501 = vmatprep.subr.mxu0 0.0
    %2502 = vmatpush2.msra.mxu0 0.0
    %2503 = vmatprep.mubr.f32.mxu0 0.0
    %2504 = vmatmul.mubr.f32.gmra.mxu0 %v1967
    %v2505 = vpop.f32.mrf.mxu0
    %v2506 = vadd.f32 0.0, %v2505
    %v2507 = vpop.f32.mrf.mxu0
    %2508 = vdwg.mxu0
    %v2509 = vadd.f32 %v2438, %v2506
    %v2510 = vadd.f32 %v2509, %v220
    %v2511 = vxor.u32 %v2510, 2147483648
    %v2512 = vmul.f32 %v2511, 1.442695
    %v2513 = vpow.pop %v2512
    %v2514 = vadd.f32 %v2513, 1.0
    %v2515 = vrcp.pop %v2514
    %v2516 = vmul.f32 1.0, %v2515
    %v2517 = vtanh.pop %v2510
    %v2518 = vmul.f32 %v2516, %v1957
    %2520 = vrot.lane.b32.xlu0 %v2517, 96
    %v2521 = vpop.permute.xlu0 %2520
    %v2523 = vmul.f32 %v2516, %v2521
    %2525 = vrot.lane.b32.xlu0 %v2523, 16
    %v2526 = vpop.permute.xlu0 %2525
    %v2528 = vadd.f32 %v2518, %v2526
    %v2529 = vtanh.pop %v2528
    %2531 = vrot.lane.b32.xlu0 %v2529, 32
    %v2532 = vpop.permute.xlu0 %2531
    %v2534 = vmul.f32 %v2516, %v2532
    %2536 = vrot.lane.b32.xlu0 %v2534, 80
    %v2537 = vpop.permute.xlu0 %2536
    %v2538 = vsel %vm142, %v2537, 0
    %2540 = vmatprep.subr.mxu0 0.0
    %2541 = vmatpush1.msra.mxu0 0.0
    %2542 = vmatprep.subr.mxu0 0.0
    %2543 = vmatpush1.msra.mxu0 0.0
    %2544 = vmatprep.subr.mxu0 0.0
    %2545 = vmatpush1.msra.mxu0 0.0
    %2546 = vmatprep.subr.mxu0 0.0
    %2547 = vmatpush1.msra.mxu0 0.0
    %2548 = vmatprep.subr.mxu0 0.0
    %2549 = vmatpush1.msra.mxu0 0.0
    %2550 = vmatprep.subr.mxu0 0.0
    %2551 = vmatpush1.msra.mxu0 0.0
    %2552 = vmatprep.subr.mxu0 0.0
    %2553 = vmatpush1.msra.mxu0 0.0
    %2554 = vmatprep.subr.mxu0 0.0
    %2555 = vmatpush1.msra.mxu0 0.0
    %2556 = vmatprep.subr.mxu0 0.0
    %2557 = vmatpush1.msra.mxu0 0.0
    %2558 = vmatprep.subr.mxu0 0.0
    %2559 = vmatpush1.msra.mxu0 0.0
    %2560 = vmatprep.subr.mxu0 0.0
    %2561 = vmatpush1.msra.mxu0 0.0
    %2562 = vmatprep.subr.mxu0 0.0
    %2563 = vmatpush1.msra.mxu0 0.0
    %2564 = vmatprep.subr.mxu0 0.0
    %2565 = vmatpush1.msra.mxu0 0.0
    %2566 = vmatprep.subr.mxu0 0.0
    %2567 = vmatpush1.msra.mxu0 0.0
    %2568 = vmatprep.subr.mxu0 0.0
    %2569 = vmatpush1.msra.mxu0 %v60
    %2570 = vmatprep.subr.mxu0 0.0
    %2571 = vmatpush1.msra.mxu0 %v59
    %2572 = vmatprep.subr.mxu0 0.0
    %2573 = vmatpush2.msra.mxu0 0.0
    %2574 = vmatprep.subr.mxu0 0.0
    %2575 = vmatpush2.msra.mxu0 0.0
    %2576 = vmatprep.subr.mxu0 0.0
    %2577 = vmatpush2.msra.mxu0 0.0
    %2578 = vmatprep.subr.mxu0 0.0
    %2579 = vmatpush2.msra.mxu0 0.0
    %2580 = vmatprep.subr.mxu0 0.0
    %2581 = vmatpush2.msra.mxu0 0.0
    %2582 = vmatprep.subr.mxu0 0.0
    %2583 = vmatpush2.msra.mxu0 0.0
    %2584 = vmatprep.subr.mxu0 0.0
    %2585 = vmatpush2.msra.mxu0 0.0
    %2586 = vmatprep.subr.mxu0 0.0
    %2587 = vmatpush2.msra.mxu0 0.0
    %2588 = vmatprep.subr.mxu0 0.0
    %2589 = vmatpush2.msra.mxu0 0.0
    %2590 = vmatprep.subr.mxu0 0.0
    %2591 = vmatpush2.msra.mxu0 0.0
    %2592 = vmatprep.subr.mxu0 0.0
    %2593 = vmatpush2.msra.mxu0 0.0
    %2594 = vmatprep.subr.mxu0 0.0
    %2595 = vmatpush2.msra.mxu0 0.0
    %2596 = vmatprep.subr.mxu0 0.0
    %2597 = vmatpush2.msra.mxu0 0.0
    %2598 = vmatprep.subr.mxu0 0.0
    %2599 = vmatpush2.msra.mxu0 0.0
    %2600 = vmatprep.subr.mxu0 0.0
    %2601 = vmatpush2.msra.mxu0 0.0
    %2602 = vmatprep.subr.mxu0 0.0
    %2603 = vmatpush2.msra.mxu0 0.0
    %2604 = vmatprep.mubr.f32.mxu0 0.0
    %2605 = vmatmul.mubr.f32.gmra.mxu0 %v2538
    %v2606 = vpop.f32.mrf.mxu0
    %v2607 = vadd.f32 0.0, %v2606
    %v2608 = vpop.f32.mrf.mxu0
    %2609 = vdwg.mxu0
    %2611 = vrot.lane.b32.xlu0 %v2528, 112
    %v2612 = vpop.permute.xlu0 %2611
    %v2613 = vsel %vm142, %v2612, 0
    %2615 = vmatprep.subr.mxu0 0.0
    %2616 = vmatpush1.msra.mxu0 0.0
    %2617 = vmatprep.subr.mxu0 0.0
    %2618 = vmatpush1.msra.mxu0 0.0
    %2619 = vmatprep.subr.mxu0 0.0
    %2620 = vmatpush1.msra.mxu0 0.0
    %2621 = vmatprep.subr.mxu0 0.0
    %2622 = vmatpush1.msra.mxu0 0.0
    %2623 = vmatprep.subr.mxu0 0.0
    %2624 = vmatpush1.msra.mxu0 0.0
    %2625 = vmatprep.subr.mxu0 0.0
    %2626 = vmatpush1.msra.mxu0 0.0
    %2627 = vmatprep.subr.mxu0 0.0
    %2628 = vmatpush1.msra.mxu0 0.0
    %2629 = vmatprep.subr.mxu0 0.0
    %2630 = vmatpush1.msra.mxu0 0.0
    %2631 = vmatprep.subr.mxu0 0.0
    %2632 = vmatpush1.msra.mxu0 0.0
    %2633 = vmatprep.subr.mxu0 0.0
    %2634 = vmatpush1.msra.mxu0 0.0
    %2635 = vmatprep.subr.mxu0 0.0
    %2636 = vmatpush1.msra.mxu0 0.0
    %2637 = vmatprep.subr.mxu0 0.0
    %2638 = vmatpush1.msra.mxu0 0.0
    %2639 = vmatprep.subr.mxu0 0.0
    %2640 = vmatpush1.msra.mxu0 0.0
    %2641 = vmatprep.subr.mxu0 0.0
    %2642 = vmatpush1.msra.mxu0 0.0
    %2643 = vmatprep.subr.mxu0 0.0
    %2644 = vmatpush1.msra.mxu0 %v62
    %2645 = vmatprep.subr.mxu0 0.0
    %2646 = vmatpush1.msra.mxu0 %v61
    %2647 = vmatprep.subr.mxu0 0.0
    %2648 = vmatpush2.msra.mxu0 0.0
    %2649 = vmatprep.subr.mxu0 0.0
    %2650 = vmatpush2.msra.mxu0 0.0
    %2651 = vmatprep.subr.mxu0 0.0
    %2652 = vmatpush2.msra.mxu0 0.0
    %2653 = vmatprep.subr.mxu0 0.0
    %2654 = vmatpush2.msra.mxu0 0.0
    %2655 = vmatprep.subr.mxu0 0.0
    %2656 = vmatpush2.msra.mxu0 0.0
    %2657 = vmatprep.subr.mxu0 0.0
    %2658 = vmatpush2.msra.mxu0 0.0
    %2659 = vmatprep.subr.mxu0 0.0
    %2660 = vmatpush2.msra.mxu0 0.0
    %2661 = vmatprep.subr.mxu0 0.0
    %2662 = vmatpush2.msra.mxu0 0.0
    %2663 = vmatprep.subr.mxu0 0.0
    %2664 = vmatpush2.msra.mxu0 0.0
    %2665 = vmatprep.subr.mxu0 0.0
    %2666 = vmatpush2.msra.mxu0 0.0
    %2667 = vmatprep.subr.mxu0 0.0
    %2668 = vmatpush2.msra.mxu0 0.0
    %2669 = vmatprep.subr.mxu0 0.0
    %2670 = vmatpush2.msra.mxu0 0.0
    %2671 = vmatprep.subr.mxu0 0.0
    %2672 = vmatpush2.msra.mxu0 0.0
    %2673 = vmatprep.subr.mxu0 0.0
    %2674 = vmatpush2.msra.mxu0 0.0
    %2675 = vmatprep.subr.mxu0 0.0
    %2676 = vmatpush2.msra.mxu0 0.0
    %2677 = vmatprep.subr.mxu0 0.0
    %2678 = vmatpush2.msra.mxu0 0.0
    %2679 = vmatprep.mubr.f32.mxu0 0.0
    %2680 = vmatmul.mubr.f32.gmra.mxu0 %v2613
    %v2681 = vpop.f32.mrf.mxu0
    %v2682 = vadd.f32 0.0, %v2681
    %v2683 = vpop.f32.mrf.mxu0
    %2684 = vdwg.mxu0
    %v2685 = vadd.f32 %v2607, %v2682
    %v2688 = vunpack.c.l.s4 1966171168
    %v2689 = vunpack.c.0.s8 %v2688
    %v2690 = vlaneseq
    %v2691 = vshrl.u32 %v2690, 7
    %v2692 = vsub.s32 %v2689, %v2691
    %v2693 = vrot.slane %v2685, %v2692
    %v2694 = vcombine.high %v2693, %v2693
    %v2696 = vunpack.c.l.s4 1966171168
    %v2697 = vunpack.c.0.s8 %v2696
    %v2698 = vlaneseq
    %v2699 = vshrl.u32 %v2698, 7
    %v2700 = vsub.s32 %v2697, %v2699
    %v2701 = vrot.slane %v2693, %v2700
    %v2703 = vunpack.c.l.s4 1966171168
    %v2704 = vunpack.c.0.s8 %v2703
    %v2705 = vlaneseq
    %v2706 = vshrl.u32 %v2705, 7
    %v2707 = vsub.s32 %v2704, %v2706
    %v2708 = vrot.slane %v2694, %v2707
    %v2709 = vlaneseq
    %v2710 = vshrl.u32 %v2709, 7
    %v2711 = vsub.s32 0, %v2710
    %v2712 = vrot.slane %v2701, %v2711
    %v2713 = vlaneseq
    %v2714 = vshrl.u32 %v2713, 7
    %v2715 = vsub.s32 0, %v2714
    %v2716 = vrot.slane %v2708, %v2715
    %v2719 = vadd.f32 %v49, %v2712
    %v2720 = vadd.f32 %v50, %v2716
    %v2721 = vlaneseq
    %v2722 = vshrl.u32 %v2721, 7
    %v2723 = vsub.s32 0, %v2722
    %v2724 = vrot.slane %v2241, %v2723
    %2726 = vbcast.lane.b32.xlu0 %v2724, 256
    %v2727 = vpop.permute.xlu0 %2726
    %v2728 = vlaneseq
    %v2729 = vshrl.u32 %v2728, 7
    %v2730 = vsub.s32 1, %v2729
    %v2731 = vrot.slane %v2241, %v2730
    %2733 = vbcast.lane.b32.xlu0 %v2731, 256
    %v2734 = vpop.permute.xlu0 %2733
    %v2735 = vmul.f32 %v2727, %v435
    %v2736 = vmul.f32 %v2734, %v435
    %v2737 = vadd.f32 %v2719, %v2735
    %v2738 = vadd.f32 %v2720, %v2736
    %v2739 = vadd.f32 %v2737, %v442
    %v2740 = vadd.f32 %v2738, %v442
    %v2741 = vtanh.pop %v2739
    %v2742 = vtanh.pop %v2740
    %v2743 = vmul.f32 %v2741, %v450
    %v2744 = vmul.f32 %v2742, %v450
    %v2745 = vsel %vm67, %v2743, 0.0
    %2746 = vadd.xlane.f32.xlu0 %v2745
    %v2747 = vpop.xlane.xlu0 %2746
    %v2748 = vsel %vm67, %v2744, 0.0
    %2749 = vadd.xlane.f32.xlu0 %v2748
    %v2750 = vpop.xlane.xlu0 %2749
    %v2753 = vlaneseq
    %v2754 = vshrl.u32 %v2753, 7
    %v2755 = vsub.s32 %v462, %v2754
    %v2756 = vrot.slane %v2747, %v2755
    %v2757 = vlaneseq
    %v2758 = vshrl.u32 %v2757, 7
    %v2759 = vsub.s32 %v462, %v2758
    %v2760 = vrot.slane %v2750, %v2759
    %v2761 = vsel %vm471, %v2760, %v2756
    %v2763 = vsel %vm52, -1e+09, %v2761
    %v2764 = vsel %vm475, %v2763, -inf
    %2765 = vmax.xlane.f32.xlu0 %v2764
    %v2766 = vpop.xlane.xlu0 %2765
    %v2767 = vsub.f32 %v2763, %v2766
    %v2768 = vmul.f32 %v2767, 1.442695
    %v2769 = vpow.pop %v2768
    %v2770 = vsel %vm475, %v2769, 0.0
    %2771 = vadd.xlane.f32.xlu0 %v2770
    %v2772 = vpop.xlane.xlu0 %2771
    %v2773 = vrcp.pop %v2772
    %v2774 = vmul.f32 %v2772, %v2773
    %v2775 = vsub.f32 2.0, %v2774
    %v2776 = vmul.f32 %v2773, %v2775
    %v2777 = vmul.f32 %v2769, %v2776
    %v2778 = vlaneseq
    %v2779 = vshrl.u32 %v2778, 7
    %v2780 = vsub.s32 0, %v2779
    %v2781 = vrot.slane %v2777, %v2780
    %2783 = vbcast.lane.b32.xlu0 %v2781, 256
    %v2784 = vpop.permute.xlu0 %2783
    %v2785 = vlaneseq
    %v2786 = vshrl.u32 %v2785, 7
    %v2787 = vsub.s32 1, %v2786
    %v2788 = vrot.slane %v2777, %v2787
    %2790 = vbcast.lane.b32.xlu0 %v2788, 256
    %v2791 = vpop.permute.xlu0 %2790
    %v2792 = vmul.f32 %v2784, %v47
    %v2793 = vmul.f32 %v2791, %v48
    %v2794 = vsel %vm67, %v2792, 0.0
    %v2795 = vrot.slane %v2794, 4
    %v2796 = vadd.f32 %v2794, %v2795
    %v2797 = vrot.slane %v2796, 2
    %v2798 = vadd.f32 %v2796, %v2797
    %v2799 = vrot.slane %v2798, 1
    %v2800 = vadd.f32 %v2798, %v2799
    %v2801 = vsel %vm67, %v2793, 0.0
    %v2802 = vrot.slane %v2801, 4
    %v2803 = vadd.f32 %v2801, %v2802
    %v2804 = vrot.slane %v2803, 2
    %v2805 = vadd.f32 %v2803, %v2804
    %v2806 = vrot.slane %v2805, 1
    %v2807 = vadd.f32 %v2805, %v2806
    %v2808 = vmin.f32 %v2777, %v2241
    %v2809 = vsel %vm475, %v2808, 0.0
    %2810 = vadd.xlane.f32.xlu0 %v2809
    %v2811 = vpop.xlane.xlu0 %2810
    %v2814 = vunpack.c.l.s4 1966171168
    %v2815 = vunpack.c.0.s8 %v2814
    %v2816 = vlaneseq
    %v2817 = vshrl.u32 %v2816, 7
    %v2818 = vsub.s32 %v2815, %v2817
    %v2819 = vrot.slane %v2777, %v2818
    %v2820 = vcombine.high %v2819, %v2819
    %v2822 = vunpack.c.l.s4 1966171168
    %v2823 = vunpack.c.0.s8 %v2822
    %v2824 = vlaneseq
    %v2825 = vshrl.u32 %v2824, 7
    %v2826 = vsub.s32 %v2823, %v2825
    %v2827 = vrot.slane %v2819, %v2826
    %v2829 = vunpack.c.l.s4 1966171168
    %v2830 = vunpack.c.0.s8 %v2829
    %v2831 = vlaneseq
    %v2832 = vshrl.u32 %v2831, 7
    %v2833 = vsub.s32 %v2830, %v2832
    %v2834 = vrot.slane %v2820, %v2833
    %2837 = vst.msk [vmem:[#allocation2 + $0x4] sm:$0x1] %vm550, %v2827
    %2838 = vst.msk [vmem:[#allocation2 + $0xc] sm:$0x1] %vm550, %v2834
    %2839 = vst.msk [vmem:[#allocation3 + $0x4] sm:$0x1] %vm553, %v2800
    %2840 = vst.msk [vmem:[#allocation3 + $0xc] sm:$0x1] %vm553, %v2807
    %2842 = vrot.lane.b32.xlu0 %v2362, 96
    %v2843 = vpop.permute.xlu0 %2842
    %v2845 = vadd.f32 %v2685, %v2843
    %2847 = vrot.lane.b32.xlu0 %v2435, 96
    %v2848 = vpop.permute.xlu0 %2847
    %v2850 = vadd.f32 %v2845, %v2848
    %v2853 = vunpack.c.l.s4 1966171168
    %v2854 = vunpack.c.0.s8 %v2853
    %v2855 = vlaneseq
    %v2856 = vshrl.u32 %v2855, 7
    %v2857 = vsub.s32 %v2854, %v2856
    %v2858 = vrot.slane %v2850, %v2857
    %v2859 = vcombine.high %v2858, %v2858
    %v2861 = vunpack.c.l.s4 1966171168
    %v2862 = vunpack.c.0.s8 %v2861
    %v2863 = vlaneseq
    %v2864 = vshrl.u32 %v2863, 7
    %v2865 = vsub.s32 %v2862, %v2864
    %v2866 = vrot.slane %v2858, %v2865
    %v2868 = vunpack.c.l.s4 1966171168
    %v2869 = vunpack.c.0.s8 %v2868
    %v2870 = vlaneseq
    %v2871 = vshrl.u32 %v2870, 7
    %v2872 = vsub.s32 %v2869, %v2871
    %v2873 = vrot.slane %v2859, %v2872
    %v2874 = vlaneseq
    %v2875 = vshrl.u32 %v2874, 7
    %v2876 = vsub.s32 0, %v2875
    %v2877 = vrot.slane %v2866, %v2876
    %v2878 = vlaneseq
    %v2879 = vshrl.u32 %v2878, 7
    %v2880 = vsub.s32 0, %v2879
    %v2881 = vrot.slane %v2873, %v2880
    %2882 = vrot.lane.b32.xlu0 %v2877, 96
    %v2883 = vpop.permute.xlu0 %2882
    %2884 = vrot.lane.b32.xlu0 %v2881, 96
    %v2885 = vpop.permute.xlu0 %2884
    %2888 = vst.msk [vmem:[#allocation4 + $0x4] sm:$0x1] %vm603, %v2883
    %2889 = vst.msk [vmem:[#allocation4 + $0xc] sm:$0x1] %vm603, %v2885
    %v2892 = vunpack.c.l.s4 1966171168
    %v2893 = vunpack.c.0.s8 %v2892
    %v2894 = vlaneseq
    %v2895 = vshrl.u32 %v2894, 7
    %v2896 = vsub.s32 %v2893, %v2895
    %v2897 = vrot.slane %v2607, %v2896
    %v2898 = vcombine.high %v2897, %v2897
    %v2900 = vunpack.c.l.s4 1966171168
    %v2901 = vunpack.c.0.s8 %v2900
    %v2902 = vlaneseq
    %v2903 = vshrl.u32 %v2902, 7
    %v2904 = vsub.s32 %v2901, %v2903
    %v2905 = vrot.slane %v2897, %v2904
    %v2907 = vunpack.c.l.s4 1966171168
    %v2908 = vunpack.c.0.s8 %v2907
    %v2909 = vlaneseq
    %v2910 = vshrl.u32 %v2909, 7
    %v2911 = vsub.s32 %v2908, %v2910
    %v2912 = vrot.slane %v2898, %v2911
    %v2913 = vlaneseq
    %v2914 = vshrl.u32 %v2913, 7
    %v2915 = vsub.s32 0, %v2914
    %v2916 = vrot.slane %v2905, %v2915
    %v2917 = vlaneseq
    %v2918 = vshrl.u32 %v2917, 7
    %v2919 = vsub.s32 0, %v2918
    %v2920 = vrot.slane %v2912, %v2919
    %2921 = vrot.lane.b32.xlu0 %v2916, 95
    %v2922 = vpop.permute.xlu0 %2921
    %2923 = vrot.lane.b32.xlu0 %v2920, 95
    %v2924 = vpop.permute.xlu0 %2923
    %2927 = vst.msk [vmem:[#allocation5 + $0x4] sm:$0x1] %vm643, %v2922
    %2928 = vst.msk [vmem:[#allocation5 + $0xc] sm:$0x1] %vm643, %v2924
    %vm2929 = vcmask 33824
    %2930 = vst.msk [vmem:[#allocation6] sm:$0x3] %vm2929, %v2811
    %v2931 = vld [vmem:[#allocation2] sm:$0x1f]
    %v2932 = vld [vmem:[#allocation2 + $0x8] sm:$0x1f]
    %v2933 = vld [vmem:[#allocation3] sm:$0x1f]
    %v2934 = vld [vmem:[#allocation3 + $0x8] sm:$0x1f]
    %v2935 = vld [vmem:[#allocation4] sm:$0x1f]
    %v2936 = vld [vmem:[#allocation4 + $0x8] sm:$0x1f]
    %v2937 = vld [vmem:[#allocation5] sm:$0x1f]
    %v2938 = vld [vmem:[#allocation5 + $0x8] sm:$0x1f]
    %v2939 = vld [vmem:[%s10] sm:$0xff]
    %v2940 = vld [vmem:[%s10 + $0x8] sm:$0xff]
    %v2941 = vld [vmem:[%s10 + $0x10] sm:$0xff]
    %v2942 = vld [vmem:[%s10 + $0x18] sm:$0xff]
    %v2943 = vld [vmem:[%s11] sm:$0xff]
    %v2944 = vld [vmem:[%s11 + $0x8] sm:$0xff]
    %v2946 = vsel %vm67, %v2933, 0
    %2948 = vmatprep.subr.mxu0 0.0
    %2949 = vmatpush1.msra.mxu0 0.0
    %2950 = vmatprep.subr.mxu0 0.0
    %2951 = vmatpush1.msra.mxu0 0.0
    %2952 = vmatprep.subr.mxu0 0.0
    %2953 = vmatpush1.msra.mxu0 0.0
    %2954 = vmatprep.subr.mxu0 0.0
    %2955 = vmatpush1.msra.mxu0 0.0
    %2956 = vmatprep.subr.mxu0 0.0
    %2957 = vmatpush1.msra.mxu0 0.0
    %2958 = vmatprep.subr.mxu0 0.0
    %2959 = vmatpush1.msra.mxu0 0.0
    %2960 = vmatprep.subr.mxu0 0.0
    %2961 = vmatpush1.msra.mxu0 0.0
    %2962 = vmatprep.subr.mxu0 0.0
    %2963 = vmatpush1.msra.mxu0 0.0
    %2964 = vmatprep.subr.mxu0 0.0
    %2965 = vmatpush1.msra.mxu0 0.0
    %2966 = vmatprep.subr.mxu0 0.0
    %2967 = vmatpush1.msra.mxu0 0.0
    %2968 = vmatprep.subr.mxu0 0.0
    %2969 = vmatpush1.msra.mxu0 0.0
    %2970 = vmatprep.subr.mxu0 0.0
    %2971 = vmatpush1.msra.mxu0 0.0
    %2972 = vmatprep.subr.mxu0 0.0
    %2973 = vmatpush1.msra.mxu0 %v2942
    %2974 = vmatprep.subr.mxu0 0.0
    %2975 = vmatpush1.msra.mxu0 %v2941
    %2976 = vmatprep.subr.mxu0 0.0
    %2977 = vmatpush1.msra.mxu0 %v2940
    %2978 = vmatprep.subr.mxu0 0.0
    %2979 = vmatpush1.msra.mxu0 %v2939
    %2980 = vmatprep.subr.mxu0 0.0
    %2981 = vmatpush2.msra.mxu0 0.0
    %2982 = vmatprep.subr.mxu0 0.0
    %2983 = vmatpush2.msra.mxu0 0.0
    %2984 = vmatprep.subr.mxu0 0.0
    %2985 = vmatpush2.msra.mxu0 0.0
    %2986 = vmatprep.subr.mxu0 0.0
    %2987 = vmatpush2.msra.mxu0 0.0
    %2988 = vmatprep.subr.mxu0 0.0
    %2989 = vmatpush2.msra.mxu0 0.0
    %2990 = vmatprep.subr.mxu0 0.0
    %2991 = vmatpush2.msra.mxu0 0.0
    %2992 = vmatprep.subr.mxu0 0.0
    %2993 = vmatpush2.msra.mxu0 0.0
    %2994 = vmatprep.subr.mxu0 0.0
    %2995 = vmatpush2.msra.mxu0 0.0
    %2996 = vmatprep.subr.mxu0 0.0
    %2997 = vmatpush2.msra.mxu0 0.0
    %2998 = vmatprep.subr.mxu0 0.0
    %2999 = vmatpush2.msra.mxu0 0.0
    %3000 = vmatprep.subr.mxu0 0.0
    %3001 = vmatpush2.msra.mxu0 0.0
    %3002 = vmatprep.subr.mxu0 0.0
    %3003 = vmatpush2.msra.mxu0 0.0
    %3004 = vmatprep.subr.mxu0 0.0
    %3005 = vmatpush2.msra.mxu0 0.0
    %3006 = vmatprep.subr.mxu0 0.0
    %3007 = vmatpush2.msra.mxu0 0.0
    %3008 = vmatprep.subr.mxu0 0.0
    %3009 = vmatpush2.msra.mxu0 0.0
    %3010 = vmatprep.subr.mxu0 0.0
    %3011 = vmatpush2.msra.mxu0 0.0
    %3012 = vmatprep.mubr.f32.mxu0 0.0
    %3013 = vmatmul.mubr.f32.gmra.mxu0 %v2946
    %v3014 = vpop.f32.mrf.mxu0
    %v3015 = vadd.f32 0.0, %v3014
    %v3016 = vpop.f32.mrf.mxu0
    %3017 = vdwg.mxu0
    %v3019 = vsel %vm67, %v2934, 0
    %3021 = vmatprep.subr.mxu0 0.0
    %3022 = vmatpush1.msra.mxu0 0.0
    %3023 = vmatprep.subr.mxu0 0.0
    %3024 = vmatpush1.msra.mxu0 0.0
    %3025 = vmatprep.subr.mxu0 0.0
    %3026 = vmatpush1.msra.mxu0 0.0
    %3027 = vmatprep.subr.mxu0 0.0
    %3028 = vmatpush1.msra.mxu0 0.0
    %3029 = vmatprep.subr.mxu0 0.0
    %3030 = vmatpush1.msra.mxu0 0.0
    %3031 = vmatprep.subr.mxu0 0.0
    %3032 = vmatpush1.msra.mxu0 0.0
    %3033 = vmatprep.subr.mxu0 0.0
    %3034 = vmatpush1.msra.mxu0 0.0
    %3035 = vmatprep.subr.mxu0 0.0
    %3036 = vmatpush1.msra.mxu0 0.0
    %3037 = vmatprep.subr.mxu0 0.0
    %3038 = vmatpush1.msra.mxu0 0.0
    %3039 = vmatprep.subr.mxu0 0.0
    %3040 = vmatpush1.msra.mxu0 0.0
    %3041 = vmatprep.subr.mxu0 0.0
    %3042 = vmatpush1.msra.mxu0 0.0
    %3043 = vmatprep.subr.mxu0 0.0
    %3044 = vmatpush1.msra.mxu0 0.0
    %3045 = vmatprep.subr.mxu0 0.0
    %3046 = vmatpush1.msra.mxu0 %v2942
    %3047 = vmatprep.subr.mxu0 0.0
    %3048 = vmatpush1.msra.mxu0 %v2941
    %3049 = vmatprep.subr.mxu0 0.0
    %3050 = vmatpush1.msra.mxu0 %v2940
    %3051 = vmatprep.subr.mxu0 0.0
    %3052 = vmatpush1.msra.mxu0 %v2939
    %3053 = vmatprep.subr.mxu0 0.0
    %3054 = vmatpush2.msra.mxu0 0.0
    %3055 = vmatprep.subr.mxu0 0.0
    %3056 = vmatpush2.msra.mxu0 0.0
    %3057 = vmatprep.subr.mxu0 0.0
    %3058 = vmatpush2.msra.mxu0 0.0
    %3059 = vmatprep.subr.mxu0 0.0
    %3060 = vmatpush2.msra.mxu0 0.0
    %3061 = vmatprep.subr.mxu0 0.0
    %3062 = vmatpush2.msra.mxu0 0.0
    %3063 = vmatprep.subr.mxu0 0.0
    %3064 = vmatpush2.msra.mxu0 0.0
    %3065 = vmatprep.subr.mxu0 0.0
    %3066 = vmatpush2.msra.mxu0 0.0
    %3067 = vmatprep.subr.mxu0 0.0
    %3068 = vmatpush2.msra.mxu0 0.0
    %3069 = vmatprep.subr.mxu0 0.0
    %3070 = vmatpush2.msra.mxu0 0.0
    %3071 = vmatprep.subr.mxu0 0.0
    %3072 = vmatpush2.msra.mxu0 0.0
    %3073 = vmatprep.subr.mxu0 0.0
    %3074 = vmatpush2.msra.mxu0 0.0
    %3075 = vmatprep.subr.mxu0 0.0
    %3076 = vmatpush2.msra.mxu0 0.0
    %3077 = vmatprep.subr.mxu0 0.0
    %3078 = vmatpush2.msra.mxu0 0.0
    %3079 = vmatprep.subr.mxu0 0.0
    %3080 = vmatpush2.msra.mxu0 0.0
    %3081 = vmatprep.subr.mxu0 0.0
    %3082 = vmatpush2.msra.mxu0 0.0
    %3083 = vmatprep.subr.mxu0 0.0
    %3084 = vmatpush2.msra.mxu0 0.0
    %3085 = vmatprep.mubr.f32.mxu0 0.0
    %3086 = vmatmul.mubr.f32.gmra.mxu0 %v3019
    %v3087 = vpop.f32.mrf.mxu0
    %v3088 = vadd.f32 0.0, %v3087
    %v3089 = vpop.f32.mrf.mxu0
    %3090 = vdwg.mxu0
    %v3091 = vadd.f32 %v3015, %v2935
    %v3092 = vadd.f32 %v3088, %v2936
    %v3093 = vlaneseq
    %v3094 = vshrl.u32 %v3093, 7
    %v3095 = vsub.s32 6, %v3094
    %v3096 = vrot.slane %v63, %v3095
    %v3097 = vadd.f32 %v3091, %v3096
    %v3098 = vadd.f32 %v3092, %v3096
    %v3099 = vxor.u32 %v3097, 2147483648
    %v3100 = vxor.u32 %v3098, 2147483648
    %v3101 = vmul.f32 %v3099, 1.442695
    %v3102 = vpow.pop %v3101
    %v3103 = vmul.f32 %v3100, 1.442695
    %v3104 = vpow.pop %v3103
    %v3105 = vadd.f32 %v3102, 1.0
    %v3106 = vadd.f32 %v3104, 1.0
    %v3107 = vrcp.pop %v3105
    %v3108 = vmul.f32 1.0, %v3107
    %v3109 = vrcp.pop %v3106
    %v3110 = vmul.f32 1.0, %v3109
    %3113 = vrot.lane.b32.xlu0 %v2937, 1
    %v3114 = vpop.permute.xlu0 %3113
    %3115 = vrot.lane.b32.xlu0 %v2938, 1
    %v3116 = vpop.permute.xlu0 %3115
    %v3119 = vadd.f32 %v3015, %v3114
    %v3120 = vadd.f32 %v3088, %v3116
    %v3121 = vlaneseq
    %v3122 = vshrl.u32 %v3121, 7
    %v3123 = vsub.s32 4, %v3122
    %v3124 = vrot.slane %v63, %v3123
    %3126 = vrot.lane.b32.xlu0 %v3124, 1
    %v3127 = vpop.permute.xlu0 %3126
    %v3129 = vadd.f32 %v3119, %v3127
    %v3130 = vadd.f32 %v3120, %v3127
    %v3131 = vlaneseq
    %v3132 = vshrl.u32 %v3131, 7
    %v3133 = vsub.s32 5, %v3132
    %v3134 = vrot.slane %v63, %v3133
    %3136 = vrot.lane.b32.xlu0 %v3129, 127
    %v3137 = vpop.permute.xlu0 %3136
    %v3138 = vsel %vm142, %v3137, 0
    %3140 = vmatprep.subr.mxu0 0.0
    %3141 = vmatpush1.msra.mxu0 0.0
    %3142 = vmatprep.subr.mxu0 0.0
    %3143 = vmatpush1.msra.mxu0 0.0
    %3144 = vmatprep.subr.mxu0 0.0
    %3145 = vmatpush1.msra.mxu0 0.0
    %3146 = vmatprep.subr.mxu0 0.0
    %3147 = vmatpush1.msra.mxu0 0.0
    %3148 = vmatprep.subr.mxu0 0.0
    %3149 = vmatpush1.msra.mxu0 0.0
    %3150 = vmatprep.subr.mxu0 0.0
    %3151 = vmatpush1.msra.mxu0 0.0
    %3152 = vmatprep.subr.mxu0 0.0
    %3153 = vmatpush1.msra.mxu0 0.0
    %3154 = vmatprep.subr.mxu0 0.0
    %3155 = vmatpush1.msra.mxu0 0.0
    %3156 = vmatprep.subr.mxu0 0.0
    %3157 = vmatpush1.msra.mxu0 0.0
    %3158 = vmatprep.subr.mxu0 0.0
    %3159 = vmatpush1.msra.mxu0 0.0
    %3160 = vmatprep.subr.mxu0 0.0
    %3161 = vmatpush1.msra.mxu0 0.0
    %3162 = vmatprep.subr.mxu0 0.0
    %3163 = vmatpush1.msra.mxu0 0.0
    %3164 = vmatprep.subr.mxu0 0.0
    %3165 = vmatpush1.msra.mxu0 0.0
    %3166 = vmatprep.subr.mxu0 0.0
    %3167 = vmatpush1.msra.mxu0 0.0
    %3168 = vmatprep.subr.mxu0 0.0
    %3169 = vmatpush1.msra.mxu0 %v2944
    %3170 = vmatprep.subr.mxu0 0.0
    %3171 = vmatpush1.msra.mxu0 %v2943
    %3172 = vmatprep.subr.mxu0 0.0
    %3173 = vmatpush2.msra.mxu0 0.0
    %3174 = vmatprep.subr.mxu0 0.0
    %3175 = vmatpush2.msra.mxu0 0.0
    %3176 = vmatprep.subr.mxu0 0.0
    %3177 = vmatpush2.msra.mxu0 0.0
    %3178 = vmatprep.subr.mxu0 0.0
    %3179 = vmatpush2.msra.mxu0 0.0
    %3180 = vmatprep.subr.mxu0 0.0
    %3181 = vmatpush2.msra.mxu0 0.0
    %3182 = vmatprep.subr.mxu0 0.0
    %3183 = vmatpush2.msra.mxu0 0.0
    %3184 = vmatprep.subr.mxu0 0.0
    %3185 = vmatpush2.msra.mxu0 0.0
    %3186 = vmatprep.subr.mxu0 0.0
    %3187 = vmatpush2.msra.mxu0 0.0
    %3188 = vmatprep.subr.mxu0 0.0
    %3189 = vmatpush2.msra.mxu0 0.0
    %3190 = vmatprep.subr.mxu0 0.0
    %3191 = vmatpush2.msra.mxu0 0.0
    %3192 = vmatprep.subr.mxu0 0.0
    %3193 = vmatpush2.msra.mxu0 0.0
    %3194 = vmatprep.subr.mxu0 0.0
    %3195 = vmatpush2.msra.mxu0 0.0
    %3196 = vmatprep.subr.mxu0 0.0
    %3197 = vmatpush2.msra.mxu0 0.0
    %3198 = vmatprep.subr.mxu0 0.0
    %3199 = vmatpush2.msra.mxu0 0.0
    %3200 = vmatprep.subr.mxu0 0.0
    %3201 = vmatpush2.msra.mxu0 0.0
    %3202 = vmatprep.subr.mxu0 0.0
    %3203 = vmatpush2.msra.mxu0 0.0
    %3204 = vmatprep.mubr.f32.mxu0 0.0
    %3205 = vmatmul.mubr.f32.gmra.mxu0 %v3138
    %v3206 = vpop.f32.mrf.mxu0
    %v3207 = vadd.f32 %v3134, %v3206
    %v3208 = vpop.f32.mrf.mxu0
    %3209 = vdwg.mxu0
    %3211 = vrot.lane.b32.xlu0 %v3130, 127
    %v3212 = vpop.permute.xlu0 %3211
    %v3213 = vsel %vm142, %v3212, 0
    %3215 = vmatprep.subr.mxu0 0.0
    %3216 = vmatpush1.msra.mxu0 0.0
    %3217 = vmatprep.subr.mxu0 0.0
    %3218 = vmatpush1.msra.mxu0 0.0
    %3219 = vmatprep.subr.mxu0 0.0
    %3220 = vmatpush1.msra.mxu0 0.0
    %3221 = vmatprep.subr.mxu0 0.0
    %3222 = vmatpush1.msra.mxu0 0.0
    %3223 = vmatprep.subr.mxu0 0.0
    %3224 = vmatpush1.msra.mxu0 0.0
    %3225 = vmatprep.subr.mxu0 0.0
    %3226 = vmatpush1.msra.mxu0 0.0
    %3227 = vmatprep.subr.mxu0 0.0
    %3228 = vmatpush1.msra.mxu0 0.0
    %3229 = vmatprep.subr.mxu0 0.0
    %3230 = vmatpush1.msra.mxu0 0.0
    %3231 = vmatprep.subr.mxu0 0.0
    %3232 = vmatpush1.msra.mxu0 0.0
    %3233 = vmatprep.subr.mxu0 0.0
    %3234 = vmatpush1.msra.mxu0 0.0
    %3235 = vmatprep.subr.mxu0 0.0
    %3236 = vmatpush1.msra.mxu0 0.0
    %3237 = vmatprep.subr.mxu0 0.0
    %3238 = vmatpush1.msra.mxu0 0.0
    %3239 = vmatprep.subr.mxu0 0.0
    %3240 = vmatpush1.msra.mxu0 0.0
    %3241 = vmatprep.subr.mxu0 0.0
    %3242 = vmatpush1.msra.mxu0 0.0
    %3243 = vmatprep.subr.mxu0 0.0
    %3244 = vmatpush1.msra.mxu0 %v2944
    %3245 = vmatprep.subr.mxu0 0.0
    %3246 = vmatpush1.msra.mxu0 %v2943
    %3247 = vmatprep.subr.mxu0 0.0
    %3248 = vmatpush2.msra.mxu0 0.0
    %3249 = vmatprep.subr.mxu0 0.0
    %3250 = vmatpush2.msra.mxu0 0.0
    %3251 = vmatprep.subr.mxu0 0.0
    %3252 = vmatpush2.msra.mxu0 0.0
    %3253 = vmatprep.subr.mxu0 0.0
    %3254 = vmatpush2.msra.mxu0 0.0
    %3255 = vmatprep.subr.mxu0 0.0
    %3256 = vmatpush2.msra.mxu0 0.0
    %3257 = vmatprep.subr.mxu0 0.0
    %3258 = vmatpush2.msra.mxu0 0.0
    %3259 = vmatprep.subr.mxu0 0.0
    %3260 = vmatpush2.msra.mxu0 0.0
    %3261 = vmatprep.subr.mxu0 0.0
    %3262 = vmatpush2.msra.mxu0 0.0
    %3263 = vmatprep.subr.mxu0 0.0
    %3264 = vmatpush2.msra.mxu0 0.0
    %3265 = vmatprep.subr.mxu0 0.0
    %3266 = vmatpush2.msra.mxu0 0.0
    %3267 = vmatprep.subr.mxu0 0.0
    %3268 = vmatpush2.msra.mxu0 0.0
    %3269 = vmatprep.subr.mxu0 0.0
    %3270 = vmatpush2.msra.mxu0 0.0
    %3271 = vmatprep.subr.mxu0 0.0
    %3272 = vmatpush2.msra.mxu0 0.0
    %3273 = vmatprep.subr.mxu0 0.0
    %3274 = vmatpush2.msra.mxu0 0.0
    %3275 = vmatprep.subr.mxu0 0.0
    %3276 = vmatpush2.msra.mxu0 0.0
    %3277 = vmatprep.subr.mxu0 0.0
    %3278 = vmatpush2.msra.mxu0 0.0
    %3279 = vmatprep.mubr.f32.mxu0 0.0
    %3280 = vmatmul.mubr.f32.gmra.mxu0 %v3213
    %v3281 = vpop.f32.mrf.mxu0
    %v3282 = vadd.f32 %v3134, %v3281
    %v3283 = vpop.f32.mrf.mxu0
    %3284 = vdwg.mxu0
    %vm3285 = vcmask 1044480
    %v3286 = vsel %vm3285, %v3207, -inf
    %3287 = vmax.xlane.f32.xlu0 %v3286
    %v3288 = vpop.xlane.xlu0 %3287
    %v3289 = vsel %vm3285, %v3282, -inf
    %3290 = vmax.xlane.f32.xlu0 %v3289
    %v3291 = vpop.xlane.xlu0 %3290
    %v3292 = vsub.f32 %v3207, %v3288
    %v3293 = vsub.f32 %v3282, %v3291
    %v3294 = vmul.f32 %v3292, 1.442695
    %v3295 = vpow.pop %v3294
    %v3296 = vmul.f32 %v3293, 1.442695
    %v3297 = vpow.pop %v3296
    %v3298 = vsel %vm3285, %v3295, 0.0
    %3299 = vadd.xlane.f32.xlu0 %v3298
    %v3300 = vpop.xlane.xlu0 %3299
    %v3301 = vsel %vm3285, %v3297, 0.0
    %3302 = vadd.xlane.f32.xlu0 %v3301
    %v3303 = vpop.xlane.xlu0 %3302
    %v3304 = vrcp.pop %v3300
    %v3305 = vrcp.pop %v3303
    %v3306 = vmul.f32 %v3300, %v3304
    %v3307 = vmul.f32 %v3303, %v3305
    %v3308 = vsub.f32 2.0, %v3306
    %v3309 = vsub.f32 2.0, %v3307
    %v3310 = vmul.f32 %v3304, %v3308
    %v3311 = vmul.f32 %v3305, %v3309
    %v3312 = vmul.f32 %v3295, %v3310
    %v3313 = vmul.f32 %v3297, %v3311
    %v3314 = vld [vmem:[%s4] sm:$0x3]
    %v3315 = vlaneseq
    %v3316 = vshrl.u32 %v3315, 7
    %v3317 = vsub.s32 0, %v3316
    %v3318 = vrot.slane %v3314, %v3317
    %3320 = vbcast.lane.b32.xlu0 %v3318, 256
    %v3321 = vpop.permute.xlu0 %3320
    %v3322 = vlaneseq
    %v3323 = vshrl.u32 %v3322, 7
    %v3324 = vsub.s32 1, %v3323
    %v3325 = vrot.slane %v3314, %v3324
    %3327 = vbcast.lane.b32.xlu0 %v3325, 256
    %v3328 = vpop.permute.xlu0 %3327
    %vm3329 = vcmp.eq.s32.totalorder %v3321, %v462
    %vm3330 = vcmp.eq.s32.totalorder %v3328, %v462
    %v3331 = vsel %vm3329, 1, 0
    %v3332 = vsel %vm3330, 1, 0
    %v3333 = vcvt.s32.f32 %v3331
    %v3334 = vcvt.s32.f32 %v3332
    %v3335 = vsub.f32 1.0, %v3108
    %v3336 = vsub.f32 1.0, %v3110
    %3338 = vset.pattern.permute.xlu0 0
    %3339 = vperm.xlu0 %3338, %v3335
    %v3340 = vpop.permute.xlu0 %3339
    %3343 = vset.pattern.permute.xlu0 0
    %3344 = vperm.xlu0 %3343, %v3336
    %v3345 = vpop.permute.xlu0 %3344
    %v3347 = vmul.f32 %v3340, %v2931
    %v3348 = vmul.f32 %v3345, %v2932
    %vm3349 = vcmask 64512
    %v3351 = vsel %vm3349, %v3347, 0
    %3353 = vmatprep.subr.mxu0 0.0
    %3354 = vmatpush1.msra.mxu0 0.0
    %3355 = vmatprep.subr.mxu0 0.0
    %3356 = vmatpush1.msra.mxu0 0.0
    %3357 = vmatprep.subr.mxu0 0.0
    %3358 = vmatpush1.msra.mxu0 0.0
    %3359 = vmatprep.subr.mxu0 0.0
    %3360 = vmatpush1.msra.mxu0 0.0
    %3361 = vmatprep.subr.mxu0 0.0
    %3362 = vmatpush1.msra.mxu0 0.0
    %3363 = vmatprep.subr.mxu0 0.0
    %3364 = vmatpush1.msra.mxu0 0.0
    %3365 = vmatprep.subr.mxu0 0.0
    %3366 = vmatpush1.msra.mxu0 0.0
    %3367 = vmatprep.subr.mxu0 0.0
    %3368 = vmatpush1.msra.mxu0 0.0
    %3369 = vmatprep.subr.mxu0 0.0
    %3370 = vmatpush1.msra.mxu0 0.0
    %3371 = vmatprep.subr.mxu0 0.0
    %3372 = vmatpush1.msra.mxu0 0.0
    %3373 = vmatprep.subr.mxu0 0.0
    %3374 = vmatpush1.msra.mxu0 0.0
    %3375 = vmatprep.subr.mxu0 0.0
    %3376 = vmatpush1.msra.mxu0 0.0
    %3377 = vmatprep.subr.mxu0 0.0
    %3378 = vmatpush1.msra.mxu0 0.0
    %3379 = vmatprep.subr.mxu0 0.0
    %3380 = vmatpush1.msra.mxu0 0.0
    %3381 = vmatprep.subr.mxu0 0.0
    %3382 = vmatpush1.msra.mxu0 0.0
    %3383 = vmatprep.subr.mxu0 0.0
    %3384 = vmatpush1.msra.mxu0 %v3333
    %3385 = vmatprep.subr.mxu0 0.0
    %3386 = vmatpush2.msra.mxu0 0.0
    %3387 = vmatprep.subr.mxu0 0.0
    %3388 = vmatpush2.msra.mxu0 0.0
    %3389 = vmatprep.subr.mxu0 0.0
    %3390 = vmatpush2.msra.mxu0 0.0
    %3391 = vmatprep.subr.mxu0 0.0
    %3392 = vmatpush2.msra.mxu0 0.0
    %3393 = vmatprep.subr.mxu0 0.0
    %3394 = vmatpush2.msra.mxu0 0.0
    %3395 = vmatprep.subr.mxu0 0.0
    %3396 = vmatpush2.msra.mxu0 0.0
    %3397 = vmatprep.subr.mxu0 0.0
    %3398 = vmatpush2.msra.mxu0 0.0
    %3399 = vmatprep.subr.mxu0 0.0
    %3400 = vmatpush2.msra.mxu0 0.0
    %3401 = vmatprep.subr.mxu0 0.0
    %3402 = vmatpush2.msra.mxu0 0.0
    %3403 = vmatprep.subr.mxu0 0.0
    %3404 = vmatpush2.msra.mxu0 0.0
    %3405 = vmatprep.subr.mxu0 0.0
    %3406 = vmatpush2.msra.mxu0 0.0
    %3407 = vmatprep.subr.mxu0 0.0
    %3408 = vmatpush2.msra.mxu0 0.0
    %3409 = vmatprep.subr.mxu0 0.0
    %3410 = vmatpush2.msra.mxu0 0.0
    %3411 = vmatprep.subr.mxu0 0.0
    %3412 = vmatpush2.msra.mxu0 0.0
    %3413 = vmatprep.subr.mxu0 0.0
    %3414 = vmatpush2.msra.mxu0 0.0
    %3415 = vmatprep.subr.mxu0 0.0
    %3416 = vmatpush2.msra.mxu0 0.0
    %3417 = vmatprep.mubr.f32.mxu0 0.0
    %3418 = vmatmul.mubr.f32.gmra.mxu0 %v3351
    %v3419 = vpop.f32.mrf.mxu0
    %v3420 = vadd.f32 0.0, %v3419
    %v3421 = vpop.f32.mrf.mxu0
    %3422 = vdwg.mxu0
    %v3424 = vsel %vm3349, %v3348, 0
    %3426 = vmatprep.subr.mxu0 0.0
    %3427 = vmatpush1.msra.mxu0 0.0
    %3428 = vmatprep.subr.mxu0 0.0
    %3429 = vmatpush1.msra.mxu0 0.0
    %3430 = vmatprep.subr.mxu0 0.0
    %3431 = vmatpush1.msra.mxu0 0.0
    %3432 = vmatprep.subr.mxu0 0.0
    %3433 = vmatpush1.msra.mxu0 0.0
    %3434 = vmatprep.subr.mxu0 0.0
    %3435 = vmatpush1.msra.mxu0 0.0
    %3436 = vmatprep.subr.mxu0 0.0
    %3437 = vmatpush1.msra.mxu0 0.0
    %3438 = vmatprep.subr.mxu0 0.0
    %3439 = vmatpush1.msra.mxu0 0.0
    %3440 = vmatprep.subr.mxu0 0.0
    %3441 = vmatpush1.msra.mxu0 0.0
    %3442 = vmatprep.subr.mxu0 0.0
    %3443 = vmatpush1.msra.mxu0 0.0
    %3444 = vmatprep.subr.mxu0 0.0
    %3445 = vmatpush1.msra.mxu0 0.0
    %3446 = vmatprep.subr.mxu0 0.0
    %3447 = vmatpush1.msra.mxu0 0.0
    %3448 = vmatprep.subr.mxu0 0.0
    %3449 = vmatpush1.msra.mxu0 0.0
    %3450 = vmatprep.subr.mxu0 0.0
    %3451 = vmatpush1.msra.mxu0 0.0
    %3452 = vmatprep.subr.mxu0 0.0
    %3453 = vmatpush1.msra.mxu0 0.0
    %3454 = vmatprep.subr.mxu0 0.0
    %3455 = vmatpush1.msra.mxu0 0.0
    %3456 = vmatprep.subr.mxu0 0.0
    %3457 = vmatpush1.msra.mxu0 %v3334
    %3458 = vmatprep.subr.mxu0 0.0
    %3459 = vmatpush2.msra.mxu0 0.0
    %3460 = vmatprep.subr.mxu0 0.0
    %3461 = vmatpush2.msra.mxu0 0.0
    %3462 = vmatprep.subr.mxu0 0.0
    %3463 = vmatpush2.msra.mxu0 0.0
    %3464 = vmatprep.subr.mxu0 0.0
    %3465 = vmatpush2.msra.mxu0 0.0
    %3466 = vmatprep.subr.mxu0 0.0
    %3467 = vmatpush2.msra.mxu0 0.0
    %3468 = vmatprep.subr.mxu0 0.0
    %3469 = vmatpush2.msra.mxu0 0.0
    %3470 = vmatprep.subr.mxu0 0.0
    %3471 = vmatpush2.msra.mxu0 0.0
    %3472 = vmatprep.subr.mxu0 0.0
    %3473 = vmatpush2.msra.mxu0 0.0
    %3474 = vmatprep.subr.mxu0 0.0
    %3475 = vmatpush2.msra.mxu0 0.0
    %3476 = vmatprep.subr.mxu0 0.0
    %3477 = vmatpush2.msra.mxu0 0.0
    %3478 = vmatprep.subr.mxu0 0.0
    %3479 = vmatpush2.msra.mxu0 0.0
    %3480 = vmatprep.subr.mxu0 0.0
    %3481 = vmatpush2.msra.mxu0 0.0
    %3482 = vmatprep.subr.mxu0 0.0
    %3483 = vmatpush2.msra.mxu0 0.0
    %3484 = vmatprep.subr.mxu0 0.0
    %3485 = vmatpush2.msra.mxu0 0.0
    %3486 = vmatprep.subr.mxu0 0.0
    %3487 = vmatpush2.msra.mxu0 0.0
    %3488 = vmatprep.subr.mxu0 0.0
    %3489 = vmatpush2.msra.mxu0 0.0
    %3490 = vmatprep.mubr.f32.mxu0 0.0
    %3491 = vmatmul.mubr.f32.gmra.mxu0 %v3424
    %v3492 = vpop.f32.mrf.mxu0
    %v3493 = vadd.f32 0.0, %v3492
    %v3494 = vpop.f32.mrf.mxu0
    %3495 = vdwg.mxu0
    %3497 = vset.pattern.permute.xlu0 0
    %3498 = vperm.xlu0 %3497, %v3108
    %v3499 = vpop.permute.xlu0 %3498
    %3502 = vset.pattern.permute.xlu0 0
    %3503 = vperm.xlu0 %3502, %v3110
    %v3504 = vpop.permute.xlu0 %3503
    %v3506 = vmul.f32 %v3312, %v3499
    %v3507 = vmul.f32 %v3313, %v3504
    %v3508 = vadd.f32 %v3506, %v3420
    %v3509 = vadd.f32 %v3507, %v3493
    %v3510 = vadd.f32 %v3508, 1e-12
    %v3511 = vadd.f32 %v3509, 1e-12
    %v3512 = vlog2.pop %v3510
    %v3513 = vmul.f32 %v3512, 0.6931472
    %v3514 = vlog2.pop %v3511
    %v3515 = vmul.f32 %v3514, 0.6931472
    %3516 = vst [vmem:[%s13] sm:$0x1f] %v3513
    %3517 = vst [vmem:[%s13 + $0x8] sm:$0x1f] %v3515
    // Predicated region
    $region54: #{pg_decoder_train.1} parent=1 // pred_check
      _
    $region55: #{pg_decoder_train.1} parent=1 // pred_check_branch
      %3519 = sbr.rel (0) target = $region57
    $region56: #{pg_decoder_train.1} parent=1 // pred_region
      _
    $region57: #{pg_decoder_train.1} parent=1 // pred_fallthru
      _
    // Predicated region
    $region58: #{pg_decoder_train.1} parent=1 // pred_check
      _
    $region59: #{pg_decoder_train.1} parent=1 // pred_check_branch
      %3521 = sbr.rel (0) target = $region61
    $region60: #{pg_decoder_train.1} parent=1 // pred_region
      %s3523 = ssub.s32 32, 32
      %3524 = vsyncadd [#allocation7], %s3523
      %s3526 = sshll.u32 [#allocation6], 4
      %s3527 = int_to_ptr.vmem [resolvable:$true] %s3526
      %3529 = dma.vmem_to_hbm [thread:$0]  %s3527, 32, %s14, [#allocation7]
    $region61: #{pg_decoder_train.1} parent=1 // pred_fallthru
      _
    // Predicated region
    $region62: #{pg_decoder_train.1} parent=1 // pred_check
      _
    $region63: #{pg_decoder_train.1} parent=1 // pred_check_branch
      %3531 = sbr.rel (0) target = $region65
    $region64: #{pg_decoder_train.1} parent=1 // pred_region
      _
    $region65: #{pg_decoder_train.1} parent=1 // pred_fallthru
      _
    // Predicated region
    $region66: #{pg_decoder_train.1} parent=1 // pred_check
      _
    $region67: #{pg_decoder_train.1} parent=1 // pred_check_branch
      %3533 = sbr.rel (0) target = $region69
    $region68: #{pg_decoder_train.1} parent=1 // pred_region
      %3534 = dma.done [#allocation7], 32
    $region69: #{pg_decoder_train.1} parent=1 // pred_fallthru
      _
    %3535 = vsyncpa [#allocation7], 1

</llo_original>
